<compile_context>
chip_gen: v7x
topology: tpu7x:2x2x1
jax: 0.10.0
libtpu: 0.0.40
codegen_flags: <defaults>
</compile_context>

<pallas_src>
import math
from functools import partial

import jax
import jax.numpy as jnp
from jax.experimental import pallas as pl
from jax.experimental.pallas import tpu as pltpu

_LN_EPS = 1e-5


def _layer_norm(x, gamma, beta):
    mu = jnp.mean(x, axis=-1, keepdims=True)
    xc = x - mu
    var = jnp.mean(xc * xc, axis=-1, keepdims=True)
    return xc * jax.lax.rsqrt(var + _LN_EPS) * gamma + beta


def _erf_approx(x):
    # Abramowitz & Stegun 7.1.26, |error| <= 1.5e-7 — exact-GELU quality, uses
    # only mul/add (VPU) + exp (EUP), all guaranteed to lower in Mosaic.
    a1, a2, a3, a4, a5 = (0.254829592, -0.284496736, 1.421413741,
                          -1.453152027, 1.061405429)
    p = 0.3275911
    s = jnp.where(x >= 0.0, 1.0, -1.0)
    ax = jnp.abs(x)
    t = 1.0 / (1.0 + p * ax)
    poly = ((((a5 * t + a4) * t + a3) * t + a2) * t + a1) * t
    return s * (1.0 - poly * jnp.exp(-ax * ax))


def _gelu_exact(x):
    return 0.5 * x * (1.0 + _erf_approx(x * (1.0 / math.sqrt(2.0))))


def encoder_layer_kernel(x_ref, perm_ref,
                         ln1g_ref, ln1b_ref, ln2g_ref, ln2b_ref,
                         w1_ref, b1_ref, w2_ref, b2_ref,
                         y_ref, attn_ref, a_scr, *, num_heads):
    T, C = x_ref.shape[1], x_ref.shape[2]
    head_dim = C // num_heads
    scale = 1.0 / math.sqrt(num_heads)   # reference scales by sqrt(num_heads)

    x = x_ref[0]                                              # (T, C) tokens of this image

    # ---- LayerNorm 1 ----
    xn = _layer_norm(x, ln1g_ref[...], ln1b_ref[...])

    # ---- Multi-head self-attention (q = k = v = permuted LN output) ----
    # '(d H) -> (H d)' channel permutation applied once via a constant 0/1 matmul.
    z = jnp.dot(xn, perm_ref[...], preferred_element_type=jnp.float32)   # (T, C)

    for h in range(num_heads):                                # static unrolled head loop
        qh = z[:, h * head_dim:(h + 1) * head_dim]            # (T, d) contiguous slice
        s = jax.lax.dot_general(qh, qh, (((1,), (1,)), ((), ())),
                                preferred_element_type=jnp.float32) * scale   # (T, T)
        s = s - jnp.max(s, axis=-1, keepdims=True)
        e = jnp.exp(s)
        p = e / jnp.sum(e, axis=-1, keepdims=True)            # softmax over keys
        attn_ref[0, h] = p                                    # attention scores output
        # 'b H t d -> b t (H d)': head h owns output columns [h*d, (h+1)*d)
        a_scr[:, h * head_dim:(h + 1) * head_dim] = jnp.dot(
            p, qh, preferred_element_type=jnp.float32)

    x1 = x + a_scr[...]        # residual; Dropout == identity in eval mode

    # ---- LayerNorm 2 + FFN (1x1 convs == per-token linear layers) ----
    xn2 = _layer_norm(x1, ln2g_ref[...], ln2b_ref[...])
    hdn = jnp.dot(xn2, w1_ref[...], preferred_element_type=jnp.float32) + b1_ref[...]
    hdn = _gelu_exact(hdn)
    y = jnp.dot(hdn, w2_ref[...], preferred_element_type=jnp.float32) + b2_ref[...]

    y_ref[0] = x1 + y          # residual


def _full_spec(arr):
    zeros = (0,) * arr.ndim
    return pl.BlockSpec(arr.shape, lambda b, z=zeros: z)


def encoder_layer(x, params, *, num_heads):
    """x: (N, T, C) float32 tokens.  Returns (y (N,T,C), attn (N,H,T,T))."""
    N, T, C = x.shape
    head_dim = C // num_heads

    # Constant '(d H)' -> '(H d)' channel permutation as a one-hot matrix.
    idx = jnp.arange(C)
    src = (idx % num_heads) * head_dim + (idx // num_heads)
    perm = jax.nn.one_hot(src, C, dtype=jnp.float32)          # (C, C)

    row = lambda v: v.reshape(1, -1).astype(jnp.float32)      # keep vectors 2-D on TPU
    args = (x.astype(jnp.float32), perm,
            row(params["ln1_g"]), row(params["ln1_b"]),
            row(params["ln2_g"]), row(params["ln2_b"]),
            params["w1"].astype(jnp.float32), row(params["b1"]),
            params["w2"].astype(jnp.float32), row(params["b2"]))

    in_specs = [pl.BlockSpec((1, T, C), lambda b: (b, 0, 0))] + \
               [_full_spec(a) for a in args[1:]]

    y, attn = pl.pallas_call(
        partial(encoder_layer_kernel, num_heads=num_heads),
        grid=(N,),
        in_specs=in_specs,
        out_specs=(pl.BlockSpec((1, T, C), lambda b: (b, 0, 0)),
                   pl.BlockSpec((1, num_heads, T, T), lambda b: (b, 0, 0, 0))),
        out_shape=(jax.ShapeDtypeStruct((N, T, C), jnp.float32),
                   jax.ShapeDtypeStruct((N, num_heads, T, T), jnp.float32)),
        scratch_shapes=[pltpu.VMEM((T, C), jnp.float32)],
        compiler_params=pltpu.CompilerParams(
            dimension_semantics=("parallel",)),
    )(*args)
    return y, attn


def encoder_layers_forward(x, layers_params, *, num_heads=8):
    """Encoder_Layers.forward: jumlah == 0 -> nn.Identity() (x unchanged, no scores)."""
    attn_scores = []
    for p in layers_params:
        x, attn = encoder_layer(x, p, num_heads=num_heads)
        attn_scores.append(attn)
    return x, attn_scores


def init_params(key, embed_dim, num_layers):
    hidden = int(embed_dim * 2)
    u = lambda k, shape, lo=-0.3, hi=0.3: jax.random.uniform(k, shape, jnp.float32, lo, hi)
    layers = []
    for i in range(num_layers):
        ks = jax.random.split(jax.random.fold_in(key, i), 8)
        layers.append({
            "ln1_g": u(ks[0], (embed_dim,), 0.8, 1.2),
            "ln1_b": u(ks[1], (embed_dim,)),
            "ln2_g": u(ks[2], (embed_dim,), 0.8, 1.2),
            "ln2_b": u(ks[3], (embed_dim,)),
            "w1":    u(ks[4], (embed_dim, hidden)),
            "b1":    u(ks[5], (hidden,)),
            "w2":    u(ks[6], (hidden, embed_dim)),
            "b2":    u(ks[7], (embed_dim,)),
        })
    return layers


# ---------------- pure-JAX reference (eval-mode semantics) ----------------
def _ref_encoder_layer(x, p, *, num_heads):
    B, T, C = x.shape
    d = C // num_heads

    def ln(v, g, b):
        mu = v.mean(-1, keepdims=True)
        var = ((v - mu) ** 2).mean(-1, keepdims=True)
        return (v - mu) / jnp.sqrt(var + _LN_EPS) * g + b

    xn = ln(x, p["ln1_g"], p["ln1_b"])
    # rearrange 'b t (d H) -> b H t d'
    q = xn.reshape(B, T, d, num_heads).transpose(0, 3, 1, 2)
    s = jnp.einsum("bhtd,bhsd->bhts", q, q) / num_heads ** 0.5
    att = jax.nn.softmax(s, axis=-1)
    o = jnp.einsum("bhts,bhsd->bhtd", att, q)
    a = o.transpose(0, 2, 1, 3).reshape(B, T, C)   # 'b H t d -> b t (H d)'
    x1 = x + a
    xn2 = ln(x1, p["ln2_g"], p["ln2_b"])
    h = xn2 @ p["w1"] + p["b1"]
    h = jax.nn.gelu(h, approximate=False)
    y = h @ p["w2"] + p["b2"]
    return x1 + y, att


def ref_forward(x, layers_params, *, num_heads=8):
    attns = []
    for p in layers_params:
        x, att = _ref_encoder_layer(x, p, num_heads=num_heads)
        attns.append(att)
    return x, attns


if __name__ == "__main__":
    key = jax.random.PRNGKey(0)
    kx, kp = jax.random.split(key)

    # small shapes: batch=2, tokens=16 (4x4 spatial grid), embed_dim=32, 8 heads, 2 layers
    B, T, C, num_heads, num_layers = 2, 16, 32, 8, 2
    x = jax.random.normal(kx, (B, T, C), jnp.float32)
    params = init_params(kp, C, num_layers)

    y, attns = encoder_layers_forward(x, params, num_heads=num_heads)
    y = jax.block_until_ready(y)

    y_ref, attns_ref = ref_forward(x, params, num_heads=num_heads)
    assert y.shape == (B, T, C)
    assert len(attns) == num_layers
    assert jnp.allclose(y, y_ref, rtol=1e-4, atol=1e-4), float(jnp.max(jnp.abs(y - y_ref)))
    for a, ar in zip(attns, attns_ref):
        assert a.shape == (B, num_heads, T, T)
        assert jnp.allclose(a, ar, rtol=1e-4, atol=1e-4), float(jnp.max(jnp.abs(a - ar)))

    print("KERNEL_OK")
</pallas_src>

<mosaic_0001>
module attributes {stable_mosaic.version = 11 : i64} {
  func.func @encoder_layer_kernel(%arg0: i32, %arg1: memref<1x16x32xf32, #tpu.memory_space<vmem>>, %arg2: memref<32x32xf32, #tpu.memory_space<vmem>>, %arg3: memref<1x32xf32, #tpu.memory_space<vmem>>, %arg4: memref<1x32xf32, #tpu.memory_space<vmem>>, %arg5: memref<1x32xf32, #tpu.memory_space<vmem>>, %arg6: memref<1x32xf32, #tpu.memory_space<vmem>>, %arg7: memref<32x64xf32, #tpu.memory_space<vmem>>, %arg8: memref<1x64xf32, #tpu.memory_space<vmem>>, %arg9: memref<64x32xf32, #tpu.memory_space<vmem>>, %arg10: memref<1x32xf32, #tpu.memory_space<vmem>>, %arg11: memref<1x16x32xf32, #tpu.memory_space<vmem>>, %arg12: memref<1x8x16x16xf32, #tpu.memory_space<vmem>>, %arg13: memref<16x32xf32, #tpu.memory_space<vmem>>) attributes {dimension_semantics = [#tpu.dimension_semantics<parallel>], iteration_bounds = array<i64: 2>, scalar_prefetch = 0 : i64, scratch_operands = 1 : i64, tpu.core_type = #tpu.core_type<tc>, window_params = [{transform_indices = @transform_0, window_bounds = array<i64: 1, 16, 32>}, {pipeline_mode = #tpu.pipeline_mode<synchronous>, transform_indices = @transform_1, window_bounds = array<i64: 32, 32>}, {pipeline_mode = #tpu.pipeline_mode<synchronous>, transform_indices = @transform_2, window_bounds = array<i64: 1, 32>}, {pipeline_mode = #tpu.pipeline_mode<synchronous>, transform_indices = @transform_3, window_bounds = array<i64: 1, 32>}, {pipeline_mode = #tpu.pipeline_mode<synchronous>, transform_indices = @transform_4, window_bounds = array<i64: 1, 32>}, {pipeline_mode = #tpu.pipeline_mode<synchronous>, transform_indices = @transform_5, window_bounds = array<i64: 1, 32>}, {pipeline_mode = #tpu.pipeline_mode<synchronous>, transform_indices = @transform_6, window_bounds = array<i64: 32, 64>}, {pipeline_mode = #tpu.pipeline_mode<synchronous>, transform_indices = @transform_7, window_bounds = array<i64: 1, 64>}, {pipeline_mode = #tpu.pipeline_mode<synchronous>, transform_indices = @transform_8, window_bounds = array<i64: 64, 32>}, {pipeline_mode = #tpu.pipeline_mode<synchronous>, transform_indices = @transform_9, window_bounds = array<i64: 1, 32>}, {transform_indices = @transform_10, window_bounds = array<i64: 1, 16, 32>}, {transform_indices = @transform_11, window_bounds = array<i64: 1, 8, 16, 16>}]} {
    %c0 = arith.constant 0 : index
    %c0_0 = arith.constant 0 : index
    %c0_1 = arith.constant 0 : index
    %0 = vector.load %arg1[%c0, %c0_0, %c0_1] : memref<1x16x32xf32, #tpu.memory_space<vmem>>, vector<1x16x32xf32>
    %1 = vector.shape_cast %0 : vector<1x16x32xf32> to vector<16x32xf32>
    %c0_2 = arith.constant 0 : index
    %c0_3 = arith.constant 0 : index
    %2 = vector.load %arg3[%c0_2, %c0_3] : memref<1x32xf32, #tpu.memory_space<vmem>>, vector<1x32xf32>
    %c0_4 = arith.constant 0 : index
    %c0_5 = arith.constant 0 : index
    %3 = vector.load %arg4[%c0_4, %c0_5] : memref<1x32xf32, #tpu.memory_space<vmem>>, vector<1x32xf32>
    %cst = arith.constant dense<0.000000e+00> : vector<16xf32>
    %4 = vector.multi_reduction <add>, %1, %cst [1] : vector<16x32xf32> to vector<16xf32>
    %5 = vector.shape_cast %4 : vector<16xf32> to vector<16x1xf32>
    %cst_6 = arith.constant 3.200000e+01 : f32
    %6 = vector.broadcast %cst_6 : f32 to vector<16x1xf32>
    %7 = arith.divf %5, %6 : vector<16x1xf32>
    %8 = vector.broadcast %7 : vector<16x1xf32> to vector<16x32xf32>
    %9 = arith.subf %1, %8 : vector<16x32xf32>
    %10 = arith.mulf %9, %9 : vector<16x32xf32>
    %cst_7 = arith.constant dense<0.000000e+00> : vector<16xf32>
    %11 = vector.multi_reduction <add>, %10, %cst_7 [1] : vector<16x32xf32> to vector<16xf32>
    %12 = vector.shape_cast %11 : vector<16xf32> to vector<16x1xf32>
    %cst_8 = arith.constant 3.200000e+01 : f32
    %13 = vector.broadcast %cst_8 : f32 to vector<16x1xf32>
    %14 = arith.divf %12, %13 : vector<16x1xf32>
    %cst_9 = arith.constant 9.99999974E-6 : f32
    %15 = vector.broadcast %cst_9 : f32 to vector<16x1xf32>
    %16 = arith.addf %14, %15 : vector<16x1xf32>
    %17 = math.rsqrt %16 : vector<16x1xf32>
    %18 = vector.broadcast %17 : vector<16x1xf32> to vector<16x32xf32>
    %19 = arith.mulf %9, %18 : vector<16x32xf32>
    %20 = vector.broadcast %2 : vector<1x32xf32> to vector<16x32xf32>
    %21 = arith.mulf %19, %20 : vector<16x32xf32>
    %22 = vector.broadcast %3 : vector<1x32xf32> to vector<16x32xf32>
    %23 = arith.addf %21, %22 : vector<16x32xf32>
    %c0_10 = arith.constant 0 : index
    %c0_11 = arith.constant 0 : index
    %24 = vector.load %arg2[%c0_10, %c0_11] : memref<32x32xf32, #tpu.memory_space<vmem>>, vector<32x32xf32>
    %cst_12 = arith.constant dense<0.000000e+00> : vector<16x32xf32>
    %25 = tpu.matmul %23, %24, %cst_12 {dimension_numbers = #tpu.dot_dimension_numbers<[1], [0], [0], [1], [0, 0, 1, 1], [], []>} : vector<16x32xf32>, vector<32x32xf32>, vector<16x32xf32> -> vector<16x32xf32>
    %26 = vector.extract_strided_slice %25 {offsets = [0, 0], sizes = [16, 4], strides = [1, 1]} : vector<16x32xf32> to vector<16x4xf32>
    %cst_13 = arith.constant dense<0.000000e+00> : vector<16x16xf32>
    %27 = tpu.matmul %26, %26, %cst_13 {dimension_numbers = #tpu.dot_dimension_numbers<[1], [1], [0], [0], [0, 0, 1, 0], [], []>} : vector<16x4xf32>, vector<16x4xf32>, vector<16x16xf32> -> vector<16x16xf32>
    %cst_14 = arith.constant 0.353553385 : f32
    %28 = vector.broadcast %cst_14 : f32 to vector<16x16xf32>
    %29 = arith.mulf %27, %28 : vector<16x16xf32>
    %cst_15 = arith.constant dense<0xFF800000> : vector<16xf32>
    %30 = vector.multi_reduction <maximumf>, %29, %cst_15 [1] : vector<16x16xf32> to vector<16xf32>
    %31 = vector.shape_cast %30 : vector<16xf32> to vector<16x1xf32>
    %32 = vector.broadcast %31 : vector<16x1xf32> to vector<16x16xf32>
    %33 = arith.subf %29, %32 : vector<16x16xf32>
    %34 = math.exp %33 : vector<16x16xf32>
    %cst_16 = arith.constant dense<0.000000e+00> : vector<16xf32>
    %35 = vector.multi_reduction <add>, %34, %cst_16 [1] : vector<16x16xf32> to vector<16xf32>
    %36 = vector.shape_cast %35 : vector<16xf32> to vector<16x1xf32>
    %37 = vector.broadcast %36 : vector<16x1xf32> to vector<16x16xf32>
    %38 = arith.divf %34, %37 : vector<16x16xf32>
    %c0_17 = arith.constant 0 : index
    %c0_18 = arith.constant 0 : index
    %c0_19 = arith.constant 0 : index
    %c0_20 = arith.constant 0 : index
    %39 = vector.load %arg12[%c0_17, %c0_18, %c0_19, %c0_20] : memref<1x8x16x16xf32, #tpu.memory_space<vmem>>, vector<1x1x16x16xf32>
    %40 = vector.shape_cast %39 : vector<1x1x16x16xf32> to vector<16x16xf32>
    %41 = vector.shape_cast %38 : vector<16x16xf32> to vector<1x1x16x16xf32>
    tpu.vector_store %arg12[%c0_17, %c0_18, %c0_19, %c0_20], %41 {strides = array<i32>} : memref<1x8x16x16xf32, #tpu.memory_space<vmem>>, vector<1x1x16x16xf32>,
    %cst_21 = arith.constant dense<0.000000e+00> : vector<16x4xf32>
    %42 = tpu.matmul %38, %26, %cst_21 {dimension_numbers = #tpu.dot_dimension_numbers<[1], [0], [0], [1], [0, 0, 1, 1], [], []>} : vector<16x16xf32>, vector<16x4xf32>, vector<16x4xf32> -> vector<16x4xf32>
    %c0_22 = arith.constant 0 : index
    %c0_23 = arith.constant 0 : index
    %43 = vector.load %arg13[%c0_22, %c0_23] : memref<16x32xf32, #tpu.memory_space<vmem>>, vector<16x4xf32>
    tpu.vector_store %arg13[%c0_22, %c0_23], %42 {strides = array<i32>} : memref<16x32xf32, #tpu.memory_space<vmem>>, vector<16x4xf32>,
    %44 = vector.extract_strided_slice %25 {offsets = [0, 4], sizes = [16, 4], strides = [1, 1]} : vector<16x32xf32> to vector<16x4xf32>
    %cst_24 = arith.constant dense<0.000000e+00> : vector<16x16xf32>
    %45 = tpu.matmul %44, %44, %cst_24 {dimension_numbers = #tpu.dot_dimension_numbers<[1], [1], [0], [0], [0, 0, 1, 0], [], []>} : vector<16x4xf32>, vector<16x4xf32>, vector<16x16xf32> -> vector<16x16xf32>
    %cst_25 = arith.constant 0.353553385 : f32
    %46 = vector.broadcast %cst_25 : f32 to vector<16x16xf32>
    %47 = arith.mulf %45, %46 : vector<16x16xf32>
    %cst_26 = arith.constant dense<0xFF800000> : vector<16xf32>
    %48 = vector.multi_reduction <maximumf>, %47, %cst_26 [1] : vector<16x16xf32> to vector<16xf32>
    %49 = vector.shape_cast %48 : vector<16xf32> to vector<16x1xf32>
    %50 = vector.broadcast %49 : vector<16x1xf32> to vector<16x16xf32>
    %51 = arith.subf %47, %50 : vector<16x16xf32>
    %52 = math.exp %51 : vector<16x16xf32>
    %cst_27 = arith.constant dense<0.000000e+00> : vector<16xf32>
    %53 = vector.multi_reduction <add>, %52, %cst_27 [1] : vector<16x16xf32> to vector<16xf32>
    %54 = vector.shape_cast %53 : vector<16xf32> to vector<16x1xf32>
    %55 = vector.broadcast %54 : vector<16x1xf32> to vector<16x16xf32>
    %56 = arith.divf %52, %55 : vector<16x16xf32>
    %c0_28 = arith.constant 0 : index
    %c1 = arith.constant 1 : index
    %c0_29 = arith.constant 0 : index
    %c0_30 = arith.constant 0 : index
    %57 = vector.load %arg12[%c0_28, %c1, %c0_29, %c0_30] : memref<1x8x16x16xf32, #tpu.memory_space<vmem>>, vector<1x1x16x16xf32>
    %58 = vector.shape_cast %57 : vector<1x1x16x16xf32> to vector<16x16xf32>
    %59 = vector.shape_cast %56 : vector<16x16xf32> to vector<1x1x16x16xf32>
    tpu.vector_store %arg12[%c0_28, %c1, %c0_29, %c0_30], %59 {strides = array<i32>} : memref<1x8x16x16xf32, #tpu.memory_space<vmem>>, vector<1x1x16x16xf32>,
    %cst_31 = arith.constant dense<0.000000e+00> : vector<16x4xf32>
    %60 = tpu.matmul %56, %44, %cst_31 {dimension_numbers = #tpu.dot_dimension_numbers<[1], [0], [0], [1], [0, 0, 1, 1], [], []>} : vector<16x16xf32>, vector<16x4xf32>, vector<16x4xf32> -> vector<16x4xf32>
    %c0_32 = arith.constant 0 : index
    %c4 = arith.constant 4 : index
    %61 = vector.load %arg13[%c0_32, %c4] : memref<16x32xf32, #tpu.memory_space<vmem>>, vector<16x4xf32>
    tpu.vector_store %arg13[%c0_32, %c4], %60 {strides = array<i32>} : memref<16x32xf32, #tpu.memory_space<vmem>>, vector<16x4xf32>,
    %62 = vector.extract_strided_slice %25 {offsets = [0, 8], sizes = [16, 4], strides = [1, 1]} : vector<16x32xf32> to vector<16x4xf32>
    %cst_33 = arith.constant dense<0.000000e+00> : vector<16x16xf32>
    %63 = tpu.matmul %62, %62, %cst_33 {dimension_numbers = #tpu.dot_dimension_numbers<[1], [1], [0], [0], [0, 0, 1, 0], [], []>} : vector<16x4xf32>, vector<16x4xf32>, vector<16x16xf32> -> vector<16x16xf32>
    %cst_34 = arith.constant 0.353553385 : f32
    %64 = vector.broadcast %cst_34 : f32 to vector<16x16xf32>
    %65 = arith.mulf %63, %64 : vector<16x16xf32>
    %cst_35 = arith.constant dense<0xFF800000> : vector<16xf32>
    %66 = vector.multi_reduction <maximumf>, %65, %cst_35 [1] : vector<16x16xf32> to vector<16xf32>
    %67 = vector.shape_cast %66 : vector<16xf32> to vector<16x1xf32>
    %68 = vector.broadcast %67 : vector<16x1xf32> to vector<16x16xf32>
    %69 = arith.subf %65, %68 : vector<16x16xf32>
    %70 = math.exp %69 : vector<16x16xf32>
    %cst_36 = arith.constant dense<0.000000e+00> : vector<16xf32>
    %71 = vector.multi_reduction <add>, %70, %cst_36 [1] : vector<16x16xf32> to vector<16xf32>
    %72 = vector.shape_cast %71 : vector<16xf32> to vector<16x1xf32>
    %73 = vector.broadcast %72 : vector<16x1xf32> to vector<16x16xf32>
    %74 = arith.divf %70, %73 : vector<16x16xf32>
    %c0_37 = arith.constant 0 : index
    %c2 = arith.constant 2 : index
    %c0_38 = arith.constant 0 : index
    %c0_39 = arith.constant 0 : index
    %75 = vector.load %arg12[%c0_37, %c2, %c0_38, %c0_39] : memref<1x8x16x16xf32, #tpu.memory_space<vmem>>, vector<1x1x16x16xf32>
    %76 = vector.shape_cast %75 : vector<1x1x16x16xf32> to vector<16x16xf32>
    %77 = vector.shape_cast %74 : vector<16x16xf32> to vector<1x1x16x16xf32>
    tpu.vector_store %arg12[%c0_37, %c2, %c0_38, %c0_39], %77 {strides = array<i32>} : memref<1x8x16x16xf32, #tpu.memory_space<vmem>>, vector<1x1x16x16xf32>,
    %cst_40 = arith.constant dense<0.000000e+00> : vector<16x4xf32>
    %78 = tpu.matmul %74, %62, %cst_40 {dimension_numbers = #tpu.dot_dimension_numbers<[1], [0], [0], [1], [0, 0, 1, 1], [], []>} : vector<16x16xf32>, vector<16x4xf32>, vector<16x4xf32> -> vector<16x4xf32>
    %c0_41 = arith.constant 0 : index
    %c8 = arith.constant 8 : index
    %79 = vector.load %arg13[%c0_41, %c8] : memref<16x32xf32, #tpu.memory_space<vmem>>, vector<16x4xf32>
    tpu.vector_store %arg13[%c0_41, %c8], %78 {strides = array<i32>} : memref<16x32xf32, #tpu.memory_space<vmem>>, vector<16x4xf32>,
    %80 = vector.extract_strided_slice %25 {offsets = [0, 12], sizes = [16, 4], strides = [1, 1]} : vector<16x32xf32> to vector<16x4xf32>
    %cst_42 = arith.constant dense<0.000000e+00> : vector<16x16xf32>
    %81 = tpu.matmul %80, %80, %cst_42 {dimension_numbers = #tpu.dot_dimension_numbers<[1], [1], [0], [0], [0, 0, 1, 0], [], []>} : vector<16x4xf32>, vector<16x4xf32>, vector<16x16xf32> -> vector<16x16xf32>
    %cst_43 = arith.constant 0.353553385 : f32
    %82 = vector.broadcast %cst_43 : f32 to vector<16x16xf32>
    %83 = arith.mulf %81, %82 : vector<16x16xf32>
    %cst_44 = arith.constant dense<0xFF800000> : vector<16xf32>
    %84 = vector.multi_reduction <maximumf>, %83, %cst_44 [1] : vector<16x16xf32> to vector<16xf32>
    %85 = vector.shape_cast %84 : vector<16xf32> to vector<16x1xf32>
    %86 = vector.broadcast %85 : vector<16x1xf32> to vector<16x16xf32>
    %87 = arith.subf %83, %86 : vector<16x16xf32>
    %88 = math.exp %87 : vector<16x16xf32>
    %cst_45 = arith.constant dense<0.000000e+00> : vector<16xf32>
    %89 = vector.multi_reduction <add>, %88, %cst_45 [1] : vector<16x16xf32> to vector<16xf32>
    %90 = vector.shape_cast %89 : vector<16xf32> to vector<16x1xf32>
    %91 = vector.broadcast %90 : vector<16x1xf32> to vector<16x16xf32>
    %92 = arith.divf %88, %91 : vector<16x16xf32>
    %c0_46 = arith.constant 0 : index
    %c3 = arith.constant 3 : index
    %c0_47 = arith.constant 0 : index
    %c0_48 = arith.constant 0 : index
    %93 = vector.load %arg12[%c0_46, %c3, %c0_47, %c0_48] : memref<1x8x16x16xf32, #tpu.memory_space<vmem>>, vector<1x1x16x16xf32>
    %94 = vector.shape_cast %93 : vector<1x1x16x16xf32> to vector<16x16xf32>
    %95 = vector.shape_cast %92 : vector<16x16xf32> to vector<1x1x16x16xf32>
    tpu.vector_store %arg12[%c0_46, %c3, %c0_47, %c0_48], %95 {strides = array<i32>} : memref<1x8x16x16xf32, #tpu.memory_space<vmem>>, vector<1x1x16x16xf32>,
    %cst_49 = arith.constant dense<0.000000e+00> : vector<16x4xf32>
    %96 = tpu.matmul %92, %80, %cst_49 {dimension_numbers = #tpu.dot_dimension_numbers<[1], [0], [0], [1], [0, 0, 1, 1], [], []>} : vector<16x16xf32>, vector<16x4xf32>, vector<16x4xf32> -> vector<16x4xf32>
    %c0_50 = arith.constant 0 : index
    %c12 = arith.constant 12 : index
    %97 = vector.load %arg13[%c0_50, %c12] : memref<16x32xf32, #tpu.memory_space<vmem>>, vector<16x4xf32>
    tpu.vector_store %arg13[%c0_50, %c12], %96 {strides = array<i32>} : memref<16x32xf32, #tpu.memory_space<vmem>>, vector<16x4xf32>,
    %98 = vector.extract_strided_slice %25 {offsets = [0, 16], sizes = [16, 4], strides = [1, 1]} : vector<16x32xf32> to vector<16x4xf32>
    %cst_51 = arith.constant dense<0.000000e+00> : vector<16x16xf32>
    %99 = tpu.matmul %98, %98, %cst_51 {dimension_numbers = #tpu.dot_dimension_numbers<[1], [1], [0], [0], [0, 0, 1, 0], [], []>} : vector<16x4xf32>, vector<16x4xf32>, vector<16x16xf32> -> vector<16x16xf32>
    %cst_52 = arith.constant 0.353553385 : f32
    %100 = vector.broadcast %cst_52 : f32 to vector<16x16xf32>
    %101 = arith.mulf %99, %100 : vector<16x16xf32>
    %cst_53 = arith.constant dense<0xFF800000> : vector<16xf32>
    %102 = vector.multi_reduction <maximumf>, %101, %cst_53 [1] : vector<16x16xf32> to vector<16xf32>
    %103 = vector.shape_cast %102 : vector<16xf32> to vector<16x1xf32>
    %104 = vector.broadcast %103 : vector<16x1xf32> to vector<16x16xf32>
    %105 = arith.subf %101, %104 : vector<16x16xf32>
    %106 = math.exp %105 : vector<16x16xf32>
    %cst_54 = arith.constant dense<0.000000e+00> : vector<16xf32>
    %107 = vector.multi_reduction <add>, %106, %cst_54 [1] : vector<16x16xf32> to vector<16xf32>
    %108 = vector.shape_cast %107 : vector<16xf32> to vector<16x1xf32>
    %109 = vector.broadcast %108 : vector<16x1xf32> to vector<16x16xf32>
    %110 = arith.divf %106, %109 : vector<16x16xf32>
    %c0_55 = arith.constant 0 : index
    %c4_56 = arith.constant 4 : index
    %c0_57 = arith.constant 0 : index
    %c0_58 = arith.constant 0 : index
    %111 = vector.load %arg12[%c0_55, %c4_56, %c0_57, %c0_58] : memref<1x8x16x16xf32, #tpu.memory_space<vmem>>, vector<1x1x16x16xf32>
    %112 = vector.shape_cast %111 : vector<1x1x16x16xf32> to vector<16x16xf32>
    %113 = vector.shape_cast %110 : vector<16x16xf32> to vector<1x1x16x16xf32>
    tpu.vector_store %arg12[%c0_55, %c4_56, %c0_57, %c0_58], %113 {strides = array<i32>} : memref<1x8x16x16xf32, #tpu.memory_space<vmem>>, vector<1x1x16x16xf32>,
    %cst_59 = arith.constant dense<0.000000e+00> : vector<16x4xf32>
    %114 = tpu.matmul %110, %98, %cst_59 {dimension_numbers = #tpu.dot_dimension_numbers<[1], [0], [0], [1], [0, 0, 1, 1], [], []>} : vector<16x16xf32>, vector<16x4xf32>, vector<16x4xf32> -> vector<16x4xf32>
    %c0_60 = arith.constant 0 : index
    %c16 = arith.constant 16 : index
    %115 = vector.load %arg13[%c0_60, %c16] : memref<16x32xf32, #tpu.memory_space<vmem>>, vector<16x4xf32>
    tpu.vector_store %arg13[%c0_60, %c16], %114 {strides = array<i32>} : memref<16x32xf32, #tpu.memory_space<vmem>>, vector<16x4xf32>,
    %116 = vector.extract_strided_slice %25 {offsets = [0, 20], sizes = [16, 4], strides = [1, 1]} : vector<16x32xf32> to vector<16x4xf32>
    %cst_61 = arith.constant dense<0.000000e+00> : vector<16x16xf32>
    %117 = tpu.matmul %116, %116, %cst_61 {dimension_numbers = #tpu.dot_dimension_numbers<[1], [1], [0], [0], [0, 0, 1, 0], [], []>} : vector<16x4xf32>, vector<16x4xf32>, vector<16x16xf32> -> vector<16x16xf32>
    %cst_62 = arith.constant 0.353553385 : f32
    %118 = vector.broadcast %cst_62 : f32 to vector<16x16xf32>
    %119 = arith.mulf %117, %118 : vector<16x16xf32>
    %cst_63 = arith.constant dense<0xFF800000> : vector<16xf32>
    %120 = vector.multi_reduction <maximumf>, %119, %cst_63 [1] : vector<16x16xf32> to vector<16xf32>
    %121 = vector.shape_cast %120 : vector<16xf32> to vector<16x1xf32>
    %122 = vector.broadcast %121 : vector<16x1xf32> to vector<16x16xf32>
    %123 = arith.subf %119, %122 : vector<16x16xf32>
    %124 = math.exp %123 : vector<16x16xf32>
    %cst_64 = arith.constant dense<0.000000e+00> : vector<16xf32>
    %125 = vector.multi_reduction <add>, %124, %cst_64 [1] : vector<16x16xf32> to vector<16xf32>
    %126 = vector.shape_cast %125 : vector<16xf32> to vector<16x1xf32>
    %127 = vector.broadcast %126 : vector<16x1xf32> to vector<16x16xf32>
    %128 = arith.divf %124, %127 : vector<16x16xf32>
    %c0_65 = arith.constant 0 : index
    %c5 = arith.constant 5 : index
    %c0_66 = arith.constant 0 : index
    %c0_67 = arith.constant 0 : index
    %129 = vector.load %arg12[%c0_65, %c5, %c0_66, %c0_67] : memref<1x8x16x16xf32, #tpu.memory_space<vmem>>, vector<1x1x16x16xf32>
    %130 = vector.shape_cast %129 : vector<1x1x16x16xf32> to vector<16x16xf32>
    %131 = vector.shape_cast %128 : vector<16x16xf32> to vector<1x1x16x16xf32>
    tpu.vector_store %arg12[%c0_65, %c5, %c0_66, %c0_67], %131 {strides = array<i32>} : memref<1x8x16x16xf32, #tpu.memory_space<vmem>>, vector<1x1x16x16xf32>,
    %cst_68 = arith.constant dense<0.000000e+00> : vector<16x4xf32>
    %132 = tpu.matmul %128, %116, %cst_68 {dimension_numbers = #tpu.dot_dimension_numbers<[1], [0], [0], [1], [0, 0, 1, 1], [], []>} : vector<16x16xf32>, vector<16x4xf32>, vector<16x4xf32> -> vector<16x4xf32>
    %c0_69 = arith.constant 0 : index
    %c20 = arith.constant 20 : index
    %133 = vector.load %arg13[%c0_69, %c20] : memref<16x32xf32, #tpu.memory_space<vmem>>, vector<16x4xf32>
    tpu.vector_store %arg13[%c0_69, %c20], %132 {strides = array<i32>} : memref<16x32xf32, #tpu.memory_space<vmem>>, vector<16x4xf32>,
    %134 = vector.extract_strided_slice %25 {offsets = [0, 24], sizes = [16, 4], strides = [1, 1]} : vector<16x32xf32> to vector<16x4xf32>
    %cst_70 = arith.constant dense<0.000000e+00> : vector<16x16xf32>
    %135 = tpu.matmul %134, %134, %cst_70 {dimension_numbers = #tpu.dot_dimension_numbers<[1], [1], [0], [0], [0, 0, 1, 0], [], []>} : vector<16x4xf32>, vector<16x4xf32>, vector<16x16xf32> -> vector<16x16xf32>
    %cst_71 = arith.constant 0.353553385 : f32
    %136 = vector.broadcast %cst_71 : f32 to vector<16x16xf32>
    %137 = arith.mulf %135, %136 : vector<16x16xf32>
    %cst_72 = arith.constant dense<0xFF800000> : vector<16xf32>
    %138 = vector.multi_reduction <maximumf>, %137, %cst_72 [1] : vector<16x16xf32> to vector<16xf32>
    %139 = vector.shape_cast %138 : vector<16xf32> to vector<16x1xf32>
    %140 = vector.broadcast %139 : vector<16x1xf32> to vector<16x16xf32>
    %141 = arith.subf %137, %140 : vector<16x16xf32>
    %142 = math.exp %141 : vector<16x16xf32>
    %cst_73 = arith.constant dense<0.000000e+00> : vector<16xf32>
    %143 = vector.multi_reduction <add>, %142, %cst_73 [1] : vector<16x16xf32> to vector<16xf32>
    %144 = vector.shape_cast %143 : vector<16xf32> to vector<16x1xf32>
    %145 = vector.broadcast %144 : vector<16x1xf32> to vector<16x16xf32>
    %146 = arith.divf %142, %145 : vector<16x16xf32>
    %c0_74 = arith.constant 0 : index
    %c6 = arith.constant 6 : index
    %c0_75 = arith.constant 0 : index
    %c0_76 = arith.constant 0 : index
    %147 = vector.load %arg12[%c0_74, %c6, %c0_75, %c0_76] : memref<1x8x16x16xf32, #tpu.memory_space<vmem>>, vector<1x1x16x16xf32>
    %148 = vector.shape_cast %147 : vector<1x1x16x16xf32> to vector<16x16xf32>
    %149 = vector.shape_cast %146 : vector<16x16xf32> to vector<1x1x16x16xf32>
    tpu.vector_store %arg12[%c0_74, %c6, %c0_75, %c0_76], %149 {strides = array<i32>} : memref<1x8x16x16xf32, #tpu.memory_space<vmem>>, vector<1x1x16x16xf32>,
    %cst_77 = arith.constant dense<0.000000e+00> : vector<16x4xf32>
    %150 = tpu.matmul %146, %134, %cst_77 {dimension_numbers = #tpu.dot_dimension_numbers<[1], [0], [0], [1], [0, 0, 1, 1], [], []>} : vector<16x16xf32>, vector<16x4xf32>, vector<16x4xf32> -> vector<16x4xf32>
    %c0_78 = arith.constant 0 : index
    %c24 = arith.constant 24 : index
    %151 = vector.load %arg13[%c0_78, %c24] : memref<16x32xf32, #tpu.memory_space<vmem>>, vector<16x4xf32>
    tpu.vector_store %arg13[%c0_78, %c24], %150 {strides = array<i32>} : memref<16x32xf32, #tpu.memory_space<vmem>>, vector<16x4xf32>,
    %152 = vector.extract_strided_slice %25 {offsets = [0, 28], sizes = [16, 4], strides = [1, 1]} : vector<16x32xf32> to vector<16x4xf32>
    %cst_79 = arith.constant dense<0.000000e+00> : vector<16x16xf32>
    %153 = tpu.matmul %152, %152, %cst_79 {dimension_numbers = #tpu.dot_dimension_numbers<[1], [1], [0], [0], [0, 0, 1, 0], [], []>} : vector<16x4xf32>, vector<16x4xf32>, vector<16x16xf32> -> vector<16x16xf32>
    %cst_80 = arith.constant 0.353553385 : f32
    %154 = vector.broadcast %cst_80 : f32 to vector<16x16xf32>
    %155 = arith.mulf %153, %154 : vector<16x16xf32>
    %cst_81 = arith.constant dense<0xFF800000> : vector<16xf32>
    %156 = vector.multi_reduction <maximumf>, %155, %cst_81 [1] : vector<16x16xf32> to vector<16xf32>
    %157 = vector.shape_cast %156 : vector<16xf32> to vector<16x1xf32>
    %158 = vector.broadcast %157 : vector<16x1xf32> to vector<16x16xf32>
    %159 = arith.subf %155, %158 : vector<16x16xf32>
    %160 = math.exp %159 : vector<16x16xf32>
    %cst_82 = arith.constant dense<0.000000e+00> : vector<16xf32>
    %161 = vector.multi_reduction <add>, %160, %cst_82 [1] : vector<16x16xf32> to vector<16xf32>
    %162 = vector.shape_cast %161 : vector<16xf32> to vector<16x1xf32>
    %163 = vector.broadcast %162 : vector<16x1xf32> to vector<16x16xf32>
    %164 = arith.divf %160, %163 : vector<16x16xf32>
    %c0_83 = arith.constant 0 : index
    %c7 = arith.constant 7 : index
    %c0_84 = arith.constant 0 : index
    %c0_85 = arith.constant 0 : index
    %165 = vector.load %arg12[%c0_83, %c7, %c0_84, %c0_85] : memref<1x8x16x16xf32, #tpu.memory_space<vmem>>, vector<1x1x16x16xf32>
    %166 = vector.shape_cast %165 : vector<1x1x16x16xf32> to vector<16x16xf32>
    %167 = vector.shape_cast %164 : vector<16x16xf32> to vector<1x1x16x16xf32>
    tpu.vector_store %arg12[%c0_83, %c7, %c0_84, %c0_85], %167 {strides = array<i32>} : memref<1x8x16x16xf32, #tpu.memory_space<vmem>>, vector<1x1x16x16xf32>,
    %cst_86 = arith.constant dense<0.000000e+00> : vector<16x4xf32>
    %168 = tpu.matmul %164, %152, %cst_86 {dimension_numbers = #tpu.dot_dimension_numbers<[1], [0], [0], [1], [0, 0, 1, 1], [], []>} : vector<16x16xf32>, vector<16x4xf32>, vector<16x4xf32> -> vector<16x4xf32>
    %c0_87 = arith.constant 0 : index
    %c28 = arith.constant 28 : index
    %169 = vector.load %arg13[%c0_87, %c28] : memref<16x32xf32, #tpu.memory_space<vmem>>, vector<16x4xf32>
    tpu.vector_store %arg13[%c0_87, %c28], %168 {strides = array<i32>} : memref<16x32xf32, #tpu.memory_space<vmem>>, vector<16x4xf32>,
    %c0_88 = arith.constant 0 : index
    %c0_89 = arith.constant 0 : index
    %170 = vector.load %arg13[%c0_88, %c0_89] : memref<16x32xf32, #tpu.memory_space<vmem>>, vector<16x32xf32>
    %171 = arith.addf %1, %170 : vector<16x32xf32>
    %c0_90 = arith.constant 0 : index
    %c0_91 = arith.constant 0 : index
    %172 = vector.load %arg5[%c0_90, %c0_91] : memref<1x32xf32, #tpu.memory_space<vmem>>, vector<1x32xf32>
    %c0_92 = arith.constant 0 : index
    %c0_93 = arith.constant 0 : index
    %173 = vector.load %arg6[%c0_92, %c0_93] : memref<1x32xf32, #tpu.memory_space<vmem>>, vector<1x32xf32>
    %cst_94 = arith.constant dense<0.000000e+00> : vector<16xf32>
    %174 = vector.multi_reduction <add>, %171, %cst_94 [1] : vector<16x32xf32> to vector<16xf32>
    %175 = vector.shape_cast %174 : vector<16xf32> to vector<16x1xf32>
    %cst_95 = arith.constant 3.200000e+01 : f32
    %176 = vector.broadcast %cst_95 : f32 to vector<16x1xf32>
    %177 = arith.divf %175, %176 : vector<16x1xf32>
    %178 = vector.broadcast %177 : vector<16x1xf32> to vector<16x32xf32>
    %179 = arith.subf %171, %178 : vector<16x32xf32>
    %180 = arith.mulf %179, %179 : vector<16x32xf32>
    %cst_96 = arith.constant dense<0.000000e+00> : vector<16xf32>
    %181 = vector.multi_reduction <add>, %180, %cst_96 [1] : vector<16x32xf32> to vector<16xf32>
    %182 = vector.shape_cast %181 : vector<16xf32> to vector<16x1xf32>
    %cst_97 = arith.constant 3.200000e+01 : f32
    %183 = vector.broadcast %cst_97 : f32 to vector<16x1xf32>
    %184 = arith.divf %182, %183 : vector<16x1xf32>
    %cst_98 = arith.constant 9.99999974E-6 : f32
    %185 = vector.broadcast %cst_98 : f32 to vector<16x1xf32>
    %186 = arith.addf %184, %185 : vector<16x1xf32>
    %187 = math.rsqrt %186 : vector<16x1xf32>
    %188 = vector.broadcast %187 : vector<16x1xf32> to vector<16x32xf32>
    %189 = arith.mulf %179, %188 : vector<16x32xf32>
    %190 = vector.broadcast %172 : vector<1x32xf32> to vector<16x32xf32>
    %191 = arith.mulf %189, %190 : vector<16x32xf32>
    %192 = vector.broadcast %173 : vector<1x32xf32> to vector<16x32xf32>
    %193 = arith.addf %191, %192 : vector<16x32xf32>
    %c0_99 = arith.constant 0 : index
    %c0_100 = arith.constant 0 : index
    %194 = vector.load %arg7[%c0_99, %c0_100] : memref<32x64xf32, #tpu.memory_space<vmem>>, vector<32x64xf32>
    %cst_101 = arith.constant dense<0.000000e+00> : vector<16x64xf32>
    %195 = tpu.matmul %193, %194, %cst_101 {dimension_numbers = #tpu.dot_dimension_numbers<[1], [0], [0], [1], [0, 0, 1, 1], [], []>} : vector<16x32xf32>, vector<32x64xf32>, vector<16x64xf32> -> vector<16x64xf32>
    %c0_102 = arith.constant 0 : index
    %c0_103 = arith.constant 0 : index
    %196 = vector.load %arg8[%c0_102, %c0_103] : memref<1x64xf32, #tpu.memory_space<vmem>>, vector<1x64xf32>
    %197 = vector.broadcast %196 : vector<1x64xf32> to vector<16x64xf32>
    %198 = arith.addf %195, %197 : vector<16x64xf32>
    %cst_104 = arith.constant 5.000000e-01 : f32
    %199 = vector.broadcast %cst_104 : f32 to vector<16x64xf32>
    %200 = arith.mulf %199, %198 : vector<16x64xf32>
    %cst_105 = arith.constant 0.707106769 : f32
    %201 = vector.broadcast %cst_105 : f32 to vector<16x64xf32>
    %202 = arith.mulf %198, %201 : vector<16x64xf32>
    %cst_106 = arith.constant 0.000000e+00 : f32
    %203 = vector.broadcast %cst_106 : f32 to vector<16x64xf32>
    %204 = arith.cmpf oge, %202, %203 : vector<16x64xf32>
    %cst_107 = arith.constant 1.000000e+00 : f32
    %cst_108 = arith.constant -1.000000e+00 : f32
    %205 = vector.broadcast %cst_107 : f32 to vector<16x64xf32>
    %206 = vector.broadcast %cst_108 : f32 to vector<16x64xf32>
    %207 = arith.select %204, %205, %206 : vector<16x64xi1>, vector<16x64xf32>
    %208 = math.absf %202 : vector<16x64xf32>
    %cst_109 = arith.constant 0.327591091 : f32
    %209 = vector.broadcast %cst_109 : f32 to vector<16x64xf32>
    %210 = arith.mulf %209, %208 : vector<16x64xf32>
    %cst_110 = arith.constant 1.000000e+00 : f32
    %211 = vector.broadcast %cst_110 : f32 to vector<16x64xf32>
    %212 = arith.addf %211, %210 : vector<16x64xf32>
    %cst_111 = arith.constant 1.000000e+00 : f32
    %213 = vector.broadcast %cst_111 : f32 to vector<16x64xf32>
    %214 = arith.divf %213, %212 : vector<16x64xf32>
    %cst_112 = arith.constant 1.06140542 : f32
    %215 = vector.broadcast %cst_112 : f32 to vector<16x64xf32>
    %216 = arith.mulf %215, %214 : vector<16x64xf32>
    %cst_113 = arith.constant -1.45315206 : f32
    %217 = vector.broadcast %cst_113 : f32 to vector<16x64xf32>
    %218 = arith.addf %216, %217 : vector<16x64xf32>
    %219 = arith.mulf %218, %214 : vector<16x64xf32>
    %cst_114 = arith.constant 1.42141378 : f32
    %220 = vector.broadcast %cst_114 : f32 to vector<16x64xf32>
    %221 = arith.addf %219, %220 : vector<16x64xf32>
    %222 = arith.mulf %221, %214 : vector<16x64xf32>
    %cst_115 = arith.constant -0.284496725 : f32
    %223 = vector.broadcast %cst_115 : f32 to vector<16x64xf32>
    %224 = arith.addf %222, %223 : vector<16x64xf32>
    %225 = arith.mulf %224, %214 : vector<16x64xf32>
    %cst_116 = arith.constant 0.254829586 : f32
    %226 = vector.broadcast %cst_116 : f32 to vector<16x64xf32>
    %227 = arith.addf %225, %226 : vector<16x64xf32>
    %228 = arith.mulf %227, %214 : vector<16x64xf32>
    %cst_117 = arith.constant 0.000000e+00 : f32
    %229 = vector.broadcast %cst_117 : f32 to vector<16x64xf32>
    %230 = arith.subf %229, %208 : vector<16x64xf32>
    %231 = arith.mulf %230, %208 : vector<16x64xf32>
    %232 = math.exp %231 : vector<16x64xf32>
    %233 = arith.mulf %228, %232 : vector<16x64xf32>
    %cst_118 = arith.constant 1.000000e+00 : f32
    %234 = vector.broadcast %cst_118 : f32 to vector<16x64xf32>
    %235 = arith.subf %234, %233 : vector<16x64xf32>
    %236 = arith.mulf %207, %235 : vector<16x64xf32>
    %cst_119 = arith.constant 1.000000e+00 : f32
    %237 = vector.broadcast %cst_119 : f32 to vector<16x64xf32>
    %238 = arith.addf %237, %236 : vector<16x64xf32>
    %239 = arith.mulf %200, %238 : vector<16x64xf32>
    %c0_120 = arith.constant 0 : index
    %c0_121 = arith.constant 0 : index
    %240 = vector.load %arg9[%c0_120, %c0_121] : memref<64x32xf32, #tpu.memory_space<vmem>>, vector<64x32xf32>
    %cst_122 = arith.constant dense<0.000000e+00> : vector<16x32xf32>
    %241 = tpu.matmul %239, %240, %cst_122 {dimension_numbers = #tpu.dot_dimension_numbers<[1], [0], [0], [1], [0, 0, 1, 1], [], []>} : vector<16x64xf32>, vector<64x32xf32>, vector<16x32xf32> -> vector<16x32xf32>
    %c0_123 = arith.constant 0 : index
    %c0_124 = arith.constant 0 : index
    %242 = vector.load %arg10[%c0_123, %c0_124] : memref<1x32xf32, #tpu.memory_space<vmem>>, vector<1x32xf32>
    %243 = vector.broadcast %242 : vector<1x32xf32> to vector<16x32xf32>
    %244 = arith.addf %241, %243 : vector<16x32xf32>
    %245 = arith.addf %171, %244 : vector<16x32xf32>
    %c0_125 = arith.constant 0 : index
    %c0_126 = arith.constant 0 : index
    %c0_127 = arith.constant 0 : index
    %246 = vector.load %arg11[%c0_125, %c0_126, %c0_127] : memref<1x16x32xf32, #tpu.memory_space<vmem>>, vector<1x16x32xf32>
    %247 = vector.shape_cast %246 : vector<1x16x32xf32> to vector<16x32xf32>
    %248 = vector.shape_cast %245 : vector<16x32xf32> to vector<1x16x32xf32>
    tpu.vector_store %arg11[%c0_125, %c0_126, %c0_127], %248 {strides = array<i32>} : memref<1x16x32xf32, #tpu.memory_space<vmem>>, vector<1x16x32xf32>,
    return
  }
  func.func @transform_0(%arg0: i32) -> (i32, i32, i32) {
    %c0_i32 = arith.constant 0 : i32
    %c0_i32_0 = arith.constant 0 : i32
    %c0_i32_1 = arith.constant 0 : i32
    return %arg0, %c0_i32, %c0_i32_0 : i32, i32, i32
  }
  func.func @transform_1(%arg0: i32) -> (i32, i32) {
    %c0_i32 = arith.constant 0 : i32
    %c0_i32_0 = arith.constant 0 : i32
    %c0_i32_1 = arith.constant 0 : i32
    return %c0_i32, %c0_i32_0 : i32, i32
  }
  func.func @transform_2(%arg0: i32) -> (i32, i32) {
    %c0_i32 = arith.constant 0 : i32
    %c0_i32_0 = arith.constant 0 : i32
    %c0_i32_1 = arith.constant 0 : i32
    return %c0_i32, %c0_i32_0 : i32, i32
  }
  func.func @transform_3(%arg0: i32) -> (i32, i32) {
    %c0_i32 = arith.constant 0 : i32
    %c0_i32_0 = arith.constant 0 : i32
    %c0_i32_1 = arith.constant 0 : i32
    return %c0_i32, %c0_i32_0 : i32, i32
  }
  func.func @transform_4(%arg0: i32) -> (i32, i32) {
    %c0_i32 = arith.constant 0 : i32
    %c0_i32_0 = arith.constant 0 : i32
    %c0_i32_1 = arith.constant 0 : i32
    return %c0_i32, %c0_i32_0 : i32, i32
  }
  func.func @transform_5(%arg0: i32) -> (i32, i32) {
    %c0_i32 = arith.constant 0 : i32
    %c0_i32_0 = arith.constant 0 : i32
    %c0_i32_1 = arith.constant 0 : i32
    return %c0_i32, %c0_i32_0 : i32, i32
  }
  func.func @transform_6(%arg0: i32) -> (i32, i32) {
    %c0_i32 = arith.constant 0 : i32
    %c0_i32_0 = arith.constant 0 : i32
    %c0_i32_1 = arith.constant 0 : i32
    return %c0_i32, %c0_i32_0 : i32, i32
  }
  func.func @transform_7(%arg0: i32) -> (i32, i32) {
    %c0_i32 = arith.constant 0 : i32
    %c0_i32_0 = arith.constant 0 : i32
    %c0_i32_1 = arith.constant 0 : i32
    return %c0_i32, %c0_i32_0 : i32, i32
  }
  func.func @transform_8(%arg0: i32) -> (i32, i32) {
    %c0_i32 = arith.constant 0 : i32
    %c0_i32_0 = arith.constant 0 : i32
    %c0_i32_1 = arith.constant 0 : i32
    return %c0_i32, %c0_i32_0 : i32, i32
  }
  func.func @transform_9(%arg0: i32) -> (i32, i32) {
    %c0_i32 = arith.constant 0 : i32
    %c0_i32_0 = arith.constant 0 : i32
    %c0_i32_1 = arith.constant 0 : i32
    return %c0_i32, %c0_i32_0 : i32, i32
  }
  func.func @transform_10(%arg0: i32) -> (i32, i32, i32) {
    %c0_i32 = arith.constant 0 : i32
    %c0_i32_0 = arith.constant 0 : i32
    %c0_i32_1 = arith.constant 0 : i32
    return %arg0, %c0_i32, %c0_i32_0 : i32, i32, i32
  }
  func.func @transform_11(%arg0: i32) -> (i32, i32, i32, i32) {
    %c0_i32 = arith.constant 0 : i32
    %c0_i32_0 = arith.constant 0 : i32
    %c0_i32_1 = arith.constant 0 : i32
    %c0_i32_2 = arith.constant 0 : i32
    return %arg0, %c0_i32, %c0_i32_0, %c0_i32_1 : i32, i32, i32, i32
  }
}

</mosaic_0001>

<llo_original>
// kernel: tpu_custom_call.1
$region0: #{tpu_custom_call.1}
  #allocation0 [shape = 'u32[]', space=smem, size = 0x4, offset = 0x4, fixed_abs, tag = 'smem constant byte address 0x4 - core index']
  #allocation1 [shape = 'u32[144,128]{1,0:T(1,128)}', space=vmem, size = 0x12000, scoped, tag = 'internal scratch']
  #allocation2 [shape = 'f32[16,32]{1,0:T(8,128)}', space=vmem, size = 0x2000, scoped, tag = 'scratch operand']
  %s0 = inlined_call_operand.vmem [shape: f32[2,16,32], index: 0, kind: input, shape index: {}]
  %s1 = inlined_call_operand.vmem [shape: f32[32,32], index: 1, kind: input, shape index: {}]
  %s2 = inlined_call_operand.vmem [shape: f32[1,32], index: 2, kind: input, shape index: {}]
  %s3 = inlined_call_operand.vmem [shape: f32[1,32], index: 3, kind: input, shape index: {}]
  %s4 = inlined_call_operand.vmem [shape: f32[1,32], index: 4, kind: input, shape index: {}]
  %s5 = inlined_call_operand.vmem [shape: f32[1,32], index: 5, kind: input, shape index: {}]
  %s6 = inlined_call_operand.vmem [shape: f32[32,64], index: 6, kind: input, shape index: {}]
  %s7 = inlined_call_operand.vmem [shape: f32[1,64], index: 7, kind: input, shape index: {}]
  %s8 = inlined_call_operand.vmem [shape: f32[64,32], index: 8, kind: input, shape index: {}]
  %s9 = inlined_call_operand.vmem [shape: f32[1,32], index: 9, kind: input, shape index: {}]
  %s10 = inlined_call_operand.hbm [shape: f32[2,16,32], index: 10, kind: output, shape index: {0}]
  %s11 = inlined_call_operand.hbm [shape: f32[2,8,16,16], index: 11, kind: output, shape index: {1}]
  %12 = xla_tuple %s10, %s11
  %s13 = sld [smem:[#allocation0]]
  $region81: #{tpu_custom_call.1} parent=0
    _
  %s15 = ssub.s32 1, %s13
  %s16 = scalar_select 0, %s15, %s13
  $region1: #{tpu_custom_call.1} parent=0
    #allocation3 [shape = 'u8[16384]{0}', space=vmem, size = 0x4000, scoped, tag = 'output window, operand 0']
    #allocation4 [shape = 's32[2]{0}', space=sflag, size = 0x8, scoped, tag = 'scoped memory for tpu_custom_call.1']
    #allocation5 [shape = 'u8[131072]{0}', space=vmem, size = 0x20000, scoped, tag = 'output window, operand 1']
    #allocation6 [shape = 's32[2]{0}', space=sflag, size = 0x8, scoped, tag = 'scoped memory for tpu_custom_call.1']
    %17 = vsyncpa [#allocation4], 0
    %s18 = scalar_lea.sflag [#allocation4], 1
    %19 = vsyncpa %s18, 0
    %20 = vsyncpa [#allocation6], 0
    %s21 = scalar_lea.sflag [#allocation6], 1
    %22 = vsyncpa %s21, 0
    loop: start=0, step=1, limit=4
    $region2: #{tpu_custom_call.1} parent=1 // loop_pre_header
      _
    $region3: #{tpu_custom_call.1} parent=1 // loop_header
      %s24 = sphi 0, %s28
      %p25 = scmp.ge.s32.totalorder %s24, 4
      %s34 = sphi 0, %s36
      %s37 = sphi 0, %s34
      %s38 = sphi 0, %s37
      %s54 = sphi 0, %s38
      %s58 = sphi 0, %s58
      %s60 = sphi 0, %s58
      %s61 = sphi 0, %s60
      %s75 = sphi 0, %s61
      %s79 = sphi 0, %s79
      %s81 = sphi 0, %s79
      %s82 = sphi 0, %s81
      %s96 = sphi 0, %s82
      %s100 = sphi 0, %s100
      %s102 = sphi 0, %s100
      %s103 = sphi 0, %s102
      %s117 = sphi 0, %s103
      %s121 = sphi 0, %s121
      %s123 = sphi 0, %s121
      %s124 = sphi 0, %s123
      %s138 = sphi 0, %s124
      %s142 = sphi 0, %s142
      %s144 = sphi 0, %s142
      %s145 = sphi 0, %s144
      %s159 = sphi 0, %s145
      %s163 = sphi 0, %s163
      %s165 = sphi 0, %s163
      %s166 = sphi 0, %s165
      %s180 = sphi 0, %s166
      %s184 = sphi 0, %s184
      %s186 = sphi 0, %s184
      %s187 = sphi 0, %s186
      %s201 = sphi 0, %s187
      %s205 = sphi 0, %s205
      %s207 = sphi 0, %s205
      %s208 = sphi 0, %s207
      %s222 = sphi 0, %s208
      %s226 = sphi 0, %s226
      %s228 = sphi 0, %s226
      %s229 = sphi 0, %s228
      %s243 = sphi 0, %s229
      %s249 = sphi 0, %s251
      %s252 = sphi 0, %s249
      %s253 = sphi 0, %s252
      %s269 = sphi 0, %s253
      %s275 = sphi 0, %s277
      %s278 = sphi 0, %s275
      %s279 = sphi 0, %s278
      %s295 = sphi 0, %s279
    $region4: #{tpu_custom_call.1} parent=1 // loop_header_branch
      %27 = sbr.rel (%p25) target = $region8
    $region5: #{tpu_custom_call.1} parent=1 // loop_body
      %s29 = ssub.s32 %s24, 1
      %s30 = ssub.s32 %s24, 2
      %s31 = sadd.s32 %s24, 1
      %s32 = ssub.s32 %s24, %s31
      %p33 = scmp.eq.s32.totalorder %s32, 0
      %s35 = sadd.s32 %s34, 1
      %s36 = scalar_select %p33, %s34, %s35
      %p39 = pneg %p33
      %p40 = scmp.eq.s32.totalorder %s24, 1
      %p41 = por %p39, %p40
      %p42 = scmp.ne.s32.totalorder %s34, %s37
      %p43 = scmp.eq.s32.totalorder %s24, 0
      %p44 = por %p42, %p43
      %p45 = scmp.ne.s32.totalorder %s34, %s37
      %p46 = scmp.eq.s32.totalorder %s29, 1
      %p47 = por %p45, %p46
      %p48 = scmp.ne.s32.totalorder %s37, %s38
      %p49 = scmp.eq.s32.totalorder %s29, 0
      %p50 = por %p48, %p49
      %p51 = scmp.ne.s32.totalorder %s37, %s38
      %p52 = scmp.eq.s32.totalorder %s30, 1
      %p53 = por %p51, %p52
      %p55 = scmp.ne.s32.totalorder %s38, %s54
      %p56 = scmp.eq.s32.totalorder %s30, 0
      %p57 = por %p55, %p56
      %s59 = sadd.s32 %s58, 1
      %p62 = scmp.eq.s32.totalorder %s24, 1
      %p63 = scmp.ne.s32.totalorder %s58, %s60
      %p64 = scmp.eq.s32.totalorder %s24, 0
      %p65 = por %p63, %p64
      %p66 = scmp.ne.s32.totalorder %s58, %s60
      %p67 = scmp.eq.s32.totalorder %s29, 1
      %p68 = por %p66, %p67
      %p69 = scmp.ne.s32.totalorder %s60, %s61
      %p70 = scmp.eq.s32.totalorder %s29, 0
      %p71 = por %p69, %p70
      %p72 = scmp.ne.s32.totalorder %s60, %s61
      %p73 = scmp.eq.s32.totalorder %s30, 1
      %p74 = por %p72, %p73
      %p76 = scmp.ne.s32.totalorder %s61, %s75
      %p77 = scmp.eq.s32.totalorder %s30, 0
      %p78 = por %p76, %p77
      %s80 = sadd.s32 %s79, 1
      %p83 = scmp.eq.s32.totalorder %s24, 1
      %p84 = scmp.ne.s32.totalorder %s79, %s81
      %p85 = scmp.eq.s32.totalorder %s24, 0
      %p86 = por %p84, %p85
      %p87 = scmp.ne.s32.totalorder %s79, %s81
      %p88 = scmp.eq.s32.totalorder %s29, 1
      %p89 = por %p87, %p88
      %p90 = scmp.ne.s32.totalorder %s81, %s82
      %p91 = scmp.eq.s32.totalorder %s29, 0
      %p92 = por %p90, %p91
      %p93 = scmp.ne.s32.totalorder %s81, %s82
      %p94 = scmp.eq.s32.totalorder %s30, 1
      %p95 = por %p93, %p94
      %p97 = scmp.ne.s32.totalorder %s82, %s96
      %p98 = scmp.eq.s32.totalorder %s30, 0
      %p99 = por %p97, %p98
      %s101 = sadd.s32 %s100, 1
      %p104 = scmp.eq.s32.totalorder %s24, 1
      %p105 = scmp.ne.s32.totalorder %s100, %s102
      %p106 = scmp.eq.s32.totalorder %s24, 0
      %p107 = por %p105, %p106
      %p108 = scmp.ne.s32.totalorder %s100, %s102
      %p109 = scmp.eq.s32.totalorder %s29, 1
      %p110 = por %p108, %p109
      %p111 = scmp.ne.s32.totalorder %s102, %s103
      %p112 = scmp.eq.s32.totalorder %s29, 0
      %p113 = por %p111, %p112
      %p114 = scmp.ne.s32.totalorder %s102, %s103
      %p115 = scmp.eq.s32.totalorder %s30, 1
      %p116 = por %p114, %p115
      %p118 = scmp.ne.s32.totalorder %s103, %s117
      %p119 = scmp.eq.s32.totalorder %s30, 0
      %p120 = por %p118, %p119
      %s122 = sadd.s32 %s121, 1
      %p125 = scmp.eq.s32.totalorder %s24, 1
      %p126 = scmp.ne.s32.totalorder %s121, %s123
      %p127 = scmp.eq.s32.totalorder %s24, 0
      %p128 = por %p126, %p127
      %p129 = scmp.ne.s32.totalorder %s121, %s123
      %p130 = scmp.eq.s32.totalorder %s29, 1
      %p131 = por %p129, %p130
      %p132 = scmp.ne.s32.totalorder %s123, %s124
      %p133 = scmp.eq.s32.totalorder %s29, 0
      %p134 = por %p132, %p133
      %p135 = scmp.ne.s32.totalorder %s123, %s124
      %p136 = scmp.eq.s32.totalorder %s30, 1
      %p137 = por %p135, %p136
      %p139 = scmp.ne.s32.totalorder %s124, %s138
      %p140 = scmp.eq.s32.totalorder %s30, 0
      %p141 = por %p139, %p140
      %s143 = sadd.s32 %s142, 1
      %p146 = scmp.eq.s32.totalorder %s24, 1
      %p147 = scmp.ne.s32.totalorder %s142, %s144
      %p148 = scmp.eq.s32.totalorder %s24, 0
      %p149 = por %p147, %p148
      %p150 = scmp.ne.s32.totalorder %s142, %s144
      %p151 = scmp.eq.s32.totalorder %s29, 1
      %p152 = por %p150, %p151
      %p153 = scmp.ne.s32.totalorder %s144, %s145
      %p154 = scmp.eq.s32.totalorder %s29, 0
      %p155 = por %p153, %p154
      %p156 = scmp.ne.s32.totalorder %s144, %s145
      %p157 = scmp.eq.s32.totalorder %s30, 1
      %p158 = por %p156, %p157
      %p160 = scmp.ne.s32.totalorder %s145, %s159
      %p161 = scmp.eq.s32.totalorder %s30, 0
      %p162 = por %p160, %p161
      %s164 = sadd.s32 %s163, 1
      %p167 = scmp.eq.s32.totalorder %s24, 1
      %p168 = scmp.ne.s32.totalorder %s163, %s165
      %p169 = scmp.eq.s32.totalorder %s24, 0
      %p170 = por %p168, %p169
      %p171 = scmp.ne.s32.totalorder %s163, %s165
      %p172 = scmp.eq.s32.totalorder %s29, 1
      %p173 = por %p171, %p172
      %p174 = scmp.ne.s32.totalorder %s165, %s166
      %p175 = scmp.eq.s32.totalorder %s29, 0
      %p176 = por %p174, %p175
      %p177 = scmp.ne.s32.totalorder %s165, %s166
      %p178 = scmp.eq.s32.totalorder %s30, 1
      %p179 = por %p177, %p178
      %p181 = scmp.ne.s32.totalorder %s166, %s180
      %p182 = scmp.eq.s32.totalorder %s30, 0
      %p183 = por %p181, %p182
      %s185 = sadd.s32 %s184, 1
      %p188 = scmp.eq.s32.totalorder %s24, 1
      %p189 = scmp.ne.s32.totalorder %s184, %s186
      %p190 = scmp.eq.s32.totalorder %s24, 0
      %p191 = por %p189, %p190
      %p192 = scmp.ne.s32.totalorder %s184, %s186
      %p193 = scmp.eq.s32.totalorder %s29, 1
      %p194 = por %p192, %p193
      %p195 = scmp.ne.s32.totalorder %s186, %s187
      %p196 = scmp.eq.s32.totalorder %s29, 0
      %p197 = por %p195, %p196
      %p198 = scmp.ne.s32.totalorder %s186, %s187
      %p199 = scmp.eq.s32.totalorder %s30, 1
      %p200 = por %p198, %p199
      %p202 = scmp.ne.s32.totalorder %s187, %s201
      %p203 = scmp.eq.s32.totalorder %s30, 0
      %p204 = por %p202, %p203
      %s206 = sadd.s32 %s205, 1
      %p209 = scmp.eq.s32.totalorder %s24, 1
      %p210 = scmp.ne.s32.totalorder %s205, %s207
      %p211 = scmp.eq.s32.totalorder %s24, 0
      %p212 = por %p210, %p211
      %p213 = scmp.ne.s32.totalorder %s205, %s207
      %p214 = scmp.eq.s32.totalorder %s29, 1
      %p215 = por %p213, %p214
      %p216 = scmp.ne.s32.totalorder %s207, %s208
      %p217 = scmp.eq.s32.totalorder %s29, 0
      %p218 = por %p216, %p217
      %p219 = scmp.ne.s32.totalorder %s207, %s208
      %p220 = scmp.eq.s32.totalorder %s30, 1
      %p221 = por %p219, %p220
      %p223 = scmp.ne.s32.totalorder %s208, %s222
      %p224 = scmp.eq.s32.totalorder %s30, 0
      %p225 = por %p223, %p224
      %s227 = sadd.s32 %s226, 1
      %p230 = scmp.eq.s32.totalorder %s24, 1
      %p231 = scmp.ne.s32.totalorder %s226, %s228
      %p232 = scmp.eq.s32.totalorder %s24, 0
      %p233 = por %p231, %p232
      %p234 = scmp.ne.s32.totalorder %s226, %s228
      %p235 = scmp.eq.s32.totalorder %s29, 1
      %p236 = por %p234, %p235
      %p237 = scmp.ne.s32.totalorder %s228, %s229
      %p238 = scmp.eq.s32.totalorder %s29, 0
      %p239 = por %p237, %p238
      %p240 = scmp.ne.s32.totalorder %s228, %s229
      %p241 = scmp.eq.s32.totalorder %s30, 1
      %p242 = por %p240, %p241
      %p244 = scmp.ne.s32.totalorder %s229, %s243
      %p245 = scmp.eq.s32.totalorder %s30, 0
      %p246 = por %p244, %p245
      %s247 = ssub.s32 %s24, %s31
      %p248 = scmp.eq.s32.totalorder %s247, 0
      %s250 = sadd.s32 %s249, 1
      %s251 = scalar_select %p248, %s249, %s250
      %p254 = pneg %p248
      %p255 = scmp.eq.s32.totalorder %s24, 1
      %p256 = por %p254, %p255
      %p257 = scmp.ne.s32.totalorder %s249, %s252
      %p258 = scmp.eq.s32.totalorder %s24, 0
      %p259 = por %p257, %p258
      %p260 = scmp.ne.s32.totalorder %s249, %s252
      %p261 = scmp.eq.s32.totalorder %s29, 1
      %p262 = por %p260, %p261
      %p263 = scmp.ne.s32.totalorder %s252, %s253
      %p264 = scmp.eq.s32.totalorder %s29, 0
      %p265 = por %p263, %p264
      %p266 = scmp.ne.s32.totalorder %s252, %s253
      %p267 = scmp.eq.s32.totalorder %s30, 1
      %p268 = por %p266, %p267
      %p270 = scmp.ne.s32.totalorder %s253, %s269
      %p271 = scmp.eq.s32.totalorder %s30, 0
      %p272 = por %p270, %p271
      %s273 = ssub.s32 %s24, %s31
      %p274 = scmp.eq.s32.totalorder %s273, 0
      %s276 = sadd.s32 %s275, 1
      %s277 = scalar_select %p274, %s275, %s276
      %p280 = pneg %p274
      %p281 = scmp.eq.s32.totalorder %s24, 1
      %p282 = por %p280, %p281
      %p283 = scmp.ne.s32.totalorder %s275, %s278
      %p284 = scmp.eq.s32.totalorder %s24, 0
      %p285 = por %p283, %p284
      %p286 = scmp.ne.s32.totalorder %s275, %s278
      %p287 = scmp.eq.s32.totalorder %s29, 1
      %p288 = por %p286, %p287
      %p289 = scmp.ne.s32.totalorder %s278, %s279
      %p290 = scmp.eq.s32.totalorder %s29, 0
      %p291 = por %p289, %p290
      %p292 = scmp.ne.s32.totalorder %s278, %s279
      %p293 = scmp.eq.s32.totalorder %s30, 1
      %p294 = por %p292, %p293
      %p296 = scmp.ne.s32.totalorder %s279, %s295
      %p297 = scmp.eq.s32.totalorder %s30, 0
      %p298 = por %p296, %p297
      %p299 = scmp.le.s32.totalorder 1, %s24
      %p300 = scmp.lt.s32.totalorder %s24, 3
      %p301 = pnand %p299, %p300
      %p302 = pneg %p301
      // Predicated region
      $region9: #{tpu_custom_call.1} parent=5 // pred_check
        _
      $region10: #{tpu_custom_call.1} parent=5 // pred_check_branch
        %304 = sbr.rel (%p301) target = $region12
      $region11: #{tpu_custom_call.1} parent=5 // pred_region
        %s305 = ssub.s32 %s24, 1
        // Predicated region
        $region13: #{tpu_custom_call.1} parent=11 // pred_check
          %p306 = pneg %p71
        $region14: #{tpu_custom_call.1} parent=11 // pred_check_branch
          %308 = sbr.rel (%p306) target = $region16
        $region15: #{tpu_custom_call.1} parent=11 // pred_region
          _
        $region16: #{tpu_custom_call.1} parent=11 // pred_fallthru
          _
        // Predicated region
        $region17: #{tpu_custom_call.1} parent=11 // pred_check
          %p309 = pneg %p92
        $region18: #{tpu_custom_call.1} parent=11 // pred_check_branch
          %311 = sbr.rel (%p309) target = $region20
        $region19: #{tpu_custom_call.1} parent=11 // pred_region
          _
        $region20: #{tpu_custom_call.1} parent=11 // pred_fallthru
          _
        // Predicated region
        $region21: #{tpu_custom_call.1} parent=11 // pred_check
          %p312 = pneg %p113
        $region22: #{tpu_custom_call.1} parent=11 // pred_check_branch
          %314 = sbr.rel (%p312) target = $region24
        $region23: #{tpu_custom_call.1} parent=11 // pred_region
          _
        $region24: #{tpu_custom_call.1} parent=11 // pred_fallthru
          _
        // Predicated region
        $region25: #{tpu_custom_call.1} parent=11 // pred_check
          %p315 = pneg %p134
        $region26: #{tpu_custom_call.1} parent=11 // pred_check_branch
          %317 = sbr.rel (%p315) target = $region28
        $region27: #{tpu_custom_call.1} parent=11 // pred_region
          _
        $region28: #{tpu_custom_call.1} parent=11 // pred_fallthru
          _
        // Predicated region
        $region29: #{tpu_custom_call.1} parent=11 // pred_check
          %p318 = pneg %p155
        $region30: #{tpu_custom_call.1} parent=11 // pred_check_branch
          %320 = sbr.rel (%p318) target = $region32
        $region31: #{tpu_custom_call.1} parent=11 // pred_region
          _
        $region32: #{tpu_custom_call.1} parent=11 // pred_fallthru
          _
        // Predicated region
        $region33: #{tpu_custom_call.1} parent=11 // pred_check
          %p321 = pneg %p176
        $region34: #{tpu_custom_call.1} parent=11 // pred_check_branch
          %323 = sbr.rel (%p321) target = $region36
        $region35: #{tpu_custom_call.1} parent=11 // pred_region
          _
        $region36: #{tpu_custom_call.1} parent=11 // pred_fallthru
          _
        // Predicated region
        $region37: #{tpu_custom_call.1} parent=11 // pred_check
          %p324 = pneg %p197
        $region38: #{tpu_custom_call.1} parent=11 // pred_check_branch
          %326 = sbr.rel (%p324) target = $region40
        $region39: #{tpu_custom_call.1} parent=11 // pred_region
          _
        $region40: #{tpu_custom_call.1} parent=11 // pred_fallthru
          _
        // Predicated region
        $region41: #{tpu_custom_call.1} parent=11 // pred_check
          %p327 = pneg %p218
        $region42: #{tpu_custom_call.1} parent=11 // pred_check_branch
          %329 = sbr.rel (%p327) target = $region44
        $region43: #{tpu_custom_call.1} parent=11 // pred_region
          _
        $region44: #{tpu_custom_call.1} parent=11 // pred_fallthru
          _
        // Predicated region
        $region45: #{tpu_custom_call.1} parent=11 // pred_check
          %p330 = pneg %p239
        $region46: #{tpu_custom_call.1} parent=11 // pred_check_branch
          %332 = sbr.rel (%p330) target = $region48
        $region47: #{tpu_custom_call.1} parent=11 // pred_region
          _
        $region48: #{tpu_custom_call.1} parent=11 // pred_fallthru
          _
      $region12: #{tpu_custom_call.1} parent=5 // pred_fallthru
        _
      %p333 = scmp.lt.s32.totalorder %s24, 2
      // Predicated region
      $region49: #{tpu_custom_call.1} parent=5 // pred_check
        %p334 = pneg %p333
      $region50: #{tpu_custom_call.1} parent=5 // pred_check_branch
        %336 = sbr.rel (%p334) target = $region52
      $region51: #{tpu_custom_call.1} parent=5 // pred_region
        // Predicated region
        $region53: #{tpu_custom_call.1} parent=51 // pred_check
          %p337 = pneg %p44
        $region54: #{tpu_custom_call.1} parent=51 // pred_check_branch
          %339 = sbr.rel (%p337) target = $region56
        $region55: #{tpu_custom_call.1} parent=51 // pred_region
          %p340 = scmp.lt.s32.totalorder %s24, 1
          %s341 = scalar_select %p340, %s24, 1
          %s342 = smul.addr %s341, 2
          %s343 = smul.addr %s342, 8
          %s344 = scalar_lea.vmem %s0, %s343
        $region56: #{tpu_custom_call.1} parent=51 // pred_fallthru
          _
      $region52: #{tpu_custom_call.1} parent=5 // pred_fallthru
        _
      %p345 = scmp.le.s32.totalorder 1, %s24
      %p346 = scmp.lt.s32.totalorder %s24, 3
      %p347 = pnand %p345, %p346
      %p348 = pneg %p347
      // Predicated region
      $region57: #{tpu_custom_call.1} parent=5 // pred_check
        _
      $region58: #{tpu_custom_call.1} parent=5 // pred_check_branch
        %350 = sbr.rel (%p347) target = $region60
      $region59: #{tpu_custom_call.1} parent=5 // pred_region
        %s351 = ssub.s32 %s24, 1
        %p352 = scmp.lt.s32.totalorder %s29, 1
        %s353 = scalar_select %p352, %s29, 1
        %s354 = smul.addr %s353, 2
        %s355 = smul.addr %s354, 8
        %s356 = scalar_lea.vmem %s0, %s355
        %p357 = pneg %p50
        %p358 = pneg %p47
        %p359 = pneg %p71
        %p360 = pneg %p68
        %p361 = pneg %p92
        %p362 = pneg %p89
        %p363 = pneg %p113
        %p364 = pneg %p110
        %p365 = pneg %p134
        %p366 = pneg %p131
        %p367 = pneg %p155
        %p368 = pneg %p152
        %p369 = pneg %p176
        %p370 = pneg %p173
        %p371 = pneg %p197
        %p372 = pneg %p194
        %p373 = pneg %p218
        %p374 = pneg %p215
        %p375 = pneg %p239
        %p376 = pneg %p236
        %p377 = pneg %p265
        %p378 = pneg %p262
        %s379 = sand.u32 %s252, 1
        %s380 = scalar_lea.sflag [#allocation4], %s379
        %s381 = sand.u32 %s252, 1
        %s382 = smul.addr %s381, 16
        %s383 = scalar_lea.vmem [#allocation3], %s382
        %p384 = pneg %p291
        %p385 = pneg %p288
        %s386 = sand.u32 %s278, 1
        %s387 = scalar_lea.sflag [#allocation6], %s386
        %s388 = sand.u32 %s278, 1
        %s389 = smul.addr %s388, 128
        %s390 = scalar_lea.vmem [#allocation5], %s389
        %p391 = scmp.lt.s32.totalorder %s29, 1
        %s392 = scalar_select %p391, %s29, 1
        %s393 = smul.addr %s392, 2
        %s394 = smul.addr %s393, 8
        %s395 = scalar_lea.vmem %s0, %s394
        %v396 = vld [vmem:[%s395] sm:$0xff]
        %v397 = vld [vmem:[%s395 + $0x8] sm:$0xff]
        %v398 = vld [vmem:[%s2] sm:$0x1]
        %v399 = vld [vmem:[%s3] sm:$0x1]
        %vm400 = vcmask 261120
        %v401 = vsel %vm400, %v396, 0.0
        %402 = vadd.xlane.f32.xlu0 %v401
        %v403 = vpop.xlane.xlu0 %402
        %v404 = vsel %vm400, %v397, 0.0
        %405 = vadd.xlane.f32.xlu0 %v404
        %v406 = vpop.xlane.xlu0 %405
        %v407 = vrcp.pop 32.0
        %v408 = vmul.f32 %v403, %v407
        %v409 = vmul.f32 %v406, %v407
        %v410 = vsub.f32 %v396, %v408
        %v411 = vsub.f32 %v397, %v409
        %v412 = vmul.f32 %v410, %v410
        %v413 = vmul.f32 %v411, %v411
        %v414 = vsel %vm400, %v412, 0.0
        %415 = vadd.xlane.f32.xlu0 %v414
        %v416 = vpop.xlane.xlu0 %415
        %v417 = vsel %vm400, %v413, 0.0
        %418 = vadd.xlane.f32.xlu0 %v417
        %v419 = vpop.xlane.xlu0 %418
        %v420 = vmul.f32 %v416, %v407
        %v421 = vmul.f32 %v419, %v407
        %v422 = vadd.f32 %v420, 1e-05
        %v423 = vadd.f32 %v421, 1e-05
        %v424 = vrsqrt.pop %v422
        %v425 = vrsqrt.pop %v423
        %v426 = vmul.f32 %v410, %v424
        %v427 = vmul.f32 %v411, %v425
        %v429 = vlaneseq
        %v430 = vshrl.u32 %v429, 7
        %v431 = vsub.s32 0, %v430
        %v432 = vrot.slane %v398, %v431
        %v434 = vmul.f32 %v426, %v432
        %v435 = vmul.f32 %v427, %v432
        %v437 = vlaneseq
        %v438 = vshrl.u32 %v437, 7
        %v439 = vsub.s32 0, %v438
        %v440 = vrot.slane %v399, %v439
        %v442 = vadd.f32 %v434, %v440
        %v443 = vadd.f32 %v435, %v440
        %v444 = vld [vmem:[%s1] sm:$0xff]
        %v445 = vld [vmem:[%s1 + $0x8] sm:$0xff]
        %v446 = vld [vmem:[%s1 + $0x10] sm:$0xff]
        %v447 = vld [vmem:[%s1 + $0x18] sm:$0xff]
        %v449 = vsel %vm400, %v442, 0
        %v452 = vsel %vm400, %v443, 0
        %454 = vmatprep.subr.mxu0 0.0
        %455 = vmatpush1.msra.mxu0 %v444
        %456 = vmatprep.subr.mxu0 0.0
        %457 = vmatpush1.msra.mxu0 %v445
        %458 = vmatprep.subr.mxu0 0.0
        %459 = vmatpush1.msra.mxu0 %v446
        %460 = vmatprep.subr.mxu0 0.0
        %461 = vmatpush1.msra.mxu0 %v447
        %462 = vmatprep.subr.mxu0 0.0
        %463 = vmatpush1.msra.mxu0 0.0
        %464 = vmatprep.subr.mxu0 0.0
        %465 = vmatpush1.msra.mxu0 0.0
        %466 = vmatprep.subr.mxu0 0.0
        %467 = vmatpush1.msra.mxu0 0.0
        %468 = vmatprep.subr.mxu0 0.0
        %469 = vmatpush1.msra.mxu0 0.0
        %470 = vmatprep.subr.mxu0 0.0
        %471 = vmatpush1.msra.mxu0 0.0
        %472 = vmatprep.subr.mxu0 0.0
        %473 = vmatpush1.msra.mxu0 0.0
        %474 = vmatprep.subr.mxu0 0.0
        %475 = vmatpush1.msra.mxu0 0.0
        %476 = vmatprep.subr.mxu0 0.0
        %477 = vmatpush1.msra.mxu0 0.0
        %478 = vmatprep.subr.mxu0 0.0
        %479 = vmatpush1.msra.mxu0 0.0
        %480 = vmatprep.subr.mxu0 0.0
        %481 = vmatpush1.msra.mxu0 0.0
        %482 = vmatprep.subr.mxu0 0.0
        %483 = vmatpush1.msra.mxu0 0.0
        %484 = vmatprep.subr.mxu0 0.0
        %485 = vmatpush1.msra.mxu0 0.0
        %486 = vmatprep.subr.mxu0 0.0
        %487 = vmatpush1.msra.mxu0 0.0
        %488 = vmatprep.subr.mxu0 0.0
        %489 = vmatpush1.msra.mxu0 0.0
        %490 = vmatprep.subr.mxu0 0.0
        %491 = vmatpush1.msra.mxu0 0.0
        %492 = vmatprep.subr.mxu0 0.0
        %493 = vmatpush1.msra.mxu0 0.0
        %494 = vmatprep.subr.mxu0 0.0
        %495 = vmatpush1.msra.mxu0 0.0
        %496 = vmatprep.subr.mxu0 0.0
        %497 = vmatpush1.msra.mxu0 0.0
        %498 = vmatprep.subr.mxu0 0.0
        %499 = vmatpush1.msra.mxu0 0.0
        %500 = vmatprep.subr.mxu0 0.0
        %501 = vmatpush1.msra.mxu0 0.0
        %502 = vmatprep.subr.mxu0 0.0
        %503 = vmatpush1.msra.mxu0 0.0
        %504 = vmatprep.subr.mxu0 0.0
        %505 = vmatpush1.msra.mxu0 0.0
        %506 = vmatprep.subr.mxu0 0.0
        %507 = vmatpush1.msra.mxu0 0.0
        %508 = vmatprep.subr.mxu0 0.0
        %509 = vmatpush1.msra.mxu0 0.0
        %510 = vmatprep.subr.mxu0 0.0
        %511 = vmatpush1.msra.mxu0 0.0
        %512 = vmatprep.subr.mxu0 0.0
        %513 = vmatpush1.msra.mxu0 0.0
        %514 = vmatprep.subr.mxu0 0.0
        %515 = vmatpush1.msra.mxu0 0.0
        %516 = vmatprep.subr.mxu0 0.0
        %517 = vmatpush1.msra.mxu0 0.0
        %518 = vmatprep.mubr.f32.mxu0 0.0
        %519 = vmatmul.mubr.f32.gmra.mrb[0].mxu0 %v449
        %v520 = vpop.f32.mrb[0].mxu0
        %v521 = vadd.f32 0.0, %v520
        %v522 = vpop.f32.mrb[0].mxu0
        %523 = vmatprep.mubr.f32.mxu0 0.0
        %524 = vmatmul.mubr.f32.gmra.mrb[0].mxu0 %v452
        %v525 = vpop.f32.mrb[0].mxu0
        %v526 = vadd.f32 0.0, %v525
        %v527 = vpop.f32.mrb[0].mxu0
        %528 = vdwg.mxu0
        %vm529 = vcmask 31744
        %v531 = vsel %vm529, %v521, 0
        %v534 = vsel %vm529, %v526, 0
        %536 = vmatprep.subr.mxu0 0.0
        %537 = vmatpush1.xpose.msra.mxu0 %v531
        %538 = vmatprep.subr.mxu0 0.0
        %539 = vmatpush1.xpose.msra.mxu0 %v534
        %540 = vmatprep.subr.mxu0 0.0
        %541 = vmatpush1.xpose.msra.mxu0 0.0
        %542 = vmatprep.subr.mxu0 0.0
        %543 = vmatpush1.xpose.msra.mxu0 0.0
        %544 = vmatprep.subr.mxu0 0.0
        %545 = vmatpush1.xpose.msra.mxu0 0.0
        %546 = vmatprep.subr.mxu0 0.0
        %547 = vmatpush1.xpose.msra.mxu0 0.0
        %548 = vmatprep.subr.mxu0 0.0
        %549 = vmatpush1.xpose.msra.mxu0 0.0
        %550 = vmatprep.subr.mxu0 0.0
        %551 = vmatpush1.xpose.msra.mxu0 0.0
        %552 = vmatprep.subr.mxu0 0.0
        %553 = vmatpush1.xpose.msra.mxu0 0.0
        %554 = vmatprep.subr.mxu0 0.0
        %555 = vmatpush1.xpose.msra.mxu0 0.0
        %556 = vmatprep.subr.mxu0 0.0
        %557 = vmatpush1.xpose.msra.mxu0 0.0
        %558 = vmatprep.subr.mxu0 0.0
        %559 = vmatpush1.xpose.msra.mxu0 0.0
        %560 = vmatprep.subr.mxu0 0.0
        %561 = vmatpush1.xpose.msra.mxu0 0.0
        %562 = vmatprep.subr.mxu0 0.0
        %563 = vmatpush1.xpose.msra.mxu0 0.0
        %564 = vmatprep.subr.mxu0 0.0
        %565 = vmatpush1.xpose.msra.mxu0 0.0
        %566 = vmatprep.subr.mxu0 0.0
        %567 = vmatpush1.xpose.msra.mxu0 0.0
        %568 = vmatprep.subr.mxu0 0.0
        %569 = vmatpush1.xpose.msra.mxu0 0.0
        %570 = vmatprep.subr.mxu0 0.0
        %571 = vmatpush1.xpose.msra.mxu0 0.0
        %572 = vmatprep.subr.mxu0 0.0
        %573 = vmatpush1.xpose.msra.mxu0 0.0
        %574 = vmatprep.subr.mxu0 0.0
        %575 = vmatpush1.xpose.msra.mxu0 0.0
        %576 = vmatprep.subr.mxu0 0.0
        %577 = vmatpush1.xpose.msra.mxu0 0.0
        %578 = vmatprep.subr.mxu0 0.0
        %579 = vmatpush1.xpose.msra.mxu0 0.0
        %580 = vmatprep.subr.mxu0 0.0
        %581 = vmatpush1.xpose.msra.mxu0 0.0
        %582 = vmatprep.subr.mxu0 0.0
        %583 = vmatpush1.xpose.msra.mxu0 0.0
        %584 = vmatprep.subr.mxu0 0.0
        %585 = vmatpush1.xpose.msra.mxu0 0.0
        %586 = vmatprep.subr.mxu0 0.0
        %587 = vmatpush1.xpose.msra.mxu0 0.0
        %588 = vmatprep.subr.mxu0 0.0
        %589 = vmatpush1.xpose.msra.mxu0 0.0
        %590 = vmatprep.subr.mxu0 0.0
        %591 = vmatpush1.xpose.msra.mxu0 0.0
        %592 = vmatprep.subr.mxu0 0.0
        %593 = vmatpush1.xpose.msra.mxu0 0.0
        %594 = vmatprep.subr.mxu0 0.0
        %595 = vmatpush1.xpose.msra.mxu0 0.0
        %596 = vmatprep.subr.mxu0 0.0
        %597 = vmatpush1.xpose.msra.mxu0 0.0
        %598 = vmatprep.subr.mxu0 0.0
        %599 = vmatpush1.xpose.msra.mxu0 0.0
        %600 = vmatprep.mubr.f32.mxu0 0.0
        %601 = vmatmul.mubr.f32.gmra.mrb[0].mxu0 %v531
        %v602 = vpop.f32.mrb[0].mxu0
        %v603 = vadd.f32 0.0, %v602
        %v604 = vpop.f32.mrb[0].mxu0
        %605 = vmatprep.mubr.f32.mxu0 0.0
        %606 = vmatmul.mubr.f32.gmra.mrb[0].mxu0 %v534
        %v607 = vpop.f32.mrb[0].mxu0
        %v608 = vadd.f32 0.0, %v607
        %v609 = vpop.f32.mrb[0].mxu0
        %610 = vdwg.mxu0
        %v611 = vmul.f32 %v603, 0.35355338
        %v612 = vmul.f32 %v608, 0.35355338
        %vm613 = vcmask 130048
        %v614 = vsel %vm613, %v611, -inf
        %615 = vmax.xlane.f32.xlu0 %v614
        %v616 = vpop.xlane.xlu0 %615
        %v617 = vsel %vm613, %v612, -inf
        %618 = vmax.xlane.f32.xlu0 %v617
        %v619 = vpop.xlane.xlu0 %618
        %v620 = vsub.f32 %v611, %v616
        %v621 = vsub.f32 %v612, %v619
        %v622 = vmul.f32 %v620, 1.442695
        %v623 = vpow.pop %v622
        %v624 = vmul.f32 %v621, 1.442695
        %v625 = vpow.pop %v624
        %v626 = vsel %vm613, %v623, 0.0
        %627 = vadd.xlane.f32.xlu0 %v626
        %v628 = vpop.xlane.xlu0 %627
        %v629 = vsel %vm613, %v625, 0.0
        %630 = vadd.xlane.f32.xlu0 %v629
        %v631 = vpop.xlane.xlu0 %630
        %v632 = vrcp.pop %v628
        %v633 = vmul.f32 %v623, %v632
        %v634 = vrcp.pop %v631
        %v635 = vmul.f32 %v625, %v634
        %636 = vst.msk [vmem:[%s390] sm:$0xff] %vm613, %v633
        %637 = vst.msk [vmem:[%s390 + $0x8] sm:$0xff] %vm613, %v635
        %v639 = vsel %vm613, %v633, 0
        %v642 = vsel %vm613, %v635, 0
        %644 = vmatprep.subr.mxu0 0.0
        %645 = vmatpush1.msra.mxu0 %v521
        %646 = vmatprep.subr.mxu0 0.0
        %647 = vmatpush1.msra.mxu0 %v526
        %648 = vmatprep.subr.mxu0 0.0
        %649 = vmatpush1.msra.mxu0 0.0
        %650 = vmatprep.subr.mxu0 0.0
        %651 = vmatpush1.msra.mxu0 0.0
        %652 = vmatprep.subr.mxu0 0.0
        %653 = vmatpush1.msra.mxu0 0.0
        %654 = vmatprep.subr.mxu0 0.0
        %655 = vmatpush1.msra.mxu0 0.0
        %656 = vmatprep.subr.mxu0 0.0
        %657 = vmatpush1.msra.mxu0 0.0
        %658 = vmatprep.subr.mxu0 0.0
        %659 = vmatpush1.msra.mxu0 0.0
        %660 = vmatprep.subr.mxu0 0.0
        %661 = vmatpush1.msra.mxu0 0.0
        %662 = vmatprep.subr.mxu0 0.0
        %663 = vmatpush1.msra.mxu0 0.0
        %664 = vmatprep.subr.mxu0 0.0
        %665 = vmatpush1.msra.mxu0 0.0
        %666 = vmatprep.subr.mxu0 0.0
        %667 = vmatpush1.msra.mxu0 0.0
        %668 = vmatprep.subr.mxu0 0.0
        %669 = vmatpush1.msra.mxu0 0.0
        %670 = vmatprep.subr.mxu0 0.0
        %671 = vmatpush1.msra.mxu0 0.0
        %672 = vmatprep.subr.mxu0 0.0
        %673 = vmatpush1.msra.mxu0 0.0
        %674 = vmatprep.subr.mxu0 0.0
        %675 = vmatpush1.msra.mxu0 0.0
        %676 = vmatprep.subr.mxu0 0.0
        %677 = vmatpush1.msra.mxu0 0.0
        %678 = vmatprep.subr.mxu0 0.0
        %679 = vmatpush1.msra.mxu0 0.0
        %680 = vmatprep.subr.mxu0 0.0
        %681 = vmatpush1.msra.mxu0 0.0
        %682 = vmatprep.subr.mxu0 0.0
        %683 = vmatpush1.msra.mxu0 0.0
        %684 = vmatprep.subr.mxu0 0.0
        %685 = vmatpush1.msra.mxu0 0.0
        %686 = vmatprep.subr.mxu0 0.0
        %687 = vmatpush1.msra.mxu0 0.0
        %688 = vmatprep.subr.mxu0 0.0
        %689 = vmatpush1.msra.mxu0 0.0
        %690 = vmatprep.subr.mxu0 0.0
        %691 = vmatpush1.msra.mxu0 0.0
        %692 = vmatprep.subr.mxu0 0.0
        %693 = vmatpush1.msra.mxu0 0.0
        %694 = vmatprep.subr.mxu0 0.0
        %695 = vmatpush1.msra.mxu0 0.0
        %696 = vmatprep.subr.mxu0 0.0
        %697 = vmatpush1.msra.mxu0 0.0
        %698 = vmatprep.subr.mxu0 0.0
        %699 = vmatpush1.msra.mxu0 0.0
        %700 = vmatprep.subr.mxu0 0.0
        %701 = vmatpush1.msra.mxu0 0.0
        %702 = vmatprep.subr.mxu0 0.0
        %703 = vmatpush1.msra.mxu0 0.0
        %704 = vmatprep.subr.mxu0 0.0
        %705 = vmatpush1.msra.mxu0 0.0
        %706 = vmatprep.subr.mxu0 0.0
        %707 = vmatpush1.msra.mxu0 0.0
        %708 = vmatprep.mubr.f32.mxu0 0.0
        %709 = vmatmul.mubr.f32.gmra.mrb[0].mxu0 %v639
        %v710 = vpop.f32.mrb[0].mxu0
        %v711 = vadd.f32 0.0, %v710
        %v712 = vpop.f32.mrb[0].mxu0
        %713 = vmatprep.mubr.f32.mxu0 0.0
        %714 = vmatmul.mubr.f32.gmra.mrb[0].mxu0 %v642
        %v715 = vpop.f32.mrb[0].mxu0
        %v716 = vadd.f32 0.0, %v715
        %v717 = vpop.f32.mrb[0].mxu0
        %718 = vdwg.mxu0
        %719 = vst.msk [vmem:[#allocation2] sm:$0xff] %vm529, %v711
        %720 = vst.msk [vmem:[#allocation2 + $0x8] sm:$0xff] %vm529, %v716
        %721 = vrot.lane.b32.xlu0 %v521, 124
        %v722 = vpop.permute.xlu0 %721
        %723 = vrot.lane.b32.xlu0 %v526, 124
        %v724 = vpop.permute.xlu0 %723
        %v725 = vsel %vm529, %v722, 0
        %v727 = vsel %vm529, %v724, 0
        %729 = vmatprep.subr.mxu0 0.0
        %730 = vmatpush1.xpose.msra.mxu0 %v725
        %731 = vmatprep.subr.mxu0 0.0
        %732 = vmatpush1.xpose.msra.mxu0 %v727
        %733 = vmatprep.subr.mxu0 0.0
        %734 = vmatpush1.xpose.msra.mxu0 0.0
        %735 = vmatprep.subr.mxu0 0.0
        %736 = vmatpush1.xpose.msra.mxu0 0.0
        %737 = vmatprep.subr.mxu0 0.0
        %738 = vmatpush1.xpose.msra.mxu0 0.0
        %739 = vmatprep.subr.mxu0 0.0
        %740 = vmatpush1.xpose.msra.mxu0 0.0
        %741 = vmatprep.subr.mxu0 0.0
        %742 = vmatpush1.xpose.msra.mxu0 0.0
        %743 = vmatprep.subr.mxu0 0.0
        %744 = vmatpush1.xpose.msra.mxu0 0.0
        %745 = vmatprep.subr.mxu0 0.0
        %746 = vmatpush1.xpose.msra.mxu0 0.0
        %747 = vmatprep.subr.mxu0 0.0
        %748 = vmatpush1.xpose.msra.mxu0 0.0
        %749 = vmatprep.subr.mxu0 0.0
        %750 = vmatpush1.xpose.msra.mxu0 0.0
        %751 = vmatprep.subr.mxu0 0.0
        %752 = vmatpush1.xpose.msra.mxu0 0.0
        %753 = vmatprep.subr.mxu0 0.0
        %754 = vmatpush1.xpose.msra.mxu0 0.0
        %755 = vmatprep.subr.mxu0 0.0
        %756 = vmatpush1.xpose.msra.mxu0 0.0
        %757 = vmatprep.subr.mxu0 0.0
        %758 = vmatpush1.xpose.msra.mxu0 0.0
        %759 = vmatprep.subr.mxu0 0.0
        %760 = vmatpush1.xpose.msra.mxu0 0.0
        %761 = vmatprep.subr.mxu0 0.0
        %762 = vmatpush1.xpose.msra.mxu0 0.0
        %763 = vmatprep.subr.mxu0 0.0
        %764 = vmatpush1.xpose.msra.mxu0 0.0
        %765 = vmatprep.subr.mxu0 0.0
        %766 = vmatpush1.xpose.msra.mxu0 0.0
        %767 = vmatprep.subr.mxu0 0.0
        %768 = vmatpush1.xpose.msra.mxu0 0.0
        %769 = vmatprep.subr.mxu0 0.0
        %770 = vmatpush1.xpose.msra.mxu0 0.0
        %771 = vmatprep.subr.mxu0 0.0
        %772 = vmatpush1.xpose.msra.mxu0 0.0
        %773 = vmatprep.subr.mxu0 0.0
        %774 = vmatpush1.xpose.msra.mxu0 0.0
        %775 = vmatprep.subr.mxu0 0.0
        %776 = vmatpush1.xpose.msra.mxu0 0.0
        %777 = vmatprep.subr.mxu0 0.0
        %778 = vmatpush1.xpose.msra.mxu0 0.0
        %779 = vmatprep.subr.mxu0 0.0
        %780 = vmatpush1.xpose.msra.mxu0 0.0
        %781 = vmatprep.subr.mxu0 0.0
        %782 = vmatpush1.xpose.msra.mxu0 0.0
        %783 = vmatprep.subr.mxu0 0.0
        %784 = vmatpush1.xpose.msra.mxu0 0.0
        %785 = vmatprep.subr.mxu0 0.0
        %786 = vmatpush1.xpose.msra.mxu0 0.0
        %787 = vmatprep.subr.mxu0 0.0
        %788 = vmatpush1.xpose.msra.mxu0 0.0
        %789 = vmatprep.subr.mxu0 0.0
        %790 = vmatpush1.xpose.msra.mxu0 0.0
        %791 = vmatprep.subr.mxu0 0.0
        %792 = vmatpush1.xpose.msra.mxu0 0.0
        %793 = vmatprep.mubr.f32.mxu0 0.0
        %794 = vmatmul.mubr.f32.gmra.mrb[0].mxu0 %v725
        %v795 = vpop.f32.mrb[0].mxu0
        %v796 = vadd.f32 0.0, %v795
        %v797 = vpop.f32.mrb[0].mxu0
        %798 = vmatprep.mubr.f32.mxu0 0.0
        %799 = vmatmul.mubr.f32.gmra.mrb[0].mxu0 %v727
        %v800 = vpop.f32.mrb[0].mxu0
        %v801 = vadd.f32 0.0, %v800
        %v802 = vpop.f32.mrb[0].mxu0
        %803 = vdwg.mxu0
        %v804 = vmul.f32 %v796, 0.35355338
        %v805 = vmul.f32 %v801, 0.35355338
        %v806 = vsel %vm613, %v804, -inf
        %807 = vmax.xlane.f32.xlu0 %v806
        %v808 = vpop.xlane.xlu0 %807
        %v809 = vsel %vm613, %v805, -inf
        %810 = vmax.xlane.f32.xlu0 %v809
        %v811 = vpop.xlane.xlu0 %810
        %v812 = vsub.f32 %v804, %v808
        %v813 = vsub.f32 %v805, %v811
        %v814 = vmul.f32 %v812, 1.442695
        %v815 = vpow.pop %v814
        %v816 = vmul.f32 %v813, 1.442695
        %v817 = vpow.pop %v816
        %v818 = vsel %vm613, %v815, 0.0
        %819 = vadd.xlane.f32.xlu0 %v818
        %v820 = vpop.xlane.xlu0 %819
        %v821 = vsel %vm613, %v817, 0.0
        %822 = vadd.xlane.f32.xlu0 %v821
        %v823 = vpop.xlane.xlu0 %822
        %v824 = vrcp.pop %v820
        %v825 = vmul.f32 %v815, %v824
        %v826 = vrcp.pop %v823
        %v827 = vmul.f32 %v817, %v826
        %s828 = scalar_lea.vmem %s390, 16 [#allocation5]
        %829 = vst.msk [vmem:[%s828] sm:$0xff] %vm613, %v825
        %830 = vst.msk [vmem:[%s828 + $0x8] sm:$0xff] %vm613, %v827
        %v834 = vsel %vm613, %v825, 0
        %v837 = vsel %vm613, %v827, 0
        %839 = vmatprep.subr.mxu0 0.0
        %840 = vmatpush1.msra.mxu0 %v722
        %841 = vmatprep.subr.mxu0 0.0
        %842 = vmatpush1.msra.mxu0 %v724
        %843 = vmatprep.subr.mxu0 0.0
        %844 = vmatpush1.msra.mxu0 0.0
        %845 = vmatprep.subr.mxu0 0.0
        %846 = vmatpush1.msra.mxu0 0.0
        %847 = vmatprep.subr.mxu0 0.0
        %848 = vmatpush1.msra.mxu0 0.0
        %849 = vmatprep.subr.mxu0 0.0
        %850 = vmatpush1.msra.mxu0 0.0
        %851 = vmatprep.subr.mxu0 0.0
        %852 = vmatpush1.msra.mxu0 0.0
        %853 = vmatprep.subr.mxu0 0.0
        %854 = vmatpush1.msra.mxu0 0.0
        %855 = vmatprep.subr.mxu0 0.0
        %856 = vmatpush1.msra.mxu0 0.0
        %857 = vmatprep.subr.mxu0 0.0
        %858 = vmatpush1.msra.mxu0 0.0
        %859 = vmatprep.subr.mxu0 0.0
        %860 = vmatpush1.msra.mxu0 0.0
        %861 = vmatprep.subr.mxu0 0.0
        %862 = vmatpush1.msra.mxu0 0.0
        %863 = vmatprep.subr.mxu0 0.0
        %864 = vmatpush1.msra.mxu0 0.0
        %865 = vmatprep.subr.mxu0 0.0
        %866 = vmatpush1.msra.mxu0 0.0
        %867 = vmatprep.subr.mxu0 0.0
        %868 = vmatpush1.msra.mxu0 0.0
        %869 = vmatprep.subr.mxu0 0.0
        %870 = vmatpush1.msra.mxu0 0.0
        %871 = vmatprep.subr.mxu0 0.0
        %872 = vmatpush1.msra.mxu0 0.0
        %873 = vmatprep.subr.mxu0 0.0
        %874 = vmatpush1.msra.mxu0 0.0
        %875 = vmatprep.subr.mxu0 0.0
        %876 = vmatpush1.msra.mxu0 0.0
        %877 = vmatprep.subr.mxu0 0.0
        %878 = vmatpush1.msra.mxu0 0.0
        %879 = vmatprep.subr.mxu0 0.0
        %880 = vmatpush1.msra.mxu0 0.0
        %881 = vmatprep.subr.mxu0 0.0
        %882 = vmatpush1.msra.mxu0 0.0
        %883 = vmatprep.subr.mxu0 0.0
        %884 = vmatpush1.msra.mxu0 0.0
        %885 = vmatprep.subr.mxu0 0.0
        %886 = vmatpush1.msra.mxu0 0.0
        %887 = vmatprep.subr.mxu0 0.0
        %888 = vmatpush1.msra.mxu0 0.0
        %889 = vmatprep.subr.mxu0 0.0
        %890 = vmatpush1.msra.mxu0 0.0
        %891 = vmatprep.subr.mxu0 0.0
        %892 = vmatpush1.msra.mxu0 0.0
        %893 = vmatprep.subr.mxu0 0.0
        %894 = vmatpush1.msra.mxu0 0.0
        %895 = vmatprep.subr.mxu0 0.0
        %896 = vmatpush1.msra.mxu0 0.0
        %897 = vmatprep.subr.mxu0 0.0
        %898 = vmatpush1.msra.mxu0 0.0
        %899 = vmatprep.subr.mxu0 0.0
        %900 = vmatpush1.msra.mxu0 0.0
        %901 = vmatprep.subr.mxu0 0.0
        %902 = vmatpush1.msra.mxu0 0.0
        %903 = vmatprep.mubr.f32.mxu0 0.0
        %904 = vmatmul.mubr.f32.gmra.mrb[0].mxu0 %v834
        %v905 = vpop.f32.mrb[0].mxu0
        %v906 = vadd.f32 0.0, %v905
        %v907 = vpop.f32.mrb[0].mxu0
        %908 = vmatprep.mubr.f32.mxu0 0.0
        %909 = vmatmul.mubr.f32.gmra.mrb[0].mxu0 %v837
        %v910 = vpop.f32.mrb[0].mxu0
        %v911 = vadd.f32 0.0, %v910
        %v912 = vpop.f32.mrb[0].mxu0
        %913 = vdwg.mxu0
        %916 = vrot.lane.b32.xlu0 %v906, 4
        %v917 = vpop.permute.xlu0 %916
        %918 = vrot.lane.b32.xlu0 %v911, 4
        %v919 = vpop.permute.xlu0 %918
        %vm922 = vcmask 64544
        %923 = vst.msk [vmem:[#allocation2] sm:$0xff] %vm922, %v917
        %924 = vst.msk [vmem:[#allocation2 + $0x8] sm:$0xff] %vm922, %v919
        %925 = vrot.lane.b32.xlu0 %v521, 120
        %v926 = vpop.permute.xlu0 %925
        %927 = vrot.lane.b32.xlu0 %v526, 120
        %v928 = vpop.permute.xlu0 %927
        %v929 = vsel %vm529, %v926, 0
        %v931 = vsel %vm529, %v928, 0
        %933 = vmatprep.subr.mxu0 0.0
        %934 = vmatpush1.xpose.msra.mxu0 %v929
        %935 = vmatprep.subr.mxu0 0.0
        %936 = vmatpush1.xpose.msra.mxu0 %v931
        %937 = vmatprep.subr.mxu0 0.0
        %938 = vmatpush1.xpose.msra.mxu0 0.0
        %939 = vmatprep.subr.mxu0 0.0
        %940 = vmatpush1.xpose.msra.mxu0 0.0
        %941 = vmatprep.subr.mxu0 0.0
        %942 = vmatpush1.xpose.msra.mxu0 0.0
        %943 = vmatprep.subr.mxu0 0.0
        %944 = vmatpush1.xpose.msra.mxu0 0.0
        %945 = vmatprep.subr.mxu0 0.0
        %946 = vmatpush1.xpose.msra.mxu0 0.0
        %947 = vmatprep.subr.mxu0 0.0
        %948 = vmatpush1.xpose.msra.mxu0 0.0
        %949 = vmatprep.subr.mxu0 0.0
        %950 = vmatpush1.xpose.msra.mxu0 0.0
        %951 = vmatprep.subr.mxu0 0.0
        %952 = vmatpush1.xpose.msra.mxu0 0.0
        %953 = vmatprep.subr.mxu0 0.0
        %954 = vmatpush1.xpose.msra.mxu0 0.0
        %955 = vmatprep.subr.mxu0 0.0
        %956 = vmatpush1.xpose.msra.mxu0 0.0
        %957 = vmatprep.subr.mxu0 0.0
        %958 = vmatpush1.xpose.msra.mxu0 0.0
        %959 = vmatprep.subr.mxu0 0.0
        %960 = vmatpush1.xpose.msra.mxu0 0.0
        %961 = vmatprep.subr.mxu0 0.0
        %962 = vmatpush1.xpose.msra.mxu0 0.0
        %963 = vmatprep.subr.mxu0 0.0
        %964 = vmatpush1.xpose.msra.mxu0 0.0
        %965 = vmatprep.subr.mxu0 0.0
        %966 = vmatpush1.xpose.msra.mxu0 0.0
        %967 = vmatprep.subr.mxu0 0.0
        %968 = vmatpush1.xpose.msra.mxu0 0.0
        %969 = vmatprep.subr.mxu0 0.0
        %970 = vmatpush1.xpose.msra.mxu0 0.0
        %971 = vmatprep.subr.mxu0 0.0
        %972 = vmatpush1.xpose.msra.mxu0 0.0
        %973 = vmatprep.subr.mxu0 0.0
        %974 = vmatpush1.xpose.msra.mxu0 0.0
        %975 = vmatprep.subr.mxu0 0.0
        %976 = vmatpush1.xpose.msra.mxu0 0.0
        %977 = vmatprep.subr.mxu0 0.0
        %978 = vmatpush1.xpose.msra.mxu0 0.0
        %979 = vmatprep.subr.mxu0 0.0
        %980 = vmatpush1.xpose.msra.mxu0 0.0
        %981 = vmatprep.subr.mxu0 0.0
        %982 = vmatpush1.xpose.msra.mxu0 0.0
        %983 = vmatprep.subr.mxu0 0.0
        %984 = vmatpush1.xpose.msra.mxu0 0.0
        %985 = vmatprep.subr.mxu0 0.0
        %986 = vmatpush1.xpose.msra.mxu0 0.0
        %987 = vmatprep.subr.mxu0 0.0
        %988 = vmatpush1.xpose.msra.mxu0 0.0
        %989 = vmatprep.subr.mxu0 0.0
        %990 = vmatpush1.xpose.msra.mxu0 0.0
        %991 = vmatprep.subr.mxu0 0.0
        %992 = vmatpush1.xpose.msra.mxu0 0.0
        %993 = vmatprep.subr.mxu0 0.0
        %994 = vmatpush1.xpose.msra.mxu0 0.0
        %995 = vmatprep.subr.mxu0 0.0
        %996 = vmatpush1.xpose.msra.mxu0 0.0
        %997 = vmatprep.mubr.f32.mxu0 0.0
        %998 = vmatmul.mubr.f32.gmra.mrb[0].mxu0 %v929
        %v999 = vpop.f32.mrb[0].mxu0
        %v1000 = vadd.f32 0.0, %v999
        %v1001 = vpop.f32.mrb[0].mxu0
        %1002 = vmatprep.mubr.f32.mxu0 0.0
        %1003 = vmatmul.mubr.f32.gmra.mrb[0].mxu0 %v931
        %v1004 = vpop.f32.mrb[0].mxu0
        %v1005 = vadd.f32 0.0, %v1004
        %v1006 = vpop.f32.mrb[0].mxu0
        %1007 = vdwg.mxu0
        %v1008 = vmul.f32 %v1000, 0.35355338
        %v1009 = vmul.f32 %v1005, 0.35355338
        %v1010 = vsel %vm613, %v1008, -inf
        %1011 = vmax.xlane.f32.xlu0 %v1010
        %v1012 = vpop.xlane.xlu0 %1011
        %v1013 = vsel %vm613, %v1009, -inf
        %1014 = vmax.xlane.f32.xlu0 %v1013
        %v1015 = vpop.xlane.xlu0 %1014
        %v1016 = vsub.f32 %v1008, %v1012
        %v1017 = vsub.f32 %v1009, %v1015
        %v1018 = vmul.f32 %v1016, 1.442695
        %v1019 = vpow.pop %v1018
        %v1020 = vmul.f32 %v1017, 1.442695
        %v1021 = vpow.pop %v1020
        %v1022 = vsel %vm613, %v1019, 0.0
        %1023 = vadd.xlane.f32.xlu0 %v1022
        %v1024 = vpop.xlane.xlu0 %1023
        %v1025 = vsel %vm613, %v1021, 0.0
        %1026 = vadd.xlane.f32.xlu0 %v1025
        %v1027 = vpop.xlane.xlu0 %1026
        %v1028 = vrcp.pop %v1024
        %v1029 = vmul.f32 %v1019, %v1028
        %v1030 = vrcp.pop %v1027
        %v1031 = vmul.f32 %v1021, %v1030
        %s1032 = scalar_lea.vmem %s390, 32 [#allocation5]
        %1033 = vst.msk [vmem:[%s1032] sm:$0xff] %vm613, %v1029
        %1034 = vst.msk [vmem:[%s1032 + $0x8] sm:$0xff] %vm613, %v1031
        %v1038 = vsel %vm613, %v1029, 0
        %v1041 = vsel %vm613, %v1031, 0
        %1043 = vmatprep.subr.mxu0 0.0
        %1044 = vmatpush1.msra.mxu0 %v926
        %1045 = vmatprep.subr.mxu0 0.0
        %1046 = vmatpush1.msra.mxu0 %v928
        %1047 = vmatprep.subr.mxu0 0.0
        %1048 = vmatpush1.msra.mxu0 0.0
        %1049 = vmatprep.subr.mxu0 0.0
        %1050 = vmatpush1.msra.mxu0 0.0
        %1051 = vmatprep.subr.mxu0 0.0
        %1052 = vmatpush1.msra.mxu0 0.0
        %1053 = vmatprep.subr.mxu0 0.0
        %1054 = vmatpush1.msra.mxu0 0.0
        %1055 = vmatprep.subr.mxu0 0.0
        %1056 = vmatpush1.msra.mxu0 0.0
        %1057 = vmatprep.subr.mxu0 0.0
        %1058 = vmatpush1.msra.mxu0 0.0
        %1059 = vmatprep.subr.mxu0 0.0
        %1060 = vmatpush1.msra.mxu0 0.0
        %1061 = vmatprep.subr.mxu0 0.0
        %1062 = vmatpush1.msra.mxu0 0.0
        %1063 = vmatprep.subr.mxu0 0.0
        %1064 = vmatpush1.msra.mxu0 0.0
        %1065 = vmatprep.subr.mxu0 0.0
        %1066 = vmatpush1.msra.mxu0 0.0
        %1067 = vmatprep.subr.mxu0 0.0
        %1068 = vmatpush1.msra.mxu0 0.0
        %1069 = vmatprep.subr.mxu0 0.0
        %1070 = vmatpush1.msra.mxu0 0.0
        %1071 = vmatprep.subr.mxu0 0.0
        %1072 = vmatpush1.msra.mxu0 0.0
        %1073 = vmatprep.subr.mxu0 0.0
        %1074 = vmatpush1.msra.mxu0 0.0
        %1075 = vmatprep.subr.mxu0 0.0
        %1076 = vmatpush1.msra.mxu0 0.0
        %1077 = vmatprep.subr.mxu0 0.0
        %1078 = vmatpush1.msra.mxu0 0.0
        %1079 = vmatprep.subr.mxu0 0.0
        %1080 = vmatpush1.msra.mxu0 0.0
        %1081 = vmatprep.subr.mxu0 0.0
        %1082 = vmatpush1.msra.mxu0 0.0
        %1083 = vmatprep.subr.mxu0 0.0
        %1084 = vmatpush1.msra.mxu0 0.0
        %1085 = vmatprep.subr.mxu0 0.0
        %1086 = vmatpush1.msra.mxu0 0.0
        %1087 = vmatprep.subr.mxu0 0.0
        %1088 = vmatpush1.msra.mxu0 0.0
        %1089 = vmatprep.subr.mxu0 0.0
        %1090 = vmatpush1.msra.mxu0 0.0
        %1091 = vmatprep.subr.mxu0 0.0
        %1092 = vmatpush1.msra.mxu0 0.0
        %1093 = vmatprep.subr.mxu0 0.0
        %1094 = vmatpush1.msra.mxu0 0.0
        %1095 = vmatprep.subr.mxu0 0.0
        %1096 = vmatpush1.msra.mxu0 0.0
        %1097 = vmatprep.subr.mxu0 0.0
        %1098 = vmatpush1.msra.mxu0 0.0
        %1099 = vmatprep.subr.mxu0 0.0
        %1100 = vmatpush1.msra.mxu0 0.0
        %1101 = vmatprep.subr.mxu0 0.0
        %1102 = vmatpush1.msra.mxu0 0.0
        %1103 = vmatprep.subr.mxu0 0.0
        %1104 = vmatpush1.msra.mxu0 0.0
        %1105 = vmatprep.subr.mxu0 0.0
        %1106 = vmatpush1.msra.mxu0 0.0
        %1107 = vmatprep.mubr.f32.mxu0 0.0
        %1108 = vmatmul.mubr.f32.gmra.mrb[0].mxu0 %v1038
        %v1109 = vpop.f32.mrb[0].mxu0
        %v1110 = vadd.f32 0.0, %v1109
        %v1111 = vpop.f32.mrb[0].mxu0
        %1112 = vmatprep.mubr.f32.mxu0 0.0
        %1113 = vmatmul.mubr.f32.gmra.mrb[0].mxu0 %v1041
        %v1114 = vpop.f32.mrb[0].mxu0
        %v1115 = vadd.f32 0.0, %v1114
        %v1116 = vpop.f32.mrb[0].mxu0
        %1117 = vdwg.mxu0
        %1120 = vrot.lane.b32.xlu0 %v1110, 8
        %v1121 = vpop.permute.xlu0 %1120
        %1122 = vrot.lane.b32.xlu0 %v1115, 8
        %v1123 = vpop.permute.xlu0 %1122
        %vm1126 = vcmask 97344
        %1127 = vst.msk [vmem:[#allocation2] sm:$0xff] %vm1126, %v1121
        %1128 = vst.msk [vmem:[#allocation2 + $0x8] sm:$0xff] %vm1126, %v1123
        %1129 = vrot.lane.b32.xlu0 %v521, 116
        %v1130 = vpop.permute.xlu0 %1129
        %1131 = vrot.lane.b32.xlu0 %v526, 116
        %v1132 = vpop.permute.xlu0 %1131
        %v1133 = vsel %vm529, %v1130, 0
        %v1135 = vsel %vm529, %v1132, 0
        %1137 = vmatprep.subr.mxu0 0.0
        %1138 = vmatpush1.xpose.msra.mxu0 %v1133
        %1139 = vmatprep.subr.mxu0 0.0
        %1140 = vmatpush1.xpose.msra.mxu0 %v1135
        %1141 = vmatprep.subr.mxu0 0.0
        %1142 = vmatpush1.xpose.msra.mxu0 0.0
        %1143 = vmatprep.subr.mxu0 0.0
        %1144 = vmatpush1.xpose.msra.mxu0 0.0
        %1145 = vmatprep.subr.mxu0 0.0
        %1146 = vmatpush1.xpose.msra.mxu0 0.0
        %1147 = vmatprep.subr.mxu0 0.0
        %1148 = vmatpush1.xpose.msra.mxu0 0.0
        %1149 = vmatprep.subr.mxu0 0.0
        %1150 = vmatpush1.xpose.msra.mxu0 0.0
        %1151 = vmatprep.subr.mxu0 0.0
        %1152 = vmatpush1.xpose.msra.mxu0 0.0
        %1153 = vmatprep.subr.mxu0 0.0
        %1154 = vmatpush1.xpose.msra.mxu0 0.0
        %1155 = vmatprep.subr.mxu0 0.0
        %1156 = vmatpush1.xpose.msra.mxu0 0.0
        %1157 = vmatprep.subr.mxu0 0.0
        %1158 = vmatpush1.xpose.msra.mxu0 0.0
        %1159 = vmatprep.subr.mxu0 0.0
        %1160 = vmatpush1.xpose.msra.mxu0 0.0
        %1161 = vmatprep.subr.mxu0 0.0
        %1162 = vmatpush1.xpose.msra.mxu0 0.0
        %1163 = vmatprep.subr.mxu0 0.0
        %1164 = vmatpush1.xpose.msra.mxu0 0.0
        %1165 = vmatprep.subr.mxu0 0.0
        %1166 = vmatpush1.xpose.msra.mxu0 0.0
        %1167 = vmatprep.subr.mxu0 0.0
        %1168 = vmatpush1.xpose.msra.mxu0 0.0
        %1169 = vmatprep.subr.mxu0 0.0
        %1170 = vmatpush1.xpose.msra.mxu0 0.0
        %1171 = vmatprep.subr.mxu0 0.0
        %1172 = vmatpush1.xpose.msra.mxu0 0.0
        %1173 = vmatprep.subr.mxu0 0.0
        %1174 = vmatpush1.xpose.msra.mxu0 0.0
        %1175 = vmatprep.subr.mxu0 0.0
        %1176 = vmatpush1.xpose.msra.mxu0 0.0
        %1177 = vmatprep.subr.mxu0 0.0
        %1178 = vmatpush1.xpose.msra.mxu0 0.0
        %1179 = vmatprep.subr.mxu0 0.0
        %1180 = vmatpush1.xpose.msra.mxu0 0.0
        %1181 = vmatprep.subr.mxu0 0.0
        %1182 = vmatpush1.xpose.msra.mxu0 0.0
        %1183 = vmatprep.subr.mxu0 0.0
        %1184 = vmatpush1.xpose.msra.mxu0 0.0
        %1185 = vmatprep.subr.mxu0 0.0
        %1186 = vmatpush1.xpose.msra.mxu0 0.0
        %1187 = vmatprep.subr.mxu0 0.0
        %1188 = vmatpush1.xpose.msra.mxu0 0.0
        %1189 = vmatprep.subr.mxu0 0.0
        %1190 = vmatpush1.xpose.msra.mxu0 0.0
        %1191 = vmatprep.subr.mxu0 0.0
        %1192 = vmatpush1.xpose.msra.mxu0 0.0
        %1193 = vmatprep.subr.mxu0 0.0
        %1194 = vmatpush1.xpose.msra.mxu0 0.0
        %1195 = vmatprep.subr.mxu0 0.0
        %1196 = vmatpush1.xpose.msra.mxu0 0.0
        %1197 = vmatprep.subr.mxu0 0.0
        %1198 = vmatpush1.xpose.msra.mxu0 0.0
        %1199 = vmatprep.subr.mxu0 0.0
        %1200 = vmatpush1.xpose.msra.mxu0 0.0
        %1201 = vmatprep.mubr.f32.mxu0 0.0
        %1202 = vmatmul.mubr.f32.gmra.mrb[0].mxu0 %v1133
        %v1203 = vpop.f32.mrb[0].mxu0
        %v1204 = vadd.f32 0.0, %v1203
        %v1205 = vpop.f32.mrb[0].mxu0
        %1206 = vmatprep.mubr.f32.mxu0 0.0
        %1207 = vmatmul.mubr.f32.gmra.mrb[0].mxu0 %v1135
        %v1208 = vpop.f32.mrb[0].mxu0
        %v1209 = vadd.f32 0.0, %v1208
        %v1210 = vpop.f32.mrb[0].mxu0
        %1211 = vdwg.mxu0
        %v1212 = vmul.f32 %v1204, 0.35355338
        %v1213 = vmul.f32 %v1209, 0.35355338
        %v1214 = vsel %vm613, %v1212, -inf
        %1215 = vmax.xlane.f32.xlu0 %v1214
        %v1216 = vpop.xlane.xlu0 %1215
        %v1217 = vsel %vm613, %v1213, -inf
        %1218 = vmax.xlane.f32.xlu0 %v1217
        %v1219 = vpop.xlane.xlu0 %1218
        %v1220 = vsub.f32 %v1212, %v1216
        %v1221 = vsub.f32 %v1213, %v1219
        %v1222 = vmul.f32 %v1220, 1.442695
        %v1223 = vpow.pop %v1222
        %v1224 = vmul.f32 %v1221, 1.442695
        %v1225 = vpow.pop %v1224
        %v1226 = vsel %vm613, %v1223, 0.0
        %1227 = vadd.xlane.f32.xlu0 %v1226
        %v1228 = vpop.xlane.xlu0 %1227
        %v1229 = vsel %vm613, %v1225, 0.0
        %1230 = vadd.xlane.f32.xlu0 %v1229
        %v1231 = vpop.xlane.xlu0 %1230
        %v1232 = vrcp.pop %v1228
        %v1233 = vmul.f32 %v1223, %v1232
        %v1234 = vrcp.pop %v1231
        %v1235 = vmul.f32 %v1225, %v1234
        %s1236 = scalar_lea.vmem %s390, 48 [#allocation5]
        %1237 = vst.msk [vmem:[%s1236] sm:$0xff] %vm613, %v1233
        %1238 = vst.msk [vmem:[%s1236 + $0x8] sm:$0xff] %vm613, %v1235
        %v1242 = vsel %vm613, %v1233, 0
        %v1245 = vsel %vm613, %v1235, 0
        %1247 = vmatprep.subr.mxu0 0.0
        %1248 = vmatpush1.msra.mxu0 %v1130
        %1249 = vmatprep.subr.mxu0 0.0
        %1250 = vmatpush1.msra.mxu0 %v1132
        %1251 = vmatprep.subr.mxu0 0.0
        %1252 = vmatpush1.msra.mxu0 0.0
        %1253 = vmatprep.subr.mxu0 0.0
        %1254 = vmatpush1.msra.mxu0 0.0
        %1255 = vmatprep.subr.mxu0 0.0
        %1256 = vmatpush1.msra.mxu0 0.0
        %1257 = vmatprep.subr.mxu0 0.0
        %1258 = vmatpush1.msra.mxu0 0.0
        %1259 = vmatprep.subr.mxu0 0.0
        %1260 = vmatpush1.msra.mxu0 0.0
        %1261 = vmatprep.subr.mxu0 0.0
        %1262 = vmatpush1.msra.mxu0 0.0
        %1263 = vmatprep.subr.mxu0 0.0
        %1264 = vmatpush1.msra.mxu0 0.0
        %1265 = vmatprep.subr.mxu0 0.0
        %1266 = vmatpush1.msra.mxu0 0.0
        %1267 = vmatprep.subr.mxu0 0.0
        %1268 = vmatpush1.msra.mxu0 0.0
        %1269 = vmatprep.subr.mxu0 0.0
        %1270 = vmatpush1.msra.mxu0 0.0
        %1271 = vmatprep.subr.mxu0 0.0
        %1272 = vmatpush1.msra.mxu0 0.0
        %1273 = vmatprep.subr.mxu0 0.0
        %1274 = vmatpush1.msra.mxu0 0.0
        %1275 = vmatprep.subr.mxu0 0.0
        %1276 = vmatpush1.msra.mxu0 0.0
        %1277 = vmatprep.subr.mxu0 0.0
        %1278 = vmatpush1.msra.mxu0 0.0
        %1279 = vmatprep.subr.mxu0 0.0
        %1280 = vmatpush1.msra.mxu0 0.0
        %1281 = vmatprep.subr.mxu0 0.0
        %1282 = vmatpush1.msra.mxu0 0.0
        %1283 = vmatprep.subr.mxu0 0.0
        %1284 = vmatpush1.msra.mxu0 0.0
        %1285 = vmatprep.subr.mxu0 0.0
        %1286 = vmatpush1.msra.mxu0 0.0
        %1287 = vmatprep.subr.mxu0 0.0
        %1288 = vmatpush1.msra.mxu0 0.0
        %1289 = vmatprep.subr.mxu0 0.0
        %1290 = vmatpush1.msra.mxu0 0.0
        %1291 = vmatprep.subr.mxu0 0.0
        %1292 = vmatpush1.msra.mxu0 0.0
        %1293 = vmatprep.subr.mxu0 0.0
        %1294 = vmatpush1.msra.mxu0 0.0
        %1295 = vmatprep.subr.mxu0 0.0
        %1296 = vmatpush1.msra.mxu0 0.0
        %1297 = vmatprep.subr.mxu0 0.0
        %1298 = vmatpush1.msra.mxu0 0.0
        %1299 = vmatprep.subr.mxu0 0.0
        %1300 = vmatpush1.msra.mxu0 0.0
        %1301 = vmatprep.subr.mxu0 0.0
        %1302 = vmatpush1.msra.mxu0 0.0
        %1303 = vmatprep.subr.mxu0 0.0
        %1304 = vmatpush1.msra.mxu0 0.0
        %1305 = vmatprep.subr.mxu0 0.0
        %1306 = vmatpush1.msra.mxu0 0.0
        %1307 = vmatprep.subr.mxu0 0.0
        %1308 = vmatpush1.msra.mxu0 0.0
        %1309 = vmatprep.subr.mxu0 0.0
        %1310 = vmatpush1.msra.mxu0 0.0
        %1311 = vmatprep.mubr.f32.mxu0 0.0
        %1312 = vmatmul.mubr.f32.gmra.mrb[0].mxu0 %v1242
        %v1313 = vpop.f32.mrb[0].mxu0
        %v1314 = vadd.f32 0.0, %v1313
        %v1315 = vpop.f32.mrb[0].mxu0
        %1316 = vmatprep.mubr.f32.mxu0 0.0
        %1317 = vmatmul.mubr.f32.gmra.mrb[0].mxu0 %v1245
        %v1318 = vpop.f32.mrb[0].mxu0
        %v1319 = vadd.f32 0.0, %v1318
        %v1320 = vpop.f32.mrb[0].mxu0
        %1321 = vdwg.mxu0
        %1324 = vrot.lane.b32.xlu0 %v1314, 12
        %v1325 = vpop.permute.xlu0 %1324
        %1326 = vrot.lane.b32.xlu0 %v1319, 12
        %v1327 = vpop.permute.xlu0 %1326
        %vm1330 = vcmask 130144
        %1331 = vst.msk [vmem:[#allocation2] sm:$0xff] %vm1330, %v1325
        %1332 = vst.msk [vmem:[#allocation2 + $0x8] sm:$0xff] %vm1330, %v1327
        %1333 = vrot.lane.b32.xlu0 %v521, 112
        %v1334 = vpop.permute.xlu0 %1333
        %1335 = vrot.lane.b32.xlu0 %v526, 112
        %v1336 = vpop.permute.xlu0 %1335
        %v1337 = vsel %vm529, %v1334, 0
        %v1339 = vsel %vm529, %v1336, 0
        %1341 = vmatprep.subr.mxu0 0.0
        %1342 = vmatpush1.xpose.msra.mxu0 %v1337
        %1343 = vmatprep.subr.mxu0 0.0
        %1344 = vmatpush1.xpose.msra.mxu0 %v1339
        %1345 = vmatprep.subr.mxu0 0.0
        %1346 = vmatpush1.xpose.msra.mxu0 0.0
        %1347 = vmatprep.subr.mxu0 0.0
        %1348 = vmatpush1.xpose.msra.mxu0 0.0
        %1349 = vmatprep.subr.mxu0 0.0
        %1350 = vmatpush1.xpose.msra.mxu0 0.0
        %1351 = vmatprep.subr.mxu0 0.0
        %1352 = vmatpush1.xpose.msra.mxu0 0.0
        %1353 = vmatprep.subr.mxu0 0.0
        %1354 = vmatpush1.xpose.msra.mxu0 0.0
        %1355 = vmatprep.subr.mxu0 0.0
        %1356 = vmatpush1.xpose.msra.mxu0 0.0
        %1357 = vmatprep.subr.mxu0 0.0
        %1358 = vmatpush1.xpose.msra.mxu0 0.0
        %1359 = vmatprep.subr.mxu0 0.0
        %1360 = vmatpush1.xpose.msra.mxu0 0.0
        %1361 = vmatprep.subr.mxu0 0.0
        %1362 = vmatpush1.xpose.msra.mxu0 0.0
        %1363 = vmatprep.subr.mxu0 0.0
        %1364 = vmatpush1.xpose.msra.mxu0 0.0
        %1365 = vmatprep.subr.mxu0 0.0
        %1366 = vmatpush1.xpose.msra.mxu0 0.0
        %1367 = vmatprep.subr.mxu0 0.0
        %1368 = vmatpush1.xpose.msra.mxu0 0.0
        %1369 = vmatprep.subr.mxu0 0.0
        %1370 = vmatpush1.xpose.msra.mxu0 0.0
        %1371 = vmatprep.subr.mxu0 0.0
        %1372 = vmatpush1.xpose.msra.mxu0 0.0
        %1373 = vmatprep.subr.mxu0 0.0
        %1374 = vmatpush1.xpose.msra.mxu0 0.0
        %1375 = vmatprep.subr.mxu0 0.0
        %1376 = vmatpush1.xpose.msra.mxu0 0.0
        %1377 = vmatprep.subr.mxu0 0.0
        %1378 = vmatpush1.xpose.msra.mxu0 0.0
        %1379 = vmatprep.subr.mxu0 0.0
        %1380 = vmatpush1.xpose.msra.mxu0 0.0
        %1381 = vmatprep.subr.mxu0 0.0
        %1382 = vmatpush1.xpose.msra.mxu0 0.0
        %1383 = vmatprep.subr.mxu0 0.0
        %1384 = vmatpush1.xpose.msra.mxu0 0.0
        %1385 = vmatprep.subr.mxu0 0.0
        %1386 = vmatpush1.xpose.msra.mxu0 0.0
        %1387 = vmatprep.subr.mxu0 0.0
        %1388 = vmatpush1.xpose.msra.mxu0 0.0
        %1389 = vmatprep.subr.mxu0 0.0
        %1390 = vmatpush1.xpose.msra.mxu0 0.0
        %1391 = vmatprep.subr.mxu0 0.0
        %1392 = vmatpush1.xpose.msra.mxu0 0.0
        %1393 = vmatprep.subr.mxu0 0.0
        %1394 = vmatpush1.xpose.msra.mxu0 0.0
        %1395 = vmatprep.subr.mxu0 0.0
        %1396 = vmatpush1.xpose.msra.mxu0 0.0
        %1397 = vmatprep.subr.mxu0 0.0
        %1398 = vmatpush1.xpose.msra.mxu0 0.0
        %1399 = vmatprep.subr.mxu0 0.0
        %1400 = vmatpush1.xpose.msra.mxu0 0.0
        %1401 = vmatprep.subr.mxu0 0.0
        %1402 = vmatpush1.xpose.msra.mxu0 0.0
        %1403 = vmatprep.subr.mxu0 0.0
        %1404 = vmatpush1.xpose.msra.mxu0 0.0
        %1405 = vmatprep.mubr.f32.mxu0 0.0
        %1406 = vmatmul.mubr.f32.gmra.mrb[0].mxu0 %v1337
        %v1407 = vpop.f32.mrb[0].mxu0
        %v1408 = vadd.f32 0.0, %v1407
        %v1409 = vpop.f32.mrb[0].mxu0
        %1410 = vmatprep.mubr.f32.mxu0 0.0
        %1411 = vmatmul.mubr.f32.gmra.mrb[0].mxu0 %v1339
        %v1412 = vpop.f32.mrb[0].mxu0
        %v1413 = vadd.f32 0.0, %v1412
        %v1414 = vpop.f32.mrb[0].mxu0
        %1415 = vdwg.mxu0
        %v1416 = vmul.f32 %v1408, 0.35355338
        %v1417 = vmul.f32 %v1413, 0.35355338
        %v1418 = vsel %vm613, %v1416, -inf
        %1419 = vmax.xlane.f32.xlu0 %v1418
        %v1420 = vpop.xlane.xlu0 %1419
        %v1421 = vsel %vm613, %v1417, -inf
        %1422 = vmax.xlane.f32.xlu0 %v1421
        %v1423 = vpop.xlane.xlu0 %1422
        %v1424 = vsub.f32 %v1416, %v1420
        %v1425 = vsub.f32 %v1417, %v1423
        %v1426 = vmul.f32 %v1424, 1.442695
        %v1427 = vpow.pop %v1426
        %v1428 = vmul.f32 %v1425, 1.442695
        %v1429 = vpow.pop %v1428
        %v1430 = vsel %vm613, %v1427, 0.0
        %1431 = vadd.xlane.f32.xlu0 %v1430
        %v1432 = vpop.xlane.xlu0 %1431
        %v1433 = vsel %vm613, %v1429, 0.0
        %1434 = vadd.xlane.f32.xlu0 %v1433
        %v1435 = vpop.xlane.xlu0 %1434
        %v1436 = vrcp.pop %v1432
        %v1437 = vmul.f32 %v1427, %v1436
        %v1438 = vrcp.pop %v1435
        %v1439 = vmul.f32 %v1429, %v1438
        %s1440 = scalar_lea.vmem %s390, 64 [#allocation5]
        %1441 = vst.msk [vmem:[%s1440] sm:$0xff] %vm613, %v1437
        %1442 = vst.msk [vmem:[%s1440 + $0x8] sm:$0xff] %vm613, %v1439
        %v1446 = vsel %vm613, %v1437, 0
        %v1449 = vsel %vm613, %v1439, 0
        %1451 = vmatprep.subr.mxu0 0.0
        %1452 = vmatpush1.msra.mxu0 %v1334
        %1453 = vmatprep.subr.mxu0 0.0
        %1454 = vmatpush1.msra.mxu0 %v1336
        %1455 = vmatprep.subr.mxu0 0.0
        %1456 = vmatpush1.msra.mxu0 0.0
        %1457 = vmatprep.subr.mxu0 0.0
        %1458 = vmatpush1.msra.mxu0 0.0
        %1459 = vmatprep.subr.mxu0 0.0
        %1460 = vmatpush1.msra.mxu0 0.0
        %1461 = vmatprep.subr.mxu0 0.0
        %1462 = vmatpush1.msra.mxu0 0.0
        %1463 = vmatprep.subr.mxu0 0.0
        %1464 = vmatpush1.msra.mxu0 0.0
        %1465 = vmatprep.subr.mxu0 0.0
        %1466 = vmatpush1.msra.mxu0 0.0
        %1467 = vmatprep.subr.mxu0 0.0
        %1468 = vmatpush1.msra.mxu0 0.0
        %1469 = vmatprep.subr.mxu0 0.0
        %1470 = vmatpush1.msra.mxu0 0.0
        %1471 = vmatprep.subr.mxu0 0.0
        %1472 = vmatpush1.msra.mxu0 0.0
        %1473 = vmatprep.subr.mxu0 0.0
        %1474 = vmatpush1.msra.mxu0 0.0
        %1475 = vmatprep.subr.mxu0 0.0
        %1476 = vmatpush1.msra.mxu0 0.0
        %1477 = vmatprep.subr.mxu0 0.0
        %1478 = vmatpush1.msra.mxu0 0.0
        %1479 = vmatprep.subr.mxu0 0.0
        %1480 = vmatpush1.msra.mxu0 0.0
        %1481 = vmatprep.subr.mxu0 0.0
        %1482 = vmatpush1.msra.mxu0 0.0
        %1483 = vmatprep.subr.mxu0 0.0
        %1484 = vmatpush1.msra.mxu0 0.0
        %1485 = vmatprep.subr.mxu0 0.0
        %1486 = vmatpush1.msra.mxu0 0.0
        %1487 = vmatprep.subr.mxu0 0.0
        %1488 = vmatpush1.msra.mxu0 0.0
        %1489 = vmatprep.subr.mxu0 0.0
        %1490 = vmatpush1.msra.mxu0 0.0
        %1491 = vmatprep.subr.mxu0 0.0
        %1492 = vmatpush1.msra.mxu0 0.0
        %1493 = vmatprep.subr.mxu0 0.0
        %1494 = vmatpush1.msra.mxu0 0.0
        %1495 = vmatprep.subr.mxu0 0.0
        %1496 = vmatpush1.msra.mxu0 0.0
        %1497 = vmatprep.subr.mxu0 0.0
        %1498 = vmatpush1.msra.mxu0 0.0
        %1499 = vmatprep.subr.mxu0 0.0
        %1500 = vmatpush1.msra.mxu0 0.0
        %1501 = vmatprep.subr.mxu0 0.0
        %1502 = vmatpush1.msra.mxu0 0.0
        %1503 = vmatprep.subr.mxu0 0.0
        %1504 = vmatpush1.msra.mxu0 0.0
        %1505 = vmatprep.subr.mxu0 0.0
        %1506 = vmatpush1.msra.mxu0 0.0
        %1507 = vmatprep.subr.mxu0 0.0
        %1508 = vmatpush1.msra.mxu0 0.0
        %1509 = vmatprep.subr.mxu0 0.0
        %1510 = vmatpush1.msra.mxu0 0.0
        %1511 = vmatprep.subr.mxu0 0.0
        %1512 = vmatpush1.msra.mxu0 0.0
        %1513 = vmatprep.subr.mxu0 0.0
        %1514 = vmatpush1.msra.mxu0 0.0
        %1515 = vmatprep.mubr.f32.mxu0 0.0
        %1516 = vmatmul.mubr.f32.gmra.mrb[0].mxu0 %v1446
        %v1517 = vpop.f32.mrb[0].mxu0
        %v1518 = vadd.f32 0.0, %v1517
        %v1519 = vpop.f32.mrb[0].mxu0
        %1520 = vmatprep.mubr.f32.mxu0 0.0
        %1521 = vmatmul.mubr.f32.gmra.mrb[0].mxu0 %v1449
        %v1522 = vpop.f32.mrb[0].mxu0
        %v1523 = vadd.f32 0.0, %v1522
        %v1524 = vpop.f32.mrb[0].mxu0
        %1525 = vdwg.mxu0
        %1528 = vrot.lane.b32.xlu0 %v1518, 16
        %v1529 = vpop.permute.xlu0 %1528
        %1530 = vrot.lane.b32.xlu0 %v1523, 16
        %v1531 = vpop.permute.xlu0 %1530
        %vm1534 = vcmask 162944
        %1535 = vst.msk [vmem:[#allocation2] sm:$0xff] %vm1534, %v1529
        %1536 = vst.msk [vmem:[#allocation2 + $0x8] sm:$0xff] %vm1534, %v1531
        %1537 = vrot.lane.b32.xlu0 %v521, 108
        %v1538 = vpop.permute.xlu0 %1537
        %1539 = vrot.lane.b32.xlu0 %v526, 108
        %v1540 = vpop.permute.xlu0 %1539
        %v1541 = vsel %vm529, %v1538, 0
        %v1543 = vsel %vm529, %v1540, 0
        %1545 = vmatprep.subr.mxu0 0.0
        %1546 = vmatpush1.xpose.msra.mxu0 %v1541
        %1547 = vmatprep.subr.mxu0 0.0
        %1548 = vmatpush1.xpose.msra.mxu0 %v1543
        %1549 = vmatprep.subr.mxu0 0.0
        %1550 = vmatpush1.xpose.msra.mxu0 0.0
        %1551 = vmatprep.subr.mxu0 0.0
        %1552 = vmatpush1.xpose.msra.mxu0 0.0
        %1553 = vmatprep.subr.mxu0 0.0
        %1554 = vmatpush1.xpose.msra.mxu0 0.0
        %1555 = vmatprep.subr.mxu0 0.0
        %1556 = vmatpush1.xpose.msra.mxu0 0.0
        %1557 = vmatprep.subr.mxu0 0.0
        %1558 = vmatpush1.xpose.msra.mxu0 0.0
        %1559 = vmatprep.subr.mxu0 0.0
        %1560 = vmatpush1.xpose.msra.mxu0 0.0
        %1561 = vmatprep.subr.mxu0 0.0
        %1562 = vmatpush1.xpose.msra.mxu0 0.0
        %1563 = vmatprep.subr.mxu0 0.0
        %1564 = vmatpush1.xpose.msra.mxu0 0.0
        %1565 = vmatprep.subr.mxu0 0.0
        %1566 = vmatpush1.xpose.msra.mxu0 0.0
        %1567 = vmatprep.subr.mxu0 0.0
        %1568 = vmatpush1.xpose.msra.mxu0 0.0
        %1569 = vmatprep.subr.mxu0 0.0
        %1570 = vmatpush1.xpose.msra.mxu0 0.0
        %1571 = vmatprep.subr.mxu0 0.0
        %1572 = vmatpush1.xpose.msra.mxu0 0.0
        %1573 = vmatprep.subr.mxu0 0.0
        %1574 = vmatpush1.xpose.msra.mxu0 0.0
        %1575 = vmatprep.subr.mxu0 0.0
        %1576 = vmatpush1.xpose.msra.mxu0 0.0
        %1577 = vmatprep.subr.mxu0 0.0
        %1578 = vmatpush1.xpose.msra.mxu0 0.0
        %1579 = vmatprep.subr.mxu0 0.0
        %1580 = vmatpush1.xpose.msra.mxu0 0.0
        %1581 = vmatprep.subr.mxu0 0.0
        %1582 = vmatpush1.xpose.msra.mxu0 0.0
        %1583 = vmatprep.subr.mxu0 0.0
        %1584 = vmatpush1.xpose.msra.mxu0 0.0
        %1585 = vmatprep.subr.mxu0 0.0
        %1586 = vmatpush1.xpose.msra.mxu0 0.0
        %1587 = vmatprep.subr.mxu0 0.0
        %1588 = vmatpush1.xpose.msra.mxu0 0.0
        %1589 = vmatprep.subr.mxu0 0.0
        %1590 = vmatpush1.xpose.msra.mxu0 0.0
        %1591 = vmatprep.subr.mxu0 0.0
        %1592 = vmatpush1.xpose.msra.mxu0 0.0
        %1593 = vmatprep.subr.mxu0 0.0
        %1594 = vmatpush1.xpose.msra.mxu0 0.0
        %1595 = vmatprep.subr.mxu0 0.0
        %1596 = vmatpush1.xpose.msra.mxu0 0.0
        %1597 = vmatprep.subr.mxu0 0.0
        %1598 = vmatpush1.xpose.msra.mxu0 0.0
        %1599 = vmatprep.subr.mxu0 0.0
        %1600 = vmatpush1.xpose.msra.mxu0 0.0
        %1601 = vmatprep.subr.mxu0 0.0
        %1602 = vmatpush1.xpose.msra.mxu0 0.0
        %1603 = vmatprep.subr.mxu0 0.0
        %1604 = vmatpush1.xpose.msra.mxu0 0.0
        %1605 = vmatprep.subr.mxu0 0.0
        %1606 = vmatpush1.xpose.msra.mxu0 0.0
        %1607 = vmatprep.subr.mxu0 0.0
        %1608 = vmatpush1.xpose.msra.mxu0 0.0
        %1609 = vmatprep.mubr.f32.mxu0 0.0
        %1610 = vmatmul.mubr.f32.gmra.mrb[0].mxu0 %v1541
        %v1611 = vpop.f32.mrb[0].mxu0
        %v1612 = vadd.f32 0.0, %v1611
        %v1613 = vpop.f32.mrb[0].mxu0
        %1614 = vmatprep.mubr.f32.mxu0 0.0
        %1615 = vmatmul.mubr.f32.gmra.mrb[0].mxu0 %v1543
        %v1616 = vpop.f32.mrb[0].mxu0
        %v1617 = vadd.f32 0.0, %v1616
        %v1618 = vpop.f32.mrb[0].mxu0
        %1619 = vdwg.mxu0
        %v1620 = vmul.f32 %v1612, 0.35355338
        %v1621 = vmul.f32 %v1617, 0.35355338
        %v1622 = vsel %vm613, %v1620, -inf
        %1623 = vmax.xlane.f32.xlu0 %v1622
        %v1624 = vpop.xlane.xlu0 %1623
        %v1625 = vsel %vm613, %v1621, -inf
        %1626 = vmax.xlane.f32.xlu0 %v1625
        %v1627 = vpop.xlane.xlu0 %1626
        %v1628 = vsub.f32 %v1620, %v1624
        %v1629 = vsub.f32 %v1621, %v1627
        %v1630 = vmul.f32 %v1628, 1.442695
        %v1631 = vpow.pop %v1630
        %v1632 = vmul.f32 %v1629, 1.442695
        %v1633 = vpow.pop %v1632
        %v1634 = vsel %vm613, %v1631, 0.0
        %1635 = vadd.xlane.f32.xlu0 %v1634
        %v1636 = vpop.xlane.xlu0 %1635
        %v1637 = vsel %vm613, %v1633, 0.0
        %1638 = vadd.xlane.f32.xlu0 %v1637
        %v1639 = vpop.xlane.xlu0 %1638
        %v1640 = vrcp.pop %v1636
        %v1641 = vmul.f32 %v1631, %v1640
        %v1642 = vrcp.pop %v1639
        %v1643 = vmul.f32 %v1633, %v1642
        %s1644 = scalar_lea.vmem %s390, 80 [#allocation5]
        %1645 = vst.msk [vmem:[%s1644] sm:$0xff] %vm613, %v1641
        %1646 = vst.msk [vmem:[%s1644 + $0x8] sm:$0xff] %vm613, %v1643
        %v1650 = vsel %vm613, %v1641, 0
        %v1653 = vsel %vm613, %v1643, 0
        %1655 = vmatprep.subr.mxu0 0.0
        %1656 = vmatpush1.msra.mxu0 %v1538
        %1657 = vmatprep.subr.mxu0 0.0
        %1658 = vmatpush1.msra.mxu0 %v1540
        %1659 = vmatprep.subr.mxu0 0.0
        %1660 = vmatpush1.msra.mxu0 0.0
        %1661 = vmatprep.subr.mxu0 0.0
        %1662 = vmatpush1.msra.mxu0 0.0
        %1663 = vmatprep.subr.mxu0 0.0
        %1664 = vmatpush1.msra.mxu0 0.0
        %1665 = vmatprep.subr.mxu0 0.0
        %1666 = vmatpush1.msra.mxu0 0.0
        %1667 = vmatprep.subr.mxu0 0.0
        %1668 = vmatpush1.msra.mxu0 0.0
        %1669 = vmatprep.subr.mxu0 0.0
        %1670 = vmatpush1.msra.mxu0 0.0
        %1671 = vmatprep.subr.mxu0 0.0
        %1672 = vmatpush1.msra.mxu0 0.0
        %1673 = vmatprep.subr.mxu0 0.0
        %1674 = vmatpush1.msra.mxu0 0.0
        %1675 = vmatprep.subr.mxu0 0.0
        %1676 = vmatpush1.msra.mxu0 0.0
        %1677 = vmatprep.subr.mxu0 0.0
        %1678 = vmatpush1.msra.mxu0 0.0
        %1679 = vmatprep.subr.mxu0 0.0
        %1680 = vmatpush1.msra.mxu0 0.0
        %1681 = vmatprep.subr.mxu0 0.0
        %1682 = vmatpush1.msra.mxu0 0.0
        %1683 = vmatprep.subr.mxu0 0.0
        %1684 = vmatpush1.msra.mxu0 0.0
        %1685 = vmatprep.subr.mxu0 0.0
        %1686 = vmatpush1.msra.mxu0 0.0
        %1687 = vmatprep.subr.mxu0 0.0
        %1688 = vmatpush1.msra.mxu0 0.0
        %1689 = vmatprep.subr.mxu0 0.0
        %1690 = vmatpush1.msra.mxu0 0.0
        %1691 = vmatprep.subr.mxu0 0.0
        %1692 = vmatpush1.msra.mxu0 0.0
        %1693 = vmatprep.subr.mxu0 0.0
        %1694 = vmatpush1.msra.mxu0 0.0
        %1695 = vmatprep.subr.mxu0 0.0
        %1696 = vmatpush1.msra.mxu0 0.0
        %1697 = vmatprep.subr.mxu0 0.0
        %1698 = vmatpush1.msra.mxu0 0.0
        %1699 = vmatprep.subr.mxu0 0.0
        %1700 = vmatpush1.msra.mxu0 0.0
        %1701 = vmatprep.subr.mxu0 0.0
        %1702 = vmatpush1.msra.mxu0 0.0
        %1703 = vmatprep.subr.mxu0 0.0
        %1704 = vmatpush1.msra.mxu0 0.0
        %1705 = vmatprep.subr.mxu0 0.0
        %1706 = vmatpush1.msra.mxu0 0.0
        %1707 = vmatprep.subr.mxu0 0.0
        %1708 = vmatpush1.msra.mxu0 0.0
        %1709 = vmatprep.subr.mxu0 0.0
        %1710 = vmatpush1.msra.mxu0 0.0
        %1711 = vmatprep.subr.mxu0 0.0
        %1712 = vmatpush1.msra.mxu0 0.0
        %1713 = vmatprep.subr.mxu0 0.0
        %1714 = vmatpush1.msra.mxu0 0.0
        %1715 = vmatprep.subr.mxu0 0.0
        %1716 = vmatpush1.msra.mxu0 0.0
        %1717 = vmatprep.subr.mxu0 0.0
        %1718 = vmatpush1.msra.mxu0 0.0
        %1719 = vmatprep.mubr.f32.mxu0 0.0
        %1720 = vmatmul.mubr.f32.gmra.mrb[0].mxu0 %v1650
        %v1721 = vpop.f32.mrb[0].mxu0
        %v1722 = vadd.f32 0.0, %v1721
        %v1723 = vpop.f32.mrb[0].mxu0
        %1724 = vmatprep.mubr.f32.mxu0 0.0
        %1725 = vmatmul.mubr.f32.gmra.mrb[0].mxu0 %v1653
        %v1726 = vpop.f32.mrb[0].mxu0
        %v1727 = vadd.f32 0.0, %v1726
        %v1728 = vpop.f32.mrb[0].mxu0
        %1729 = vdwg.mxu0
        %1732 = vrot.lane.b32.xlu0 %v1722, 20
        %v1733 = vpop.permute.xlu0 %1732
        %1734 = vrot.lane.b32.xlu0 %v1727, 20
        %v1735 = vpop.permute.xlu0 %1734
        %vm1738 = vcmask 195744
        %1739 = vst.msk [vmem:[#allocation2] sm:$0xff] %vm1738, %v1733
        %1740 = vst.msk [vmem:[#allocation2 + $0x8] sm:$0xff] %vm1738, %v1735
        %1741 = vrot.lane.b32.xlu0 %v521, 104
        %v1742 = vpop.permute.xlu0 %1741
        %1743 = vrot.lane.b32.xlu0 %v526, 104
        %v1744 = vpop.permute.xlu0 %1743
        %v1745 = vsel %vm529, %v1742, 0
        %v1747 = vsel %vm529, %v1744, 0
        %1749 = vmatprep.subr.mxu0 0.0
        %1750 = vmatpush1.xpose.msra.mxu0 %v1745
        %1751 = vmatprep.subr.mxu0 0.0
        %1752 = vmatpush1.xpose.msra.mxu0 %v1747
        %1753 = vmatprep.subr.mxu0 0.0
        %1754 = vmatpush1.xpose.msra.mxu0 0.0
        %1755 = vmatprep.subr.mxu0 0.0
        %1756 = vmatpush1.xpose.msra.mxu0 0.0
        %1757 = vmatprep.subr.mxu0 0.0
        %1758 = vmatpush1.xpose.msra.mxu0 0.0
        %1759 = vmatprep.subr.mxu0 0.0
        %1760 = vmatpush1.xpose.msra.mxu0 0.0
        %1761 = vmatprep.subr.mxu0 0.0
        %1762 = vmatpush1.xpose.msra.mxu0 0.0
        %1763 = vmatprep.subr.mxu0 0.0
        %1764 = vmatpush1.xpose.msra.mxu0 0.0
        %1765 = vmatprep.subr.mxu0 0.0
        %1766 = vmatpush1.xpose.msra.mxu0 0.0
        %1767 = vmatprep.subr.mxu0 0.0
        %1768 = vmatpush1.xpose.msra.mxu0 0.0
        %1769 = vmatprep.subr.mxu0 0.0
        %1770 = vmatpush1.xpose.msra.mxu0 0.0
        %1771 = vmatprep.subr.mxu0 0.0
        %1772 = vmatpush1.xpose.msra.mxu0 0.0
        %1773 = vmatprep.subr.mxu0 0.0
        %1774 = vmatpush1.xpose.msra.mxu0 0.0
        %1775 = vmatprep.subr.mxu0 0.0
        %1776 = vmatpush1.xpose.msra.mxu0 0.0
        %1777 = vmatprep.subr.mxu0 0.0
        %1778 = vmatpush1.xpose.msra.mxu0 0.0
        %1779 = vmatprep.subr.mxu0 0.0
        %1780 = vmatpush1.xpose.msra.mxu0 0.0
        %1781 = vmatprep.subr.mxu0 0.0
        %1782 = vmatpush1.xpose.msra.mxu0 0.0
        %1783 = vmatprep.subr.mxu0 0.0
        %1784 = vmatpush1.xpose.msra.mxu0 0.0
        %1785 = vmatprep.subr.mxu0 0.0
        %1786 = vmatpush1.xpose.msra.mxu0 0.0
        %1787 = vmatprep.subr.mxu0 0.0
        %1788 = vmatpush1.xpose.msra.mxu0 0.0
        %1789 = vmatprep.subr.mxu0 0.0
        %1790 = vmatpush1.xpose.msra.mxu0 0.0
        %1791 = vmatprep.subr.mxu0 0.0
        %1792 = vmatpush1.xpose.msra.mxu0 0.0
        %1793 = vmatprep.subr.mxu0 0.0
        %1794 = vmatpush1.xpose.msra.mxu0 0.0
        %1795 = vmatprep.subr.mxu0 0.0
        %1796 = vmatpush1.xpose.msra.mxu0 0.0
        %1797 = vmatprep.subr.mxu0 0.0
        %1798 = vmatpush1.xpose.msra.mxu0 0.0
        %1799 = vmatprep.subr.mxu0 0.0
        %1800 = vmatpush1.xpose.msra.mxu0 0.0
        %1801 = vmatprep.subr.mxu0 0.0
        %1802 = vmatpush1.xpose.msra.mxu0 0.0
        %1803 = vmatprep.subr.mxu0 0.0
        %1804 = vmatpush1.xpose.msra.mxu0 0.0
        %1805 = vmatprep.subr.mxu0 0.0
        %1806 = vmatpush1.xpose.msra.mxu0 0.0
        %1807 = vmatprep.subr.mxu0 0.0
        %1808 = vmatpush1.xpose.msra.mxu0 0.0
        %1809 = vmatprep.subr.mxu0 0.0
        %1810 = vmatpush1.xpose.msra.mxu0 0.0
        %1811 = vmatprep.subr.mxu0 0.0
        %1812 = vmatpush1.xpose.msra.mxu0 0.0
        %1813 = vmatprep.mubr.f32.mxu0 0.0
        %1814 = vmatmul.mubr.f32.gmra.mrb[0].mxu0 %v1745
        %v1815 = vpop.f32.mrb[0].mxu0
        %v1816 = vadd.f32 0.0, %v1815
        %v1817 = vpop.f32.mrb[0].mxu0
        %1818 = vmatprep.mubr.f32.mxu0 0.0
        %1819 = vmatmul.mubr.f32.gmra.mrb[0].mxu0 %v1747
        %v1820 = vpop.f32.mrb[0].mxu0
        %v1821 = vadd.f32 0.0, %v1820
        %v1822 = vpop.f32.mrb[0].mxu0
        %1823 = vdwg.mxu0
        %v1824 = vmul.f32 %v1816, 0.35355338
        %v1825 = vmul.f32 %v1821, 0.35355338
        %v1826 = vsel %vm613, %v1824, -inf
        %1827 = vmax.xlane.f32.xlu0 %v1826
        %v1828 = vpop.xlane.xlu0 %1827
        %v1829 = vsel %vm613, %v1825, -inf
        %1830 = vmax.xlane.f32.xlu0 %v1829
        %v1831 = vpop.xlane.xlu0 %1830
        %v1832 = vsub.f32 %v1824, %v1828
        %v1833 = vsub.f32 %v1825, %v1831
        %v1834 = vmul.f32 %v1832, 1.442695
        %v1835 = vpow.pop %v1834
        %v1836 = vmul.f32 %v1833, 1.442695
        %v1837 = vpow.pop %v1836
        %v1838 = vsel %vm613, %v1835, 0.0
        %1839 = vadd.xlane.f32.xlu0 %v1838
        %v1840 = vpop.xlane.xlu0 %1839
        %v1841 = vsel %vm613, %v1837, 0.0
        %1842 = vadd.xlane.f32.xlu0 %v1841
        %v1843 = vpop.xlane.xlu0 %1842
        %v1844 = vrcp.pop %v1840
        %v1845 = vmul.f32 %v1835, %v1844
        %v1846 = vrcp.pop %v1843
        %v1847 = vmul.f32 %v1837, %v1846
        %s1848 = scalar_lea.vmem %s390, 96 [#allocation5]
        %1849 = vst.msk [vmem:[%s1848] sm:$0xff] %vm613, %v1845
        %1850 = vst.msk [vmem:[%s1848 + $0x8] sm:$0xff] %vm613, %v1847
        %v1854 = vsel %vm613, %v1845, 0
        %v1857 = vsel %vm613, %v1847, 0
        %1859 = vmatprep.subr.mxu0 0.0
        %1860 = vmatpush1.msra.mxu0 %v1742
        %1861 = vmatprep.subr.mxu0 0.0
        %1862 = vmatpush1.msra.mxu0 %v1744
        %1863 = vmatprep.subr.mxu0 0.0
        %1864 = vmatpush1.msra.mxu0 0.0
        %1865 = vmatprep.subr.mxu0 0.0
        %1866 = vmatpush1.msra.mxu0 0.0
        %1867 = vmatprep.subr.mxu0 0.0
        %1868 = vmatpush1.msra.mxu0 0.0
        %1869 = vmatprep.subr.mxu0 0.0
        %1870 = vmatpush1.msra.mxu0 0.0
        %1871 = vmatprep.subr.mxu0 0.0
        %1872 = vmatpush1.msra.mxu0 0.0
        %1873 = vmatprep.subr.mxu0 0.0
        %1874 = vmatpush1.msra.mxu0 0.0
        %1875 = vmatprep.subr.mxu0 0.0
        %1876 = vmatpush1.msra.mxu0 0.0
        %1877 = vmatprep.subr.mxu0 0.0
        %1878 = vmatpush1.msra.mxu0 0.0
        %1879 = vmatprep.subr.mxu0 0.0
        %1880 = vmatpush1.msra.mxu0 0.0
        %1881 = vmatprep.subr.mxu0 0.0
        %1882 = vmatpush1.msra.mxu0 0.0
        %1883 = vmatprep.subr.mxu0 0.0
        %1884 = vmatpush1.msra.mxu0 0.0
        %1885 = vmatprep.subr.mxu0 0.0
        %1886 = vmatpush1.msra.mxu0 0.0
        %1887 = vmatprep.subr.mxu0 0.0
        %1888 = vmatpush1.msra.mxu0 0.0
        %1889 = vmatprep.subr.mxu0 0.0
        %1890 = vmatpush1.msra.mxu0 0.0
        %1891 = vmatprep.subr.mxu0 0.0
        %1892 = vmatpush1.msra.mxu0 0.0
        %1893 = vmatprep.subr.mxu0 0.0
        %1894 = vmatpush1.msra.mxu0 0.0
        %1895 = vmatprep.subr.mxu0 0.0
        %1896 = vmatpush1.msra.mxu0 0.0
        %1897 = vmatprep.subr.mxu0 0.0
        %1898 = vmatpush1.msra.mxu0 0.0
        %1899 = vmatprep.subr.mxu0 0.0
        %1900 = vmatpush1.msra.mxu0 0.0
        %1901 = vmatprep.subr.mxu0 0.0
        %1902 = vmatpush1.msra.mxu0 0.0
        %1903 = vmatprep.subr.mxu0 0.0
        %1904 = vmatpush1.msra.mxu0 0.0
        %1905 = vmatprep.subr.mxu0 0.0
        %1906 = vmatpush1.msra.mxu0 0.0
        %1907 = vmatprep.subr.mxu0 0.0
        %1908 = vmatpush1.msra.mxu0 0.0
        %1909 = vmatprep.subr.mxu0 0.0
        %1910 = vmatpush1.msra.mxu0 0.0
        %1911 = vmatprep.subr.mxu0 0.0
        %1912 = vmatpush1.msra.mxu0 0.0
        %1913 = vmatprep.subr.mxu0 0.0
        %1914 = vmatpush1.msra.mxu0 0.0
        %1915 = vmatprep.subr.mxu0 0.0
        %1916 = vmatpush1.msra.mxu0 0.0
        %1917 = vmatprep.subr.mxu0 0.0
        %1918 = vmatpush1.msra.mxu0 0.0
        %1919 = vmatprep.subr.mxu0 0.0
        %1920 = vmatpush1.msra.mxu0 0.0
        %1921 = vmatprep.subr.mxu0 0.0
        %1922 = vmatpush1.msra.mxu0 0.0
        %1923 = vmatprep.mubr.f32.mxu0 0.0
        %1924 = vmatmul.mubr.f32.gmra.mrb[0].mxu0 %v1854
        %v1925 = vpop.f32.mrb[0].mxu0
        %v1926 = vadd.f32 0.0, %v1925
        %v1927 = vpop.f32.mrb[0].mxu0
        %1928 = vmatprep.mubr.f32.mxu0 0.0
        %1929 = vmatmul.mubr.f32.gmra.mrb[0].mxu0 %v1857
        %v1930 = vpop.f32.mrb[0].mxu0
        %v1931 = vadd.f32 0.0, %v1930
        %v1932 = vpop.f32.mrb[0].mxu0
        %1933 = vdwg.mxu0
        %1936 = vrot.lane.b32.xlu0 %v1926, 24
        %v1937 = vpop.permute.xlu0 %1936
        %1938 = vrot.lane.b32.xlu0 %v1931, 24
        %v1939 = vpop.permute.xlu0 %1938
        %vm1942 = vcmask 228544
        %1943 = vst.msk [vmem:[#allocation2] sm:$0xff] %vm1942, %v1937
        %1944 = vst.msk [vmem:[#allocation2 + $0x8] sm:$0xff] %vm1942, %v1939
        %1945 = vrot.lane.b32.xlu0 %v521, 100
        %v1946 = vpop.permute.xlu0 %1945
        %1947 = vrot.lane.b32.xlu0 %v526, 100
        %v1948 = vpop.permute.xlu0 %1947
        %v1949 = vsel %vm529, %v1946, 0
        %v1951 = vsel %vm529, %v1948, 0
        %1953 = vmatprep.subr.mxu0 0.0
        %1954 = vmatpush1.xpose.msra.mxu0 %v1949
        %1955 = vmatprep.subr.mxu0 0.0
        %1956 = vmatpush1.xpose.msra.mxu0 %v1951
        %1957 = vmatprep.subr.mxu0 0.0
        %1958 = vmatpush1.xpose.msra.mxu0 0.0
        %1959 = vmatprep.subr.mxu0 0.0
        %1960 = vmatpush1.xpose.msra.mxu0 0.0
        %1961 = vmatprep.subr.mxu0 0.0
        %1962 = vmatpush1.xpose.msra.mxu0 0.0
        %1963 = vmatprep.subr.mxu0 0.0
        %1964 = vmatpush1.xpose.msra.mxu0 0.0
        %1965 = vmatprep.subr.mxu0 0.0
        %1966 = vmatpush1.xpose.msra.mxu0 0.0
        %1967 = vmatprep.subr.mxu0 0.0
        %1968 = vmatpush1.xpose.msra.mxu0 0.0
        %1969 = vmatprep.subr.mxu0 0.0
        %1970 = vmatpush1.xpose.msra.mxu0 0.0
        %1971 = vmatprep.subr.mxu0 0.0
        %1972 = vmatpush1.xpose.msra.mxu0 0.0
        %1973 = vmatprep.subr.mxu0 0.0
        %1974 = vmatpush1.xpose.msra.mxu0 0.0
        %1975 = vmatprep.subr.mxu0 0.0
        %1976 = vmatpush1.xpose.msra.mxu0 0.0
        %1977 = vmatprep.subr.mxu0 0.0
        %1978 = vmatpush1.xpose.msra.mxu0 0.0
        %1979 = vmatprep.subr.mxu0 0.0
        %1980 = vmatpush1.xpose.msra.mxu0 0.0
        %1981 = vmatprep.subr.mxu0 0.0
        %1982 = vmatpush1.xpose.msra.mxu0 0.0
        %1983 = vmatprep.subr.mxu0 0.0
        %1984 = vmatpush1.xpose.msra.mxu0 0.0
        %1985 = vmatprep.subr.mxu0 0.0
        %1986 = vmatpush1.xpose.msra.mxu0 0.0
        %1987 = vmatprep.subr.mxu0 0.0
        %1988 = vmatpush1.xpose.msra.mxu0 0.0
        %1989 = vmatprep.subr.mxu0 0.0
        %1990 = vmatpush1.xpose.msra.mxu0 0.0
        %1991 = vmatprep.subr.mxu0 0.0
        %1992 = vmatpush1.xpose.msra.mxu0 0.0
        %1993 = vmatprep.subr.mxu0 0.0
        %1994 = vmatpush1.xpose.msra.mxu0 0.0
        %1995 = vmatprep.subr.mxu0 0.0
        %1996 = vmatpush1.xpose.msra.mxu0 0.0
        %1997 = vmatprep.subr.mxu0 0.0
        %1998 = vmatpush1.xpose.msra.mxu0 0.0
        %1999 = vmatprep.subr.mxu0 0.0
        %2000 = vmatpush1.xpose.msra.mxu0 0.0
        %2001 = vmatprep.subr.mxu0 0.0
        %2002 = vmatpush1.xpose.msra.mxu0 0.0
        %2003 = vmatprep.subr.mxu0 0.0
        %2004 = vmatpush1.xpose.msra.mxu0 0.0
        %2005 = vmatprep.subr.mxu0 0.0
        %2006 = vmatpush1.xpose.msra.mxu0 0.0
        %2007 = vmatprep.subr.mxu0 0.0
        %2008 = vmatpush1.xpose.msra.mxu0 0.0
        %2009 = vmatprep.subr.mxu0 0.0
        %2010 = vmatpush1.xpose.msra.mxu0 0.0
        %2011 = vmatprep.subr.mxu0 0.0
        %2012 = vmatpush1.xpose.msra.mxu0 0.0
        %2013 = vmatprep.subr.mxu0 0.0
        %2014 = vmatpush1.xpose.msra.mxu0 0.0
        %2015 = vmatprep.subr.mxu0 0.0
        %2016 = vmatpush1.xpose.msra.mxu0 0.0
        %2017 = vmatprep.mubr.f32.mxu0 0.0
        %2018 = vmatmul.mubr.f32.gmra.mrb[0].mxu0 %v1949
        %v2019 = vpop.f32.mrb[0].mxu0
        %v2020 = vadd.f32 0.0, %v2019
        %v2021 = vpop.f32.mrb[0].mxu0
        %2022 = vmatprep.mubr.f32.mxu0 0.0
        %2023 = vmatmul.mubr.f32.gmra.mrb[0].mxu0 %v1951
        %v2024 = vpop.f32.mrb[0].mxu0
        %v2025 = vadd.f32 0.0, %v2024
        %v2026 = vpop.f32.mrb[0].mxu0
        %2027 = vdwg.mxu0
        %v2028 = vmul.f32 %v2020, 0.35355338
        %v2029 = vmul.f32 %v2025, 0.35355338
        %v2030 = vsel %vm613, %v2028, -inf
        %2031 = vmax.xlane.f32.xlu0 %v2030
        %v2032 = vpop.xlane.xlu0 %2031
        %v2033 = vsel %vm613, %v2029, -inf
        %2034 = vmax.xlane.f32.xlu0 %v2033
        %v2035 = vpop.xlane.xlu0 %2034
        %v2036 = vsub.f32 %v2028, %v2032
        %v2037 = vsub.f32 %v2029, %v2035
        %v2038 = vmul.f32 %v2036, 1.442695
        %v2039 = vpow.pop %v2038
        %v2040 = vmul.f32 %v2037, 1.442695
        %v2041 = vpow.pop %v2040
        %v2042 = vsel %vm613, %v2039, 0.0
        %2043 = vadd.xlane.f32.xlu0 %v2042
        %v2044 = vpop.xlane.xlu0 %2043
        %v2045 = vsel %vm613, %v2041, 0.0
        %2046 = vadd.xlane.f32.xlu0 %v2045
        %v2047 = vpop.xlane.xlu0 %2046
        %v2048 = vrcp.pop %v2044
        %v2049 = vmul.f32 %v2039, %v2048
        %v2050 = vrcp.pop %v2047
        %v2051 = vmul.f32 %v2041, %v2050
        %s2052 = scalar_lea.vmem %s390, 112 [#allocation5]
        %2053 = vst.msk [vmem:[%s2052] sm:$0xff] %vm613, %v2049
        %2054 = vst.msk [vmem:[%s2052 + $0x8] sm:$0xff] %vm613, %v2051
        %v2058 = vsel %vm613, %v2049, 0
        %v2061 = vsel %vm613, %v2051, 0
        %2063 = vmatprep.subr.mxu0 0.0
        %2064 = vmatpush1.msra.mxu0 %v1946
        %2065 = vmatprep.subr.mxu0 0.0
        %2066 = vmatpush1.msra.mxu0 %v1948
        %2067 = vmatprep.subr.mxu0 0.0
        %2068 = vmatpush1.msra.mxu0 0.0
        %2069 = vmatprep.subr.mxu0 0.0
        %2070 = vmatpush1.msra.mxu0 0.0
        %2071 = vmatprep.subr.mxu0 0.0
        %2072 = vmatpush1.msra.mxu0 0.0
        %2073 = vmatprep.subr.mxu0 0.0
        %2074 = vmatpush1.msra.mxu0 0.0
        %2075 = vmatprep.subr.mxu0 0.0
        %2076 = vmatpush1.msra.mxu0 0.0
        %2077 = vmatprep.subr.mxu0 0.0
        %2078 = vmatpush1.msra.mxu0 0.0
        %2079 = vmatprep.subr.mxu0 0.0
        %2080 = vmatpush1.msra.mxu0 0.0
        %2081 = vmatprep.subr.mxu0 0.0
        %2082 = vmatpush1.msra.mxu0 0.0
        %2083 = vmatprep.subr.mxu0 0.0
        %2084 = vmatpush1.msra.mxu0 0.0
        %2085 = vmatprep.subr.mxu0 0.0
        %2086 = vmatpush1.msra.mxu0 0.0
        %2087 = vmatprep.subr.mxu0 0.0
        %2088 = vmatpush1.msra.mxu0 0.0
        %2089 = vmatprep.subr.mxu0 0.0
        %2090 = vmatpush1.msra.mxu0 0.0
        %2091 = vmatprep.subr.mxu0 0.0
        %2092 = vmatpush1.msra.mxu0 0.0
        %2093 = vmatprep.subr.mxu0 0.0
        %2094 = vmatpush1.msra.mxu0 0.0
        %2095 = vmatprep.subr.mxu0 0.0
        %2096 = vmatpush1.msra.mxu0 0.0
        %2097 = vmatprep.subr.mxu0 0.0
        %2098 = vmatpush1.msra.mxu0 0.0
        %2099 = vmatprep.subr.mxu0 0.0
        %2100 = vmatpush1.msra.mxu0 0.0
        %2101 = vmatprep.subr.mxu0 0.0
        %2102 = vmatpush1.msra.mxu0 0.0
        %2103 = vmatprep.subr.mxu0 0.0
        %2104 = vmatpush1.msra.mxu0 0.0
        %2105 = vmatprep.subr.mxu0 0.0
        %2106 = vmatpush1.msra.mxu0 0.0
        %2107 = vmatprep.subr.mxu0 0.0
        %2108 = vmatpush1.msra.mxu0 0.0
        %2109 = vmatprep.subr.mxu0 0.0
        %2110 = vmatpush1.msra.mxu0 0.0
        %2111 = vmatprep.subr.mxu0 0.0
        %2112 = vmatpush1.msra.mxu0 0.0
        %2113 = vmatprep.subr.mxu0 0.0
        %2114 = vmatpush1.msra.mxu0 0.0
        %2115 = vmatprep.subr.mxu0 0.0
        %2116 = vmatpush1.msra.mxu0 0.0
        %2117 = vmatprep.subr.mxu0 0.0
        %2118 = vmatpush1.msra.mxu0 0.0
        %2119 = vmatprep.subr.mxu0 0.0
        %2120 = vmatpush1.msra.mxu0 0.0
        %2121 = vmatprep.subr.mxu0 0.0
        %2122 = vmatpush1.msra.mxu0 0.0
        %2123 = vmatprep.subr.mxu0 0.0
        %2124 = vmatpush1.msra.mxu0 0.0
        %2125 = vmatprep.subr.mxu0 0.0
        %2126 = vmatpush1.msra.mxu0 0.0
        %2127 = vmatprep.mubr.f32.mxu0 0.0
        %2128 = vmatmul.mubr.f32.gmra.mrb[0].mxu0 %v2058
        %v2129 = vpop.f32.mrb[0].mxu0
        %v2130 = vadd.f32 0.0, %v2129
        %v2131 = vpop.f32.mrb[0].mxu0
        %2132 = vmatprep.mubr.f32.mxu0 0.0
        %2133 = vmatmul.mubr.f32.gmra.mrb[0].mxu0 %v2061
        %v2134 = vpop.f32.mrb[0].mxu0
        %v2135 = vadd.f32 0.0, %v2134
        %v2136 = vpop.f32.mrb[0].mxu0
        %2137 = vdwg.mxu0
        %2140 = vrot.lane.b32.xlu0 %v2130, 28
        %v2141 = vpop.permute.xlu0 %2140
        %2142 = vrot.lane.b32.xlu0 %v2135, 28
        %v2143 = vpop.permute.xlu0 %2142
        %vm2146 = vcmask 261344
        %2147 = vst.msk [vmem:[#allocation2] sm:$0xff] %vm2146, %v2141
        %2148 = vst.msk [vmem:[#allocation2 + $0x8] sm:$0xff] %vm2146, %v2143
        %v2149 = vld [vmem:[#allocation2] sm:$0xff]
        %v2150 = vld [vmem:[#allocation2 + $0x8] sm:$0xff]
        %v2151 = vadd.f32 %v396, %v2149
        %v2152 = vadd.f32 %v397, %v2150
        %v2153 = vld [vmem:[%s4] sm:$0x1]
        %v2154 = vld [vmem:[%s5] sm:$0x1]
        %v2155 = vsel %vm400, %v2151, 0.0
        %2156 = vadd.xlane.f32.xlu0 %v2155
        %v2157 = vpop.xlane.xlu0 %2156
        %v2158 = vsel %vm400, %v2152, 0.0
        %2159 = vadd.xlane.f32.xlu0 %v2158
        %v2160 = vpop.xlane.xlu0 %2159
        %v2161 = vmul.f32 %v2157, %v407
        %v2162 = vmul.f32 %v2160, %v407
        %v2163 = vsub.f32 %v2151, %v2161
        %v2164 = vsub.f32 %v2152, %v2162
        %v2165 = vmul.f32 %v2163, %v2163
        %v2166 = vmul.f32 %v2164, %v2164
        %v2167 = vsel %vm400, %v2165, 0.0
        %2168 = vadd.xlane.f32.xlu0 %v2167
        %v2169 = vpop.xlane.xlu0 %2168
        %v2170 = vsel %vm400, %v2166, 0.0
        %2171 = vadd.xlane.f32.xlu0 %v2170
        %v2172 = vpop.xlane.xlu0 %2171
        %v2173 = vmul.f32 %v2169, %v407
        %v2174 = vmul.f32 %v2172, %v407
        %v2175 = vadd.f32 %v2173, 1e-05
        %v2176 = vadd.f32 %v2174, 1e-05
        %v2177 = vrsqrt.pop %v2175
        %v2178 = vrsqrt.pop %v2176
        %v2179 = vmul.f32 %v2163, %v2177
        %v2180 = vmul.f32 %v2164, %v2178
        %v2182 = vlaneseq
        %v2183 = vshrl.u32 %v2182, 7
        %v2184 = vsub.s32 0, %v2183
        %v2185 = vrot.slane %v2153, %v2184
        %v2187 = vmul.f32 %v2179, %v2185
        %v2188 = vmul.f32 %v2180, %v2185
        %v2190 = vlaneseq
        %v2191 = vshrl.u32 %v2190, 7
        %v2192 = vsub.s32 0, %v2191
        %v2193 = vrot.slane %v2154, %v2192
        %v2195 = vadd.f32 %v2187, %v2193
        %v2196 = vadd.f32 %v2188, %v2193
        %v2197 = vld [vmem:[%s6] sm:$0xff]
        %v2198 = vld [vmem:[%s6 + $0x8] sm:$0xff]
        %v2199 = vld [vmem:[%s6 + $0x10] sm:$0xff]
        %v2200 = vld [vmem:[%s6 + $0x18] sm:$0xff]
        %v2201 = vld [vmem:[%s7] sm:$0x1]
        %v2203 = vlaneseq
        %v2204 = vshrl.u32 %v2203, 7
        %v2205 = vsub.s32 0, %v2204
        %v2206 = vrot.slane %v2201, %v2205
        %v2209 = vsel %vm400, %v2195, 0
        %v2212 = vsel %vm400, %v2196, 0
        %2214 = vmatprep.subr.mxu0 0.0
        %2215 = vmatpush1.msra.mxu0 %v2197
        %2216 = vmatprep.subr.mxu0 0.0
        %2217 = vmatpush1.msra.mxu0 %v2198
        %2218 = vmatprep.subr.mxu0 0.0
        %2219 = vmatpush1.msra.mxu0 %v2199
        %2220 = vmatprep.subr.mxu0 0.0
        %2221 = vmatpush1.msra.mxu0 %v2200
        %2222 = vmatprep.subr.mxu0 0.0
        %2223 = vmatpush1.msra.mxu0 0.0
        %2224 = vmatprep.subr.mxu0 0.0
        %2225 = vmatpush1.msra.mxu0 0.0
        %2226 = vmatprep.subr.mxu0 0.0
        %2227 = vmatpush1.msra.mxu0 0.0
        %2228 = vmatprep.subr.mxu0 0.0
        %2229 = vmatpush1.msra.mxu0 0.0
        %2230 = vmatprep.subr.mxu0 0.0
        %2231 = vmatpush1.msra.mxu0 0.0
        %2232 = vmatprep.subr.mxu0 0.0
        %2233 = vmatpush1.msra.mxu0 0.0
        %2234 = vmatprep.subr.mxu0 0.0
        %2235 = vmatpush1.msra.mxu0 0.0
        %2236 = vmatprep.subr.mxu0 0.0
        %2237 = vmatpush1.msra.mxu0 0.0
        %2238 = vmatprep.subr.mxu0 0.0
        %2239 = vmatpush1.msra.mxu0 0.0
        %2240 = vmatprep.subr.mxu0 0.0
        %2241 = vmatpush1.msra.mxu0 0.0
        %2242 = vmatprep.subr.mxu0 0.0
        %2243 = vmatpush1.msra.mxu0 0.0
        %2244 = vmatprep.subr.mxu0 0.0
        %2245 = vmatpush1.msra.mxu0 0.0
        %2246 = vmatprep.subr.mxu0 0.0
        %2247 = vmatpush1.msra.mxu0 0.0
        %2248 = vmatprep.subr.mxu0 0.0
        %2249 = vmatpush1.msra.mxu0 0.0
        %2250 = vmatprep.subr.mxu0 0.0
        %2251 = vmatpush1.msra.mxu0 0.0
        %2252 = vmatprep.subr.mxu0 0.0
        %2253 = vmatpush1.msra.mxu0 0.0
        %2254 = vmatprep.subr.mxu0 0.0
        %2255 = vmatpush1.msra.mxu0 0.0
        %2256 = vmatprep.subr.mxu0 0.0
        %2257 = vmatpush1.msra.mxu0 0.0
        %2258 = vmatprep.subr.mxu0 0.0
        %2259 = vmatpush1.msra.mxu0 0.0
        %2260 = vmatprep.subr.mxu0 0.0
        %2261 = vmatpush1.msra.mxu0 0.0
        %2262 = vmatprep.subr.mxu0 0.0
        %2263 = vmatpush1.msra.mxu0 0.0
        %2264 = vmatprep.subr.mxu0 0.0
        %2265 = vmatpush1.msra.mxu0 0.0
        %2266 = vmatprep.subr.mxu0 0.0
        %2267 = vmatpush1.msra.mxu0 0.0
        %2268 = vmatprep.subr.mxu0 0.0
        %2269 = vmatpush1.msra.mxu0 0.0
        %2270 = vmatprep.subr.mxu0 0.0
        %2271 = vmatpush1.msra.mxu0 0.0
        %2272 = vmatprep.subr.mxu0 0.0
        %2273 = vmatpush1.msra.mxu0 0.0
        %2274 = vmatprep.subr.mxu0 0.0
        %2275 = vmatpush1.msra.mxu0 0.0
        %2276 = vmatprep.subr.mxu0 0.0
        %2277 = vmatpush1.msra.mxu0 0.0
        %2278 = vmatprep.mubr.f32.mxu0 0.0
        %2279 = vmatmul.mubr.f32.gmra.mrb[0].mxu0 %v2209
        %v2280 = vpop.f32.mrb[0].mxu0
        %v2281 = vadd.f32 %v2206, %v2280
        %v2282 = vpop.f32.mrb[0].mxu0
        %2283 = vmatprep.mubr.f32.mxu0 0.0
        %2284 = vmatmul.mubr.f32.gmra.mrb[0].mxu0 %v2212
        %v2285 = vpop.f32.mrb[0].mxu0
        %v2286 = vadd.f32 %v2206, %v2285
        %v2287 = vpop.f32.mrb[0].mxu0
        %2288 = vdwg.mxu0
        %v2289 = vmul.f32 %v2281, 0.5
        %v2290 = vmul.f32 %v2286, 0.5
        %v2291 = vmul.f32 %v2281, 0.70710677
        %v2292 = vmul.f32 %v2286, 0.70710677
        %vm2293 = vcmp.ge.f32.partialorder %v2291, 0.0
        %vm2294 = vcmp.ge.f32.partialorder %v2292, 0.0
        %v2295 = vsel %vm2293, 1.0, -1.0
        %v2296 = vsel %vm2294, 1.0, -1.0
        %v2297 = vand.u32 2147483647, %v2291
        %v2298 = vand.u32 2147483647, %v2292
        %v2299 = vmul.f32 %v2297, 0.3275911
        %v2300 = vmul.f32 %v2298, 0.3275911
        %v2301 = vadd.f32 %v2299, 1.0
        %v2302 = vadd.f32 %v2300, 1.0
        %v2303 = vrcp.pop %v2301
        %v2304 = vmul.f32 1.0, %v2303
        %v2305 = vrcp.pop %v2302
        %v2306 = vmul.f32 1.0, %v2305
        %v2307 = vmul.f32 %v2304, 1.0614054
        %v2308 = vmul.f32 %v2306, 1.0614054
        %v2309 = vadd.f32 %v2307, -1.4531521
        %v2310 = vadd.f32 %v2308, -1.4531521
        %v2311 = vmul.f32 %v2309, %v2304
        %v2312 = vmul.f32 %v2310, %v2306
        %v2313 = vadd.f32 %v2311, 1.4214138
        %v2314 = vadd.f32 %v2312, 1.4214138
        %v2315 = vmul.f32 %v2313, %v2304
        %v2316 = vmul.f32 %v2314, %v2306
        %v2317 = vadd.f32 %v2315, -0.28449672
        %v2318 = vadd.f32 %v2316, -0.28449672
        %v2319 = vmul.f32 %v2317, %v2304
        %v2320 = vmul.f32 %v2318, %v2306
        %v2321 = vadd.f32 %v2319, 0.2548296
        %v2322 = vadd.f32 %v2320, 0.2548296
        %v2323 = vmul.f32 %v2321, %v2304
        %v2324 = vmul.f32 %v2322, %v2306
        %v2325 = vsub.f32 0.0, %v2297
        %v2326 = vsub.f32 0.0, %v2298
        %v2327 = vmul.f32 %v2325, %v2297
        %v2328 = vmul.f32 %v2326, %v2298
        %v2329 = vmul.f32 %v2327, 1.442695
        %v2330 = vpow.pop %v2329
        %v2331 = vmul.f32 %v2328, 1.442695
        %v2332 = vpow.pop %v2331
        %v2333 = vmul.f32 %v2323, %v2330
        %v2334 = vmul.f32 %v2324, %v2332
        %v2335 = vsub.f32 1.0, %v2333
        %v2336 = vsub.f32 1.0, %v2334
        %v2337 = vmul.f32 %v2295, %v2335
        %v2338 = vmul.f32 %v2296, %v2336
        %v2339 = vadd.f32 %v2337, 1.0
        %v2340 = vadd.f32 %v2338, 1.0
        %v2341 = vmul.f32 %v2289, %v2339
        %v2342 = vmul.f32 %v2290, %v2340
        %v2343 = vld [vmem:[%s8] sm:$0xff]
        %v2344 = vld [vmem:[%s8 + $0x8] sm:$0xff]
        %v2345 = vld [vmem:[%s8 + $0x10] sm:$0xff]
        %v2346 = vld [vmem:[%s8 + $0x18] sm:$0xff]
        %v2347 = vld [vmem:[%s8 + $0x20] sm:$0xff]
        %v2348 = vld [vmem:[%s8 + $0x28] sm:$0xff]
        %v2349 = vld [vmem:[%s8 + $0x30] sm:$0xff]
        %v2350 = vld [vmem:[%s8 + $0x38] sm:$0xff]
        %v2351 = vld [vmem:[%s9] sm:$0x1]
        %v2353 = vlaneseq
        %v2354 = vshrl.u32 %v2353, 7
        %v2355 = vsub.s32 0, %v2354
        %v2356 = vrot.slane %v2351, %v2355
        %vm2358 = vcmask 523264
        %v2360 = vsel %vm2358, %v2341, 0
        %v2363 = vsel %vm2358, %v2342, 0
        %2365 = vmatprep.subr.mxu0 0.0
        %2366 = vmatpush1.msra.mxu0 %v2343
        %2367 = vmatprep.subr.mxu0 0.0
        %2368 = vmatpush1.msra.mxu0 %v2344
        %2369 = vmatprep.subr.mxu0 0.0
        %2370 = vmatpush1.msra.mxu0 %v2345
        %2371 = vmatprep.subr.mxu0 0.0
        %2372 = vmatpush1.msra.mxu0 %v2346
        %2373 = vmatprep.subr.mxu0 0.0
        %2374 = vmatpush1.msra.mxu0 %v2347
        %2375 = vmatprep.subr.mxu0 0.0
        %2376 = vmatpush1.msra.mxu0 %v2348
        %2377 = vmatprep.subr.mxu0 0.0
        %2378 = vmatpush1.msra.mxu0 %v2349
        %2379 = vmatprep.subr.mxu0 0.0
        %2380 = vmatpush1.msra.mxu0 %v2350
        %2381 = vmatprep.subr.mxu0 0.0
        %2382 = vmatpush1.msra.mxu0 0.0
        %2383 = vmatprep.subr.mxu0 0.0
        %2384 = vmatpush1.msra.mxu0 0.0
        %2385 = vmatprep.subr.mxu0 0.0
        %2386 = vmatpush1.msra.mxu0 0.0
        %2387 = vmatprep.subr.mxu0 0.0
        %2388 = vmatpush1.msra.mxu0 0.0
        %2389 = vmatprep.subr.mxu0 0.0
        %2390 = vmatpush1.msra.mxu0 0.0
        %2391 = vmatprep.subr.mxu0 0.0
        %2392 = vmatpush1.msra.mxu0 0.0
        %2393 = vmatprep.subr.mxu0 0.0
        %2394 = vmatpush1.msra.mxu0 0.0
        %2395 = vmatprep.subr.mxu0 0.0
        %2396 = vmatpush1.msra.mxu0 0.0
        %2397 = vmatprep.subr.mxu0 0.0
        %2398 = vmatpush1.msra.mxu0 0.0
        %2399 = vmatprep.subr.mxu0 0.0
        %2400 = vmatpush1.msra.mxu0 0.0
        %2401 = vmatprep.subr.mxu0 0.0
        %2402 = vmatpush1.msra.mxu0 0.0
        %2403 = vmatprep.subr.mxu0 0.0
        %2404 = vmatpush1.msra.mxu0 0.0
        %2405 = vmatprep.subr.mxu0 0.0
        %2406 = vmatpush1.msra.mxu0 0.0
        %2407 = vmatprep.subr.mxu0 0.0
        %2408 = vmatpush1.msra.mxu0 0.0
        %2409 = vmatprep.subr.mxu0 0.0
        %2410 = vmatpush1.msra.mxu0 0.0
        %2411 = vmatprep.subr.mxu0 0.0
        %2412 = vmatpush1.msra.mxu0 0.0
        %2413 = vmatprep.subr.mxu0 0.0
        %2414 = vmatpush1.msra.mxu0 0.0
        %2415 = vmatprep.subr.mxu0 0.0
        %2416 = vmatpush1.msra.mxu0 0.0
        %2417 = vmatprep.subr.mxu0 0.0
        %2418 = vmatpush1.msra.mxu0 0.0
        %2419 = vmatprep.subr.mxu0 0.0
        %2420 = vmatpush1.msra.mxu0 0.0
        %2421 = vmatprep.subr.mxu0 0.0
        %2422 = vmatpush1.msra.mxu0 0.0
        %2423 = vmatprep.subr.mxu0 0.0
        %2424 = vmatpush1.msra.mxu0 0.0
        %2425 = vmatprep.subr.mxu0 0.0
        %2426 = vmatpush1.msra.mxu0 0.0
        %2427 = vmatprep.subr.mxu0 0.0
        %2428 = vmatpush1.msra.mxu0 0.0
        %2429 = vmatprep.mubr.f32.mxu0 0.0
        %2430 = vmatmul.mubr.f32.gmra.mrb[0].mxu0 %v2360
        %v2431 = vpop.f32.mrb[0].mxu0
        %v2432 = vadd.f32 %v2356, %v2431
        %v2433 = vpop.f32.mrb[0].mxu0
        %2434 = vmatprep.mubr.f32.mxu0 0.0
        %2435 = vmatmul.mubr.f32.gmra.mrb[0].mxu0 %v2363
        %v2436 = vpop.f32.mrb[0].mxu0
        %v2437 = vadd.f32 %v2356, %v2436
        %v2438 = vpop.f32.mrb[0].mxu0
        %2439 = vdwg.mxu0
        %v2440 = vadd.f32 %v2151, %v2432
        %v2441 = vadd.f32 %v2152, %v2437
        %2442 = vst.msk [vmem:[%s383] sm:$0xff] %vm400, %v2440
        %2443 = vst.msk [vmem:[%s383 + $0x8] sm:$0xff] %vm400, %v2441
        %s2444 = sand.u32 %s252, 1
        %s2445 = scalar_lea.sflag [#allocation4], %s2444
        %s2446 = sand.u32 %s252, 1
        %s2447 = smul.addr %s2446, 16
        %s2448 = scalar_lea.vmem [#allocation3], %s2447
        %s2449 = sand.u32 %s278, 1
        %s2450 = scalar_lea.sflag [#allocation6], %s2449
        %s2451 = sand.u32 %s278, 1
        %s2452 = smul.addr %s2451, 128
        %s2453 = scalar_lea.vmem [#allocation5], %s2452
        // Predicated region
        $region61: #{tpu_custom_call.1} parent=59 // pred_check
          %p2454 = pneg %p262
        $region62: #{tpu_custom_call.1} parent=59 // pred_check_branch
          %2456 = sbr.rel (%p2454) target = $region64
        $region63: #{tpu_custom_call.1} parent=59 // pred_region
          %s2458 = ssub.s32 256, 256
          %2459 = vsyncadd %s2445, %s2458
          %s2460 = smul.addr %s29, 2
          %s2461 = smul.addr %s2460, 128
          %s2462 = scalar_lea.hbm %s10, %s2461
          %s2463 = sshll.u32 %s2448, 4
          %s2464 = int_to_ptr.vmem [resolvable:$true] %s2463
          %2469 = dma.vmem_to_hbm [thread:$0]  %s2464, 256, %s2462, %s2445, 128, 128, 8
        $region64: #{tpu_custom_call.1} parent=59 // pred_fallthru
          _
        // Predicated region
        $region65: #{tpu_custom_call.1} parent=59 // pred_check
          %p2470 = pneg %p288
        $region66: #{tpu_custom_call.1} parent=59 // pred_check_branch
          %2472 = sbr.rel (%p2470) target = $region68
        $region67: #{tpu_custom_call.1} parent=59 // pred_region
          %s2474 = ssub.s32 2048, 2048
          %2475 = vsyncadd %s2450, %s2474
          %s2476 = smul.addr %s29, 16
          %s2477 = smul.addr %s2476, 128
          %s2478 = scalar_lea.hbm %s11, %s2477
          %s2479 = sshll.u32 %s2453, 4
          %s2480 = int_to_ptr.vmem [resolvable:$true] %s2479
          %2485 = dma.vmem_to_hbm [thread:$0]  %s2480, 2048, %s2478, %s2450, 128, 128, 8
        $region68: #{tpu_custom_call.1} parent=59 // pred_fallthru
          _
      $region60: #{tpu_custom_call.1} parent=5 // pred_fallthru
        _
      %p2486 = scmp.le.s32.totalorder 2, %s24
      // Predicated region
      $region69: #{tpu_custom_call.1} parent=5 // pred_check
        %p2487 = pneg %p2486
      $region70: #{tpu_custom_call.1} parent=5 // pred_check_branch
        %2489 = sbr.rel (%p2487) target = $region72
      $region71: #{tpu_custom_call.1} parent=5 // pred_region
        %s2490 = ssub.s32 %s24, 2
        // Predicated region
        $region73: #{tpu_custom_call.1} parent=71 // pred_check
          %p2491 = pneg %p268
        $region74: #{tpu_custom_call.1} parent=71 // pred_check_branch
          %2493 = sbr.rel (%p2491) target = $region76
        $region75: #{tpu_custom_call.1} parent=71 // pred_region
          %s2494 = sand.u32 %s253, 1
          %s2495 = scalar_lea.sflag [#allocation4], %s2494
          %s2496 = sand.u32 %s253, 1
          %s2497 = smul.addr %s2496, 16
          %s2498 = scalar_lea.vmem [#allocation3], %s2497
          %2499 = dma.done %s2495, 256
        $region76: #{tpu_custom_call.1} parent=71 // pred_fallthru
          _
        // Predicated region
        $region77: #{tpu_custom_call.1} parent=71 // pred_check
          %p2500 = pneg %p294
        $region78: #{tpu_custom_call.1} parent=71 // pred_check_branch
          %2502 = sbr.rel (%p2500) target = $region80
        $region79: #{tpu_custom_call.1} parent=71 // pred_region
          %s2503 = sand.u32 %s279, 1
          %s2504 = scalar_lea.sflag [#allocation6], %s2503
          %s2505 = sand.u32 %s279, 1
          %s2506 = smul.addr %s2505, 128
          %s2507 = scalar_lea.vmem [#allocation5], %s2506
          %2508 = dma.done %s2504, 2048
        $region80: #{tpu_custom_call.1} parent=71 // pred_fallthru
          _
      $region72: #{tpu_custom_call.1} parent=5 // pred_fallthru
        _
    $region6: #{tpu_custom_call.1} parent=1 // loop_footer
      %s28 = sadd.s32 1, %s24
    $region7: #{tpu_custom_call.1} parent=1 // loop_footer_branch
      %23 = sbr.rel target = $region3
    $region8: #{tpu_custom_call.1} parent=1 // loop_exit
      _
    %2509 = vsyncpa [#allocation4], 1
    %s2510 = scalar_lea.sflag [#allocation4], 1
    %2511 = vsyncpa %s2510, 1
    %2512 = vsyncpa [#allocation6], 1
    %s2513 = scalar_lea.sflag [#allocation6], 1
    %2514 = vsyncpa %s2513, 1

</llo_original>
